<compile_context>
chip_gen: v5e
topology: v5e:2x2
jax: 0.10.0
libtpu: 0.0.40
codegen_flags: <defaults>
</compile_context>

<pallas_src>
import math
from functools import partial

import jax
import jax.numpy as jnp
from jax import lax
from jax.experimental import pallas as pl
from jax.experimental.pallas import tpu as pltpu

_MIB = 1024 * 1024


def _layer_norm(x, gamma, beta, eps=1e-6):
    mean = jnp.mean(x, axis=-1, keepdims=True)
    var = jnp.mean((x - mean) ** 2, axis=-1, keepdims=True)
    return (x - mean) * lax.rsqrt(var + eps) * gamma + beta


def encoder_layer_kernel(
    len_ref,                                   # SMEM (B,) int32 (scalar prefetch)
    x_ref,                                     # (1, S, D) f32 (full sequence, per batch)
    ln1_g_ref, ln1_b_ref,
    wq_ref, bq_ref,
    wkv_ref, bkv_ref,                          # fused K|V projection (D, 2D) / (1, 2D)
    wo_ref, bo_ref,
    ln2_g_ref, ln2_b_ref,
    w1_ref, b1_ref, w2_ref, b2_ref,
    out_ref,                                   # (1, TQ, D) f32
    kv_scr,                                    # VMEM (S, 2D) bf16 — per-batch K|V cache
    *, heads,
):
    b = pl.program_id(0)
    qi = pl.program_id(1)

    _, S, D = x_ref.shape
    tq = out_ref.shape[1]
    dk = D // heads
    scale = 1.0 / math.sqrt(dk)               # Python float -> jaxpr literal, not a capture

    ln1_g = ln1_g_ref[0]
    ln1_b = ln1_b_ref[0]

    # ---- per-batch K/V cache: full-seq LN + fused K|V matmul, once per batch row ----
    @pl.when(qi == 0)
    def _():
        x_kv = x_ref[0]                                              # (S, D) f32
        xkv_n = _layer_norm(x_kv, ln1_g, ln1_b).astype(jnp.bfloat16)
        kv = jnp.dot(xkv_n, wkv_ref[...],
                     preferred_element_type=jnp.float32) + bkv_ref[0]  # (S, 2D)
        kv_scr[...] = kv.astype(jnp.bfloat16)

    # ---- query tile (sliced from the full block; also used as the residual) ----------
    q0 = pl.multiple_of(qi * tq, tq)
    x_q = x_ref[0, pl.ds(q0, tq), :]                                 # (TQ, D) f32
    xq_n = _layer_norm(x_q, ln1_g, ln1_b).astype(jnp.bfloat16)
    q = jnp.dot(xq_n, wq_ref[...], preferred_element_type=jnp.float32) + bq_ref[0]
    qh = (q * scale).astype(jnp.bfloat16).reshape(tq, heads, dk)     # (TQ, H, dk)

    kh = kv_scr[:, :D].reshape(S, heads, dk)                         # (S, H, dk) bf16
    vh = kv_scr[:, D:].reshape(S, heads, dk)                         # (S, H, dk) bf16

    # ---- batched-head attention; padding mask built from prefetched lengths ----------
    scores = jnp.einsum("qhd,khd->hqk", qh, kh,
                        preferred_element_type=jnp.float32)          # (H, TQ, S)
    key_pos = lax.broadcasted_iota(jnp.int32, (1, 1, S), 2)
    scores = jnp.where(key_pos >= len_ref[b], -1e18, scores)

    m = jnp.max(scores, axis=-1, keepdims=True)
    e = jnp.exp(scores - m)
    denom = jnp.sum(e, axis=-1, keepdims=True)
    # EUP approx reciprocal (~8-bit rel error) — fine for eval-mode tolerance.
    p = e * pl.reciprocal(denom, approx=True)

    ctx = jnp.einsum("hqk,khd->qhd", p.astype(jnp.bfloat16), vh,
                     preferred_element_type=jnp.float32).reshape(tq, D)

    # ---- output projection + residual -------------------------------------------------
    attn_out = jnp.dot(ctx.astype(jnp.bfloat16), wo_ref[...],
                       preferred_element_type=jnp.float32) + bo_ref[0]
    out1 = attn_out + x_q                       # dropout == identity (eval mode)

    # ---- PositionwiseFeedForward: pre-LN, ReLU, residual -------------------------------
    on = _layer_norm(out1, ln2_g_ref[0], ln2_b_ref[0]).astype(jnp.bfloat16)
    h1 = jnp.dot(on, w1_ref[...], preferred_element_type=jnp.float32) + b1_ref[0]
    h1 = jnp.maximum(h1, 0.0).astype(jnp.bfloat16)
    o2 = jnp.dot(h1, w2_ref[...], preferred_element_type=jnp.float32) + b2_ref[0]

    out_ref[0] = (o2 + out1).astype(out_ref.dtype)


def _physical_vmem_bytes():
    """Best-effort physical VMEM query; conservative (v7x-sized) default if unavailable."""
    try:
        info = pltpu.get_tpu_info()
        for attr in ("vmem_capacity_bytes", "vmem_size_bytes", "vmem_bytes"):
            v = getattr(info, attr, None)
            if v:
                return int(v)
    except Exception:
        pass
    return 64 * _MIB


def _vmem_budget_bytes(S, tq, D, d_ff, heads, single_buffer_weights, vmem_phys):
    bf2, f4 = 2, 4
    wbuf = 1 if single_buffer_weights else 2
    x_block = 2 * f4 * S * D                            # double-buffered (1,S,D) input
    out_block = 2 * f4 * tq * D                         # double-buffered (1,tq,D) output
    weights = wbuf * bf2 * (4 * D * D + 2 * D * d_ff)   # Wq|Wkv|Wo + W1|W2 (bf16)
    small = wbuf * f4 * (9 * D + 3 * d_ff)              # biases + LN params
    kv_cache = bf2 * 2 * S * D                          # (S, 2D) bf16 scratch
    interm = f4 * (2 * S * D                            # K/V projection f32 (qi == 0)
                   + 3 * heads * tq * S                 # scores / exp / probs
                   + 4 * tq * D + tq * d_ff)            # q / ctx / out1 / h1
    est = int(1.4 * (x_block + out_block + weights + small + kv_cache + interm))
    cap = int(0.85 * vmem_phys)                         # headroom for Mosaic scratch
    return max(min(est, cap), 32 * _MIB)


def transformer_encoder_layer(x, lengths, params, heads, *, tq=None):
    B, S, D = x.shape
    d_ff = params["w1"].shape[1]
    assert D % heads == 0

    vmem_phys = _physical_vmem_bytes()

    if tq is None:
        if S <= 512:
            tq = S                               # one query tile per sequence
        elif vmem_phys >= 96 * _MIB:             # v5e / v6e (128 MiB VMEM)
            tq = 512
        else:                                    # v7x (64 MiB VMEM)
            tq = 128
    if S % tq != 0:
        # Largest multiple-of-8 divisor of S not exceeding tq (fallback: whole S).
        divisors = [d for d in range(8, min(tq, S) + 1, 8) if S % d == 0]
        tq = divisors[-1] if divisors else S
    nq = S // tq

    bf16 = jnp.bfloat16
    wq = params["wq"].astype(bf16)
    wkv = jnp.concatenate([params["wk"].astype(bf16), params["wv"].astype(bf16)], axis=1)
    bkv = jnp.concatenate([params["bk"], params["bv"]], axis=1).astype(jnp.float32)
    wo = params["wo"].astype(bf16)
    w1 = params["w1"].astype(bf16)
    w2 = params["w2"].astype(bf16)

    dk = D // heads
    flops = int(2 * B * S * (4 * D * D + 2 * D * d_ff) + 4 * B * heads * S * S * dk)
    transcendentals = int(B * heads * S * S)
    bytes_accessed = int(4 * 2 * B * S * D                       # x read once + out (f32)
                         + 2 * (4 * D * D + 2 * D * d_ff)        # bf16 weights
                         + 4 * (9 * D + 3 * d_ff) + 4 * B)       # small params + lengths
    cost = pl.CostEstimate(flops=flops, transcendentals=transcendentals,
                           bytes_accessed=bytes_accessed)

    args = (
        lengths.astype(jnp.int32),
        x,
        params["ln1_g"], params["ln1_b"],
        wq, params["bq"],
        wkv, bkv,
        wo, params["bo"],
        params["ln2_g"], params["ln2_b"],
        w1, params["b1"],
        w2, params["b2"],
    )

    def run(single_buffer_weights):
        def const_spec(shape):
            # Constant block index -> loaded once, revisited across the whole grid.
            index_map = lambda b, qi, lens, _n=len(shape): (0,) * _n
            if single_buffer_weights:
                return pl.BlockSpec(shape, index_map, pipeline_mode=pl.Buffered(1))
            return pl.BlockSpec(shape, index_map)

        in_specs = [
            pl.BlockSpec((1, S, D), lambda b, qi, lens: (b, 0, 0)),  # x (full sequence)
            const_spec((1, D)), const_spec((1, D)),                  # ln1 gamma / beta
            const_spec((D, D)), const_spec((1, D)),                  # Wq / bq
            const_spec((D, 2 * D)), const_spec((1, 2 * D)),          # Wk|Wv / bk|bv (fused)
            const_spec((D, D)), const_spec((1, D)),                  # Wo / bo
            const_spec((1, D)), const_spec((1, D)),                  # ln2 gamma / beta
            const_spec((D, d_ff)), const_spec((1, d_ff)),            # W1 / b1
            const_spec((d_ff, D)), const_spec((1, D)),               # W2 / b2
        ]

        return pl.pallas_call(
            partial(encoder_layer_kernel, heads=heads),
            out_shape=jax.ShapeDtypeStruct((B, S, D), jnp.float32),
            grid_spec=pltpu.PrefetchScalarGridSpec(
                num_scalar_prefetch=1,
                grid=(B, nq),
                in_specs=in_specs,
                out_specs=pl.BlockSpec((1, tq, D), lambda b, qi, lens: (b, qi, 0)),
                scratch_shapes=[pltpu.VMEM((S, 2 * D), jnp.bfloat16)],
            ),
            compiler_params=pltpu.CompilerParams(
                dimension_semantics=("parallel", "arbitrary"),
                vmem_limit_bytes=_vmem_budget_bytes(
                    S, tq, D, d_ff, heads, single_buffer_weights, vmem_phys)),
            cost_estimate=cost,
        )(*args)

    try:
        return run(True)
    except Exception:
        # Fallback: this jax build rejects pipeline_mode=pl.Buffered(1) on pallas_call
        # BlockSpecs; use default (double-buffered) constant blocks instead.
        return run(False)


def reference(x, mask, p, heads):
    """Pure-JAX f32 reference mirroring the PyTorch module in eval mode."""
    def ln(t, g, b):
        mu = t.mean(-1, keepdims=True)
        var = ((t - mu) ** 2).mean(-1, keepdims=True)
        return (t - mu) / jnp.sqrt(var + 1e-6) * g + b

    B, S, D = x.shape
    dk = D // heads
    xn = ln(x, p["ln1_g"][0], p["ln1_b"][0])
    q = xn @ p["wq"] + p["bq"][0]
    k = xn @ p["wk"] + p["bk"][0]
    v = xn @ p["wv"] + p["bv"][0]
    qh = q.reshape(B, S, heads, dk).transpose(0, 2, 1, 3) / jnp.sqrt(jnp.float32(dk))
    kh = k.reshape(B, S, heads, dk).transpose(0, 2, 1, 3)
    vh = v.reshape(B, S, heads, dk).transpose(0, 2, 1, 3)
    scores = qh @ kh.transpose(0, 1, 3, 2)                      # (B, H, S, S)
    scores = jnp.where(mask[:, None, :, :] != 0, -1e18, scores)
    attn = jax.nn.softmax(scores, axis=-1)
    ctx = (attn @ vh).transpose(0, 2, 1, 3).reshape(B, S, D)
    out1 = ctx @ p["wo"] + p["bo"][0] + x
    on = ln(out1, p["ln2_g"][0], p["ln2_b"][0])
    h1 = jax.nn.relu(on @ p["w1"] + p["b1"][0])
    return h1 @ p["w2"] + p["b2"][0] + out1


def init_params(key, d_model, d_ff):
    ks = jax.random.split(key, 12)
    n32 = lambda k, shape: (0.02 * jax.random.normal(k, shape)).astype(jnp.float32)
    nbf = lambda k, shape: (0.02 * jax.random.normal(k, shape)).astype(jnp.bfloat16)
    return {
        "ln1_g": jnp.ones((1, d_model), jnp.float32),
        "ln1_b": jnp.zeros((1, d_model), jnp.float32),
        "wq": nbf(ks[0], (d_model, d_model)), "bq": n32(ks[1], (1, d_model)),
        "wk": nbf(ks[2], (d_model, d_model)), "bk": n32(ks[3], (1, d_model)),
        "wv": nbf(ks[4], (d_model, d_model)), "bv": n32(ks[5], (1, d_model)),
        "wo": nbf(ks[6], (d_model, d_model)), "bo": n32(ks[7], (1, d_model)),
        "ln2_g": jnp.ones((1, d_model), jnp.float32),
        "ln2_b": jnp.zeros((1, d_model), jnp.float32),
        "w1": nbf(ks[8], (d_model, d_ff)), "b1": n32(ks[9], (1, d_ff)),
        "w2": nbf(ks[10], (d_ff, d_model)), "b2": n32(ks[11], (1, d_model)),
    }


if __name__ == "__main__":
    B, S, D, HEADS, D_FF = 2, 8, 128, 4, 256

    root = jax.random.PRNGKey(0)
    k_x, k_p = jax.random.split(root)
    x = jax.random.normal(k_x, (B, S, D), dtype=jnp.float32)

    # Per-sequence valid lengths (key-padding mask source).
    lengths = jnp.array([S, 5], dtype=jnp.int32)

    params = init_params(k_p, D, D_FF)

    out = transformer_encoder_layer(x, lengths, params, HEADS)
    out = jax.block_until_ready(out)

    # Dense mask + f32-upcast params for the pure-JAX reference.
    key_pos = jnp.arange(S, dtype=jnp.int32)
    mask = (key_pos[None, None, :] >= lengths[:, None, None]).astype(jnp.int32)
    mask = jnp.broadcast_to(mask, (B, S, S))
    params_f32 = {k: v.astype(jnp.float32) for k, v in params.items()}
    ref = reference(x, mask, params_f32, HEADS)

    assert out.shape == (B, S, D)
    max_err = float(jnp.max(jnp.abs(out - ref)))
    # bf16 matmul operands (f32 accumulation) -> looser tolerance than pure f32.
    assert jnp.allclose(out, ref, rtol=5e-2, atol=5e-2), max_err

    print("KERNEL_OK")
</pallas_src>

<mosaic_0001>
module attributes {stable_mosaic.version = 11 : i64} {
  func.func @encoder_layer_kernel(%arg0: i32, %arg1: i32, %arg2: memref<2xi32, #tpu.memory_space<smem>>, %arg3: memref<1x8x128xf32, #tpu.memory_space<vmem>>, %arg4: memref<1x128xf32, #tpu.memory_space<vmem>>, %arg5: memref<1x128xf32, #tpu.memory_space<vmem>>, %arg6: memref<128x128xbf16, #tpu.memory_space<vmem>>, %arg7: memref<1x128xf32, #tpu.memory_space<vmem>>, %arg8: memref<128x256xbf16, #tpu.memory_space<vmem>>, %arg9: memref<1x256xf32, #tpu.memory_space<vmem>>, %arg10: memref<128x128xbf16, #tpu.memory_space<vmem>>, %arg11: memref<1x128xf32, #tpu.memory_space<vmem>>, %arg12: memref<1x128xf32, #tpu.memory_space<vmem>>, %arg13: memref<1x128xf32, #tpu.memory_space<vmem>>, %arg14: memref<128x256xbf16, #tpu.memory_space<vmem>>, %arg15: memref<1x256xf32, #tpu.memory_space<vmem>>, %arg16: memref<256x128xbf16, #tpu.memory_space<vmem>>, %arg17: memref<1x128xf32, #tpu.memory_space<vmem>>, %arg18: memref<1x8x128xf32, #tpu.memory_space<vmem>>, %arg19: memref<8x256xbf16, #tpu.memory_space<vmem>>) attributes {dimension_semantics = [#tpu.dimension_semantics<parallel>, #tpu.dimension_semantics<arbitrary>], iteration_bounds = array<i64: 2, 1>, scalar_prefetch = 1 : i64, scratch_operands = 1 : i64, tpu.core_type = #tpu.core_type<tc>, window_params = [{transform_indices = @transform_0, window_bounds = array<i64: 1, 8, 128>}, {pipeline_mode = #tpu.pipeline_mode<synchronous>, transform_indices = @transform_1, window_bounds = array<i64: 1, 128>}, {pipeline_mode = #tpu.pipeline_mode<synchronous>, transform_indices = @transform_2, window_bounds = array<i64: 1, 128>}, {pipeline_mode = #tpu.pipeline_mode<synchronous>, transform_indices = @transform_3, window_bounds = array<i64: 128, 128>}, {pipeline_mode = #tpu.pipeline_mode<synchronous>, transform_indices = @transform_4, window_bounds = array<i64: 1, 128>}, {pipeline_mode = #tpu.pipeline_mode<synchronous>, transform_indices = @transform_5, window_bounds = array<i64: 128, 256>}, {pipeline_mode = #tpu.pipeline_mode<synchronous>, transform_indices = @transform_6, window_bounds = array<i64: 1, 256>}, {pipeline_mode = #tpu.pipeline_mode<synchronous>, transform_indices = @transform_7, window_bounds = array<i64: 128, 128>}, {pipeline_mode = #tpu.pipeline_mode<synchronous>, transform_indices = @transform_8, window_bounds = array<i64: 1, 128>}, {pipeline_mode = #tpu.pipeline_mode<synchronous>, transform_indices = @transform_9, window_bounds = array<i64: 1, 128>}, {pipeline_mode = #tpu.pipeline_mode<synchronous>, transform_indices = @transform_10, window_bounds = array<i64: 1, 128>}, {pipeline_mode = #tpu.pipeline_mode<synchronous>, transform_indices = @transform_11, window_bounds = array<i64: 128, 256>}, {pipeline_mode = #tpu.pipeline_mode<synchronous>, transform_indices = @transform_12, window_bounds = array<i64: 1, 256>}, {pipeline_mode = #tpu.pipeline_mode<synchronous>, transform_indices = @transform_13, window_bounds = array<i64: 256, 128>}, {pipeline_mode = #tpu.pipeline_mode<synchronous>, transform_indices = @transform_14, window_bounds = array<i64: 1, 128>}, {transform_indices = @transform_15, window_bounds = array<i64: 1, 8, 128>}]} {
    %c0 = arith.constant 0 : index
    %c0_0 = arith.constant 0 : index
    %0 = vector.load %arg4[%c0, %c0_0] : memref<1x128xf32, #tpu.memory_space<vmem>>, vector<1x128xf32>
    %1 = vector.shape_cast %0 : vector<1x128xf32> to vector<128xf32>
    %c0_1 = arith.constant 0 : index
    %c0_2 = arith.constant 0 : index
    %2 = vector.load %arg5[%c0_1, %c0_2] : memref<1x128xf32, #tpu.memory_space<vmem>>, vector<1x128xf32>
    %3 = vector.shape_cast %2 : vector<1x128xf32> to vector<128xf32>
    %c0_i32 = arith.constant 0 : i32
    %4 = arith.cmpi eq, %arg1, %c0_i32 : i32
    %5 = arith.extui %4 : i1 to i32
    %c0_i32_3 = arith.constant 0 : i32
    %6 = arith.cmpi ne, %5, %c0_i32_3 : i32
    scf.if %6 {
      %c0_52 = arith.constant 0 : index
      %c0_53 = arith.constant 0 : index
      %c0_54 = arith.constant 0 : index
      %135 = vector.load %arg3[%c0_52, %c0_53, %c0_54] : memref<1x8x128xf32, #tpu.memory_space<vmem>>, vector<1x8x128xf32>
      %136 = vector.shape_cast %135 : vector<1x8x128xf32> to vector<8x128xf32>
      %cst_55 = arith.constant dense<0.000000e+00> : vector<8xf32>
      %137 = vector.multi_reduction <add>, %136, %cst_55 [1] : vector<8x128xf32> to vector<8xf32>
      %138 = vector.shape_cast %137 : vector<8xf32> to vector<8x1xf32>
      %cst_56 = arith.constant 1.280000e+02 : f32
      %139 = vector.broadcast %cst_56 : f32 to vector<8x1xf32>
      %140 = arith.divf %138, %139 : vector<8x1xf32>
      %141 = vector.broadcast %140 : vector<8x1xf32> to vector<8x128xf32>
      %142 = arith.subf %136, %141 : vector<8x128xf32>
      %143 = arith.mulf %142, %142 : vector<8x128xf32>
      %cst_57 = arith.constant dense<0.000000e+00> : vector<8xf32>
      %144 = vector.multi_reduction <add>, %143, %cst_57 [1] : vector<8x128xf32> to vector<8xf32>
      %145 = vector.shape_cast %144 : vector<8xf32> to vector<8x1xf32>
      %cst_58 = arith.constant 1.280000e+02 : f32
      %146 = vector.broadcast %cst_58 : f32 to vector<8x1xf32>
      %147 = arith.divf %145, %146 : vector<8x1xf32>
      %148 = vector.broadcast %140 : vector<8x1xf32> to vector<8x128xf32>
      %149 = arith.subf %136, %148 : vector<8x128xf32>
      %cst_59 = arith.constant 9.99999997E-7 : f32
      %150 = vector.broadcast %cst_59 : f32 to vector<8x1xf32>
      %151 = arith.addf %147, %150 : vector<8x1xf32>
      %152 = math.rsqrt %151 : vector<8x1xf32>
      %153 = vector.broadcast %152 : vector<8x1xf32> to vector<8x128xf32>
      %154 = arith.mulf %149, %153 : vector<8x128xf32>
      %155 = vector.shape_cast %1 : vector<128xf32> to vector<1x128xf32>
      %156 = vector.broadcast %155 : vector<1x128xf32> to vector<8x128xf32>
      %157 = arith.mulf %154, %156 : vector<8x128xf32>
      %158 = vector.shape_cast %3 : vector<128xf32> to vector<1x128xf32>
      %159 = vector.broadcast %158 : vector<1x128xf32> to vector<8x128xf32>
      %160 = arith.addf %157, %159 : vector<8x128xf32>
      %161 = arith.truncf %160 : vector<8x128xf32> to vector<8x128xbf16>
      %c0_60 = arith.constant 0 : index
      %c0_61 = arith.constant 0 : index
      %162 = vector.load %arg8[%c0_60, %c0_61] : memref<128x256xbf16, #tpu.memory_space<vmem>>, vector<128x256xbf16>
      %cst_62 = arith.constant dense<0.000000e+00> : vector<8x256xf32>
      %163 = tpu.matmul %161, %162, %cst_62 {dimension_numbers = #tpu.dot_dimension_numbers<[1], [0], [0], [1], [0, 0, 1, 1], [], []>} : vector<8x128xbf16>, vector<128x256xbf16>, vector<8x256xf32> -> vector<8x256xf32>
      %c0_63 = arith.constant 0 : index
      %c0_64 = arith.constant 0 : index
      %164 = vector.load %arg9[%c0_63, %c0_64] : memref<1x256xf32, #tpu.memory_space<vmem>>, vector<1x256xf32>
      %165 = vector.shape_cast %164 : vector<1x256xf32> to vector<256xf32>
      %166 = vector.shape_cast %165 : vector<256xf32> to vector<1x256xf32>
      %167 = vector.broadcast %166 : vector<1x256xf32> to vector<8x256xf32>
      %168 = arith.addf %163, %167 : vector<8x256xf32>
      %169 = arith.truncf %168 : vector<8x256xf32> to vector<8x256xbf16>
      %c0_65 = arith.constant 0 : index
      %c0_66 = arith.constant 0 : index
      %170 = vector.load %arg19[%c0_65, %c0_66] : memref<8x256xbf16, #tpu.memory_space<vmem>>, vector<8x256xbf16>
      tpu.vector_store %arg19[%c0_65, %c0_66], %169 {strides = array<i32>} : memref<8x256xbf16, #tpu.memory_space<vmem>>, vector<8x256xbf16>,
    } else {
    }
    %c8_i32 = arith.constant 8 : i32
    %7 = arith.muli %arg1, %c8_i32 : i32
    %8 = tpu.assume_multiple %7, 8 : i32
    %c0_4 = arith.constant 0 : index
    %9 = arith.index_cast %8 : i32 to index
    %c0_5 = arith.constant 0 : index
    %10 = vector.load %arg3[%c0_4, %9, %c0_5] : memref<1x8x128xf32, #tpu.memory_space<vmem>>, vector<1x8x128xf32>
    %11 = vector.shape_cast %10 : vector<1x8x128xf32> to vector<8x128xf32>
    %cst = arith.constant dense<0.000000e+00> : vector<8xf32>
    %12 = vector.multi_reduction <add>, %11, %cst [1] : vector<8x128xf32> to vector<8xf32>
    %13 = vector.shape_cast %12 : vector<8xf32> to vector<8x1xf32>
    %cst_6 = arith.constant 1.280000e+02 : f32
    %14 = vector.broadcast %cst_6 : f32 to vector<8x1xf32>
    %15 = arith.divf %13, %14 : vector<8x1xf32>
    %16 = vector.broadcast %15 : vector<8x1xf32> to vector<8x128xf32>
    %17 = arith.subf %11, %16 : vector<8x128xf32>
    %18 = arith.mulf %17, %17 : vector<8x128xf32>
    %cst_7 = arith.constant dense<0.000000e+00> : vector<8xf32>
    %19 = vector.multi_reduction <add>, %18, %cst_7 [1] : vector<8x128xf32> to vector<8xf32>
    %20 = vector.shape_cast %19 : vector<8xf32> to vector<8x1xf32>
    %cst_8 = arith.constant 1.280000e+02 : f32
    %21 = vector.broadcast %cst_8 : f32 to vector<8x1xf32>
    %22 = arith.divf %20, %21 : vector<8x1xf32>
    %23 = vector.broadcast %15 : vector<8x1xf32> to vector<8x128xf32>
    %24 = arith.subf %11, %23 : vector<8x128xf32>
    %cst_9 = arith.constant 9.99999997E-7 : f32
    %25 = vector.broadcast %cst_9 : f32 to vector<8x1xf32>
    %26 = arith.addf %22, %25 : vector<8x1xf32>
    %27 = math.rsqrt %26 : vector<8x1xf32>
    %28 = vector.broadcast %27 : vector<8x1xf32> to vector<8x128xf32>
    %29 = arith.mulf %24, %28 : vector<8x128xf32>
    %30 = vector.shape_cast %1 : vector<128xf32> to vector<1x128xf32>
    %31 = vector.broadcast %30 : vector<1x128xf32> to vector<8x128xf32>
    %32 = arith.mulf %29, %31 : vector<8x128xf32>
    %33 = vector.shape_cast %3 : vector<128xf32> to vector<1x128xf32>
    %34 = vector.broadcast %33 : vector<1x128xf32> to vector<8x128xf32>
    %35 = arith.addf %32, %34 : vector<8x128xf32>
    %36 = arith.truncf %35 : vector<8x128xf32> to vector<8x128xbf16>
    %c0_10 = arith.constant 0 : index
    %c0_11 = arith.constant 0 : index
    %37 = vector.load %arg6[%c0_10, %c0_11] : memref<128x128xbf16, #tpu.memory_space<vmem>>, vector<128x128xbf16>
    %cst_12 = arith.constant dense<0.000000e+00> : vector<8x128xf32>
    %38 = tpu.matmul %36, %37, %cst_12 {dimension_numbers = #tpu.dot_dimension_numbers<[1], [0], [0], [1], [0, 0, 1, 1], [], []>} : vector<8x128xbf16>, vector<128x128xbf16>, vector<8x128xf32> -> vector<8x128xf32>
    %c0_13 = arith.constant 0 : index
    %c0_14 = arith.constant 0 : index
    %39 = vector.load %arg7[%c0_13, %c0_14] : memref<1x128xf32, #tpu.memory_space<vmem>>, vector<1x128xf32>
    %40 = vector.shape_cast %39 : vector<1x128xf32> to vector<128xf32>
    %41 = vector.shape_cast %40 : vector<128xf32> to vector<1x128xf32>
    %42 = vector.broadcast %41 : vector<1x128xf32> to vector<8x128xf32>
    %43 = arith.addf %38, %42 : vector<8x128xf32>
    %cst_15 = arith.constant 0.176776692 : f32
    %44 = vector.broadcast %cst_15 : f32 to vector<8x128xf32>
    %45 = arith.mulf %43, %44 : vector<8x128xf32>
    %46 = arith.truncf %45 : vector<8x128xf32> to vector<8x128xbf16>
    %47 = vector.shape_cast %46 : vector<8x128xbf16> to vector<8x4x32xbf16>
    %c0_16 = arith.constant 0 : index
    %c0_17 = arith.constant 0 : index
    %48 = vector.load %arg19[%c0_16, %c0_17] : memref<8x256xbf16, #tpu.memory_space<vmem>>, vector<8x128xbf16>
    %49 = vector.shape_cast %48 : vector<8x128xbf16> to vector<8x4x32xbf16>
    %c0_18 = arith.constant 0 : index
    %c128 = arith.constant 128 : index
    %50 = vector.load %arg19[%c0_18, %c128] : memref<8x256xbf16, #tpu.memory_space<vmem>>, vector<8x128xbf16>
    %51 = vector.shape_cast %50 : vector<8x128xbf16> to vector<8x4x32xbf16>
    "tpu.trace_start"() <{level = 10 : i32, message = "qhd,khd->hqk"}> : () -> ()
    %cst_19 = arith.constant dense<0.000000e+00> : vector<4x8x8xf32>
    %52 = tpu.matmul %47, %49, %cst_19 {dimension_numbers = #tpu.dot_dimension_numbers<[2], [2], [0], [0], [0, 1, 0, 0, 1, 0], [1], [1]>} : vector<8x4x32xbf16>, vector<8x4x32xbf16>, vector<4x8x8xf32> -> vector<4x8x8xf32>
    "tpu.trace_stop"() : () -> ()
    %53 = tpu.iota {dimensions = array<i32: 2>} : vector<1x1x8xi32>
    %54 = arith.index_cast %arg0 : i32 to index
    %55 = memref.load %arg2[%54] : memref<2xi32, #tpu.memory_space<smem>>
    %56 = vector.broadcast %55 : i32 to vector<1x1x8xi32>
    %57 = arith.cmpi sge, %53, %56 : vector<1x1x8xi32>
    %cst_20 = arith.constant -9.99999984E+17 : f32
    %58 = vector.shape_cast %57 : vector<1x1x8xi1> to vector<1x1x8xi1>
    %59 = vector.broadcast %58 : vector<1x1x8xi1> to vector<4x8x8xi1>
    %60 = vector.broadcast %cst_20 : f32 to vector<4x8x8xf32>
    %61 = arith.select %59, %60, %52 : vector<4x8x8xi1>, vector<4x8x8xf32>
    %cst_21 = arith.constant dense<0xFF800000> : vector<4x8xf32>
    %62 = vector.multi_reduction <maximumf>, %61, %cst_21 [2] : vector<4x8x8xf32> to vector<4x8xf32>
    %63 = vector.shape_cast %62 : vector<4x8xf32> to vector<4x8x1xf32>
    %64 = vector.broadcast %63 : vector<4x8x1xf32> to vector<4x8x8xf32>
    %65 = arith.subf %61, %64 : vector<4x8x8xf32>
    %66 = math.exp %65 : vector<4x8x8xf32>
    %cst_22 = arith.constant dense<0.000000e+00> : vector<4x8xf32>
    %67 = vector.multi_reduction <add>, %66, %cst_22 [2] : vector<4x8x8xf32> to vector<4x8xf32>
    %68 = vector.shape_cast %67 : vector<4x8xf32> to vector<4x8x1xf32>
    %69 = tpu.reciprocal %68 {approx = true} : vector<4x8x1xf32> -> vector<4x8x1xf32>
    %70 = vector.broadcast %69 : vector<4x8x1xf32> to vector<4x8x8xf32>
    %71 = arith.mulf %66, %70 : vector<4x8x8xf32>
    %72 = arith.truncf %71 : vector<4x8x8xf32> to vector<4x8x8xbf16>
    "tpu.trace_start"() <{level = 10 : i32, message = "hqk,khd->qhd"}> : () -> ()
    %cst_23 = arith.constant dense<0.000000e+00> : vector<4x32x8xf32>
    %73 = tpu.matmul %51, %72, %cst_23 {dimension_numbers = #tpu.dot_dimension_numbers<[0], [2], [2], [1], [0, 1, 0, 2, 1, 1], [1], [0]>} : vector<8x4x32xbf16>, vector<4x8x8xbf16>, vector<4x32x8xf32> -> vector<4x32x8xf32>
    %74 = tpu.transpose %73, [2, 0, 1] : vector<4x32x8xf32> -> vector<8x4x32xf32>
    "tpu.trace_stop"() : () -> ()
    %75 = vector.shape_cast %74 : vector<8x4x32xf32> to vector<8x128xf32>
    %76 = arith.truncf %75 : vector<8x128xf32> to vector<8x128xbf16>
    %c0_24 = arith.constant 0 : index
    %c0_25 = arith.constant 0 : index
    %77 = vector.load %arg10[%c0_24, %c0_25] : memref<128x128xbf16, #tpu.memory_space<vmem>>, vector<128x128xbf16>
    %cst_26 = arith.constant dense<0.000000e+00> : vector<8x128xf32>
    %78 = tpu.matmul %76, %77, %cst_26 {dimension_numbers = #tpu.dot_dimension_numbers<[1], [0], [0], [1], [0, 0, 1, 1], [], []>} : vector<8x128xbf16>, vector<128x128xbf16>, vector<8x128xf32> -> vector<8x128xf32>
    %c0_27 = arith.constant 0 : index
    %c0_28 = arith.constant 0 : index
    %79 = vector.load %arg11[%c0_27, %c0_28] : memref<1x128xf32, #tpu.memory_space<vmem>>, vector<1x128xf32>
    %80 = vector.shape_cast %79 : vector<1x128xf32> to vector<128xf32>
    %81 = vector.shape_cast %80 : vector<128xf32> to vector<1x128xf32>
    %82 = vector.broadcast %81 : vector<1x128xf32> to vector<8x128xf32>
    %83 = arith.addf %78, %82 : vector<8x128xf32>
    %84 = arith.addf %83, %11 : vector<8x128xf32>
    %c0_29 = arith.constant 0 : index
    %c0_30 = arith.constant 0 : index
    %85 = vector.load %arg12[%c0_29, %c0_30] : memref<1x128xf32, #tpu.memory_space<vmem>>, vector<1x128xf32>
    %86 = vector.shape_cast %85 : vector<1x128xf32> to vector<128xf32>
    %c0_31 = arith.constant 0 : index
    %c0_32 = arith.constant 0 : index
    %87 = vector.load %arg13[%c0_31, %c0_32] : memref<1x128xf32, #tpu.memory_space<vmem>>, vector<1x128xf32>
    %88 = vector.shape_cast %87 : vector<1x128xf32> to vector<128xf32>
    %cst_33 = arith.constant dense<0.000000e+00> : vector<8xf32>
    %89 = vector.multi_reduction <add>, %84, %cst_33 [1] : vector<8x128xf32> to vector<8xf32>
    %90 = vector.shape_cast %89 : vector<8xf32> to vector<8x1xf32>
    %cst_34 = arith.constant 1.280000e+02 : f32
    %91 = vector.broadcast %cst_34 : f32 to vector<8x1xf32>
    %92 = arith.divf %90, %91 : vector<8x1xf32>
    %93 = vector.broadcast %92 : vector<8x1xf32> to vector<8x128xf32>
    %94 = arith.subf %84, %93 : vector<8x128xf32>
    %95 = arith.mulf %94, %94 : vector<8x128xf32>
    %cst_35 = arith.constant dense<0.000000e+00> : vector<8xf32>
    %96 = vector.multi_reduction <add>, %95, %cst_35 [1] : vector<8x128xf32> to vector<8xf32>
    %97 = vector.shape_cast %96 : vector<8xf32> to vector<8x1xf32>
    %cst_36 = arith.constant 1.280000e+02 : f32
    %98 = vector.broadcast %cst_36 : f32 to vector<8x1xf32>
    %99 = arith.divf %97, %98 : vector<8x1xf32>
    %100 = vector.broadcast %92 : vector<8x1xf32> to vector<8x128xf32>
    %101 = arith.subf %84, %100 : vector<8x128xf32>
    %cst_37 = arith.constant 9.99999997E-7 : f32
    %102 = vector.broadcast %cst_37 : f32 to vector<8x1xf32>
    %103 = arith.addf %99, %102 : vector<8x1xf32>
    %104 = math.rsqrt %103 : vector<8x1xf32>
    %105 = vector.broadcast %104 : vector<8x1xf32> to vector<8x128xf32>
    %106 = arith.mulf %101, %105 : vector<8x128xf32>
    %107 = vector.shape_cast %86 : vector<128xf32> to vector<1x128xf32>
    %108 = vector.broadcast %107 : vector<1x128xf32> to vector<8x128xf32>
    %109 = arith.mulf %106, %108 : vector<8x128xf32>
    %110 = vector.shape_cast %88 : vector<128xf32> to vector<1x128xf32>
    %111 = vector.broadcast %110 : vector<1x128xf32> to vector<8x128xf32>
    %112 = arith.addf %109, %111 : vector<8x128xf32>
    %113 = arith.truncf %112 : vector<8x128xf32> to vector<8x128xbf16>
    %c0_38 = arith.constant 0 : index
    %c0_39 = arith.constant 0 : index
    %114 = vector.load %arg14[%c0_38, %c0_39] : memref<128x256xbf16, #tpu.memory_space<vmem>>, vector<128x256xbf16>
    %cst_40 = arith.constant dense<0.000000e+00> : vector<8x256xf32>
    %115 = tpu.matmul %113, %114, %cst_40 {dimension_numbers = #tpu.dot_dimension_numbers<[1], [0], [0], [1], [0, 0, 1, 1], [], []>} : vector<8x128xbf16>, vector<128x256xbf16>, vector<8x256xf32> -> vector<8x256xf32>
    %c0_41 = arith.constant 0 : index
    %c0_42 = arith.constant 0 : index
    %116 = vector.load %arg15[%c0_41, %c0_42] : memref<1x256xf32, #tpu.memory_space<vmem>>, vector<1x256xf32>
    %117 = vector.shape_cast %116 : vector<1x256xf32> to vector<256xf32>
    %118 = vector.shape_cast %117 : vector<256xf32> to vector<1x256xf32>
    %119 = vector.broadcast %118 : vector<1x256xf32> to vector<8x256xf32>
    %120 = arith.addf %115, %119 : vector<8x256xf32>
    %cst_43 = arith.constant 0.000000e+00 : f32
    %121 = vector.broadcast %cst_43 : f32 to vector<8x256xf32>
    %122 = arith.maximumf %120, %121 : vector<8x256xf32>
    %123 = arith.truncf %122 : vector<8x256xf32> to vector<8x256xbf16>
    %c0_44 = arith.constant 0 : index
    %c0_45 = arith.constant 0 : index
    %124 = vector.load %arg16[%c0_44, %c0_45] : memref<256x128xbf16, #tpu.memory_space<vmem>>, vector<256x128xbf16>
    %cst_46 = arith.constant dense<0.000000e+00> : vector<8x128xf32>
    %125 = tpu.matmul %123, %124, %cst_46 {dimension_numbers = #tpu.dot_dimension_numbers<[1], [0], [0], [1], [0, 0, 1, 1], [], []>} : vector<8x256xbf16>, vector<256x128xbf16>, vector<8x128xf32> -> vector<8x128xf32>
    %c0_47 = arith.constant 0 : index
    %c0_48 = arith.constant 0 : index
    %126 = vector.load %arg17[%c0_47, %c0_48] : memref<1x128xf32, #tpu.memory_space<vmem>>, vector<1x128xf32>
    %127 = vector.shape_cast %126 : vector<1x128xf32> to vector<128xf32>
    %128 = vector.shape_cast %127 : vector<128xf32> to vector<1x128xf32>
    %129 = vector.broadcast %128 : vector<1x128xf32> to vector<8x128xf32>
    %130 = arith.addf %125, %129 : vector<8x128xf32>
    %131 = arith.addf %130, %84 : vector<8x128xf32>
    %c0_49 = arith.constant 0 : index
    %c0_50 = arith.constant 0 : index
    %c0_51 = arith.constant 0 : index
    %132 = vector.load %arg18[%c0_49, %c0_50, %c0_51] : memref<1x8x128xf32, #tpu.memory_space<vmem>>, vector<1x8x128xf32>
    %133 = vector.shape_cast %132 : vector<1x8x128xf32> to vector<8x128xf32>
    %134 = vector.shape_cast %131 : vector<8x128xf32> to vector<1x8x128xf32>
    tpu.vector_store %arg18[%c0_49, %c0_50, %c0_51], %134 {strides = array<i32>} : memref<1x8x128xf32, #tpu.memory_space<vmem>>, vector<1x8x128xf32>,
    return
  }
  func.func @transform_0(%arg0: i32, %arg1: i32, %arg2: memref<2xi32, #tpu.memory_space<smem>>) -> (i32, i32, i32) {
    %c0_i32 = arith.constant 0 : i32
    %c0_i32_0 = arith.constant 0 : i32
    %c0_i32_1 = arith.constant 0 : i32
    return %arg0, %c0_i32, %c0_i32_0 : i32, i32, i32
  }
  func.func @transform_1(%arg0: i32, %arg1: i32, %arg2: memref<2xi32, #tpu.memory_space<smem>>) -> (i32, i32) {
    %c0_i32 = arith.constant 0 : i32
    %c0_i32_0 = arith.constant 0 : i32
    %c0_i32_1 = arith.constant 0 : i32
    return %c0_i32, %c0_i32_0 : i32, i32
  }
  func.func @transform_2(%arg0: i32, %arg1: i32, %arg2: memref<2xi32, #tpu.memory_space<smem>>) -> (i32, i32) {
    %c0_i32 = arith.constant 0 : i32
    %c0_i32_0 = arith.constant 0 : i32
    %c0_i32_1 = arith.constant 0 : i32
    return %c0_i32, %c0_i32_0 : i32, i32
  }
  func.func @transform_3(%arg0: i32, %arg1: i32, %arg2: memref<2xi32, #tpu.memory_space<smem>>) -> (i32, i32) {
    %c0_i32 = arith.constant 0 : i32
    %c0_i32_0 = arith.constant 0 : i32
    %c0_i32_1 = arith.constant 0 : i32
    return %c0_i32, %c0_i32_0 : i32, i32
  }
  func.func @transform_4(%arg0: i32, %arg1: i32, %arg2: memref<2xi32, #tpu.memory_space<smem>>) -> (i32, i32) {
    %c0_i32 = arith.constant 0 : i32
    %c0_i32_0 = arith.constant 0 : i32
    %c0_i32_1 = arith.constant 0 : i32
    return %c0_i32, %c0_i32_0 : i32, i32
  }
  func.func @transform_5(%arg0: i32, %arg1: i32, %arg2: memref<2xi32, #tpu.memory_space<smem>>) -> (i32, i32) {
    %c0_i32 = arith.constant 0 : i32
    %c0_i32_0 = arith.constant 0 : i32
    %c0_i32_1 = arith.constant 0 : i32
    return %c0_i32, %c0_i32_0 : i32, i32
  }
  func.func @transform_6(%arg0: i32, %arg1: i32, %arg2: memref<2xi32, #tpu.memory_space<smem>>) -> (i32, i32) {
    %c0_i32 = arith.constant 0 : i32
    %c0_i32_0 = arith.constant 0 : i32
    %c0_i32_1 = arith.constant 0 : i32
    return %c0_i32, %c0_i32_0 : i32, i32
  }
  func.func @transform_7(%arg0: i32, %arg1: i32, %arg2: memref<2xi32, #tpu.memory_space<smem>>) -> (i32, i32) {
    %c0_i32 = arith.constant 0 : i32
    %c0_i32_0 = arith.constant 0 : i32
    %c0_i32_1 = arith.constant 0 : i32
    return %c0_i32, %c0_i32_0 : i32, i32
  }
  func.func @transform_8(%arg0: i32, %arg1: i32, %arg2: memref<2xi32, #tpu.memory_space<smem>>) -> (i32, i32) {
    %c0_i32 = arith.constant 0 : i32
    %c0_i32_0 = arith.constant 0 : i32
    %c0_i32_1 = arith.constant 0 : i32
    return %c0_i32, %c0_i32_0 : i32, i32
  }
  func.func @transform_9(%arg0: i32, %arg1: i32, %arg2: memref<2xi32, #tpu.memory_space<smem>>) -> (i32, i32) {
    %c0_i32 = arith.constant 0 : i32
    %c0_i32_0 = arith.constant 0 : i32
    %c0_i32_1 = arith.constant 0 : i32
    return %c0_i32, %c0_i32_0 : i32, i32
  }
  func.func @transform_10(%arg0: i32, %arg1: i32, %arg2: memref<2xi32, #tpu.memory_space<smem>>) -> (i32, i32) {
    %c0_i32 = arith.constant 0 : i32
    %c0_i32_0 = arith.constant 0 : i32
    %c0_i32_1 = arith.constant 0 : i32
    return %c0_i32, %c0_i32_0 : i32, i32
  }
  func.func @transform_11(%arg0: i32, %arg1: i32, %arg2: memref<2xi32, #tpu.memory_space<smem>>) -> (i32, i32) {
    %c0_i32 = arith.constant 0 : i32
    %c0_i32_0 = arith.constant 0 : i32
    %c0_i32_1 = arith.constant 0 : i32
    return %c0_i32, %c0_i32_0 : i32, i32
  }
  func.func @transform_12(%arg0: i32, %arg1: i32, %arg2: memref<2xi32, #tpu.memory_space<smem>>) -> (i32, i32) {
    %c0_i32 = arith.constant 0 : i32
    %c0_i32_0 = arith.constant 0 : i32
    %c0_i32_1 = arith.constant 0 : i32
    return %c0_i32, %c0_i32_0 : i32, i32
  }
  func.func @transform_13(%arg0: i32, %arg1: i32, %arg2: memref<2xi32, #tpu.memory_space<smem>>) -> (i32, i32) {
    %c0_i32 = arith.constant 0 : i32
    %c0_i32_0 = arith.constant 0 : i32
    %c0_i32_1 = arith.constant 0 : i32
    return %c0_i32, %c0_i32_0 : i32, i32
  }
  func.func @transform_14(%arg0: i32, %arg1: i32, %arg2: memref<2xi32, #tpu.memory_space<smem>>) -> (i32, i32) {
    %c0_i32 = arith.constant 0 : i32
    %c0_i32_0 = arith.constant 0 : i32
    %c0_i32_1 = arith.constant 0 : i32
    return %c0_i32, %c0_i32_0 : i32, i32
  }
  func.func @transform_15(%arg0: i32, %arg1: i32, %arg2: memref<2xi32, #tpu.memory_space<smem>>) -> (i32, i32, i32) {
    %c0_i32 = arith.constant 0 : i32
    %c0_i32_0 = arith.constant 0 : i32
    return %arg0, %arg1, %c0_i32 : i32, i32, i32
  }
}

module attributes {stable_mosaic.version = 11 : i64} {
  func.func @encoder_layer_kernel(%arg0: i32, %arg1: i32, %arg2: memref<2xi32, #tpu.memory_space<smem>>, %arg3: memref<1x8x128xf32, #tpu.memory_space<vmem>>, %arg4: memref<1x128xf32, #tpu.memory_space<vmem>>, %arg5: memref<1x128xf32, #tpu.memory_space<vmem>>, %arg6: memref<128x128xbf16, #tpu.memory_space<vmem>>, %arg7: memref<1x128xf32, #tpu.memory_space<vmem>>, %arg8: memref<128x256xbf16, #tpu.memory_space<vmem>>, %arg9: memref<1x256xf32, #tpu.memory_space<vmem>>, %arg10: memref<128x128xbf16, #tpu.memory_space<vmem>>, %arg11: memref<1x128xf32, #tpu.memory_space<vmem>>, %arg12: memref<1x128xf32, #tpu.memory_space<vmem>>, %arg13: memref<1x128xf32, #tpu.memory_space<vmem>>, %arg14: memref<128x256xbf16, #tpu.memory_space<vmem>>, %arg15: memref<1x256xf32, #tpu.memory_space<vmem>>, %arg16: memref<256x128xbf16, #tpu.memory_space<vmem>>, %arg17: memref<1x128xf32, #tpu.memory_space<vmem>>, %arg18: memref<1x8x128xf32, #tpu.memory_space<vmem>>, %arg19: memref<8x256xbf16, #tpu.memory_space<vmem>>) attributes {dimension_semantics = [#tpu.dimension_semantics<parallel>, #tpu.dimension_semantics<arbitrary>], iteration_bounds = array<i64: 2, 1>, scalar_prefetch = 1 : i64, scratch_operands = 1 : i64, tpu.core_type = #tpu.core_type<tc>, window_params = [{transform_indices = @transform_0, window_bounds = array<i64: 1, 8, 128>}, {pipeline_mode = #tpu.pipeline_mode<synchronous>, transform_indices = @transform_1, window_bounds = array<i64: 1, 128>}, {pipeline_mode = #tpu.pipeline_mode<synchronous>, transform_indices = @transform_2, window_bounds = array<i64: 1, 128>}, {pipeline_mode = #tpu.pipeline_mode<synchronous>, transform_indices = @transform_3, window_bounds = array<i64: 128, 128>}, {pipeline_mode = #tpu.pipeline_mode<synchronous>, transform_indices = @transform_4, window_bounds = array<i64: 1, 128>}, {pipeline_mode = #tpu.pipeline_mode<synchronous>, transform_indices = @transform_5, window_bounds = array<i64: 128, 256>}, {pipeline_mode = #tpu.pipeline_mode<synchronous>, transform_indices = @transform_6, window_bounds = array<i64: 1, 256>}, {pipeline_mode = #tpu.pipeline_mode<synchronous>, transform_indices = @transform_7, window_bounds = array<i64: 128, 128>}, {pipeline_mode = #tpu.pipeline_mode<synchronous>, transform_indices = @transform_8, window_bounds = array<i64: 1, 128>}, {pipeline_mode = #tpu.pipeline_mode<synchronous>, transform_indices = @transform_9, window_bounds = array<i64: 1, 128>}, {pipeline_mode = #tpu.pipeline_mode<synchronous>, transform_indices = @transform_10, window_bounds = array<i64: 1, 128>}, {pipeline_mode = #tpu.pipeline_mode<synchronous>, transform_indices = @transform_11, window_bounds = array<i64: 128, 256>}, {pipeline_mode = #tpu.pipeline_mode<synchronous>, transform_indices = @transform_12, window_bounds = array<i64: 1, 256>}, {pipeline_mode = #tpu.pipeline_mode<synchronous>, transform_indices = @transform_13, window_bounds = array<i64: 256, 128>}, {pipeline_mode = #tpu.pipeline_mode<synchronous>, transform_indices = @transform_14, window_bounds = array<i64: 1, 128>}, {transform_indices = @transform_15, window_bounds = array<i64: 1, 8, 128>}]} {
    %c0 = arith.constant 0 : index
    %c0_0 = arith.constant 0 : index
    %0 = vector.load %arg4[%c0, %c0_0] : memref<1x128xf32, #tpu.memory_space<vmem>>, vector<1x128xf32>
    %1 = vector.shape_cast %0 : vector<1x128xf32> to vector<128xf32>
    %c0_1 = arith.constant 0 : index
    %c0_2 = arith.constant 0 : index
    %2 = vector.load %arg5[%c0_1, %c0_2] : memref<1x128xf32, #tpu.memory_space<vmem>>, vector<1x128xf32>
    %3 = vector.shape_cast %2 : vector<1x128xf32> to vector<128xf32>
    %c0_i32 = arith.constant 0 : i32
    %4 = arith.cmpi eq, %arg1, %c0_i32 : i32
    %5 = arith.extui %4 : i1 to i32
    %c0_i32_3 = arith.constant 0 : i32
    %6 = arith.cmpi ne, %5, %c0_i32_3 : i32
    scf.if %6 {
      %c0_52 = arith.constant 0 : index
      %c0_53 = arith.constant 0 : index
      %c0_54 = arith.constant 0 : index
      %135 = vector.load %arg3[%c0_52, %c0_53, %c0_54] : memref<1x8x128xf32, #tpu.memory_space<vmem>>, vector<1x8x128xf32>
      %136 = vector.shape_cast %135 : vector<1x8x128xf32> to vector<8x128xf32>
      %cst_55 = arith.constant dense<0.000000e+00> : vector<8xf32>
      %137 = vector.multi_reduction <add>, %136, %cst_55 [1] : vector<8x128xf32> to vector<8xf32>
      %138 = vector.shape_cast %137 : vector<8xf32> to vector<8x1xf32>
      %cst_56 = arith.constant 1.280000e+02 : f32
      %139 = vector.broadcast %cst_56 : f32 to vector<8x1xf32>
      %140 = arith.divf %138, %139 : vector<8x1xf32>
      %141 = vector.broadcast %140 : vector<8x1xf32> to vector<8x128xf32>
      %142 = arith.subf %136, %141 : vector<8x128xf32>
      %143 = arith.mulf %142, %142 : vector<8x128xf32>
      %cst_57 = arith.constant dense<0.000000e+00> : vector<8xf32>
      %144 = vector.multi_reduction <add>, %143, %cst_57 [1] : vector<8x128xf32> to vector<8xf32>
      %145 = vector.shape_cast %144 : vector<8xf32> to vector<8x1xf32>
      %cst_58 = arith.constant 1.280000e+02 : f32
      %146 = vector.broadcast %cst_58 : f32 to vector<8x1xf32>
      %147 = arith.divf %145, %146 : vector<8x1xf32>
      %148 = vector.broadcast %140 : vector<8x1xf32> to vector<8x128xf32>
      %149 = arith.subf %136, %148 : vector<8x128xf32>
      %cst_59 = arith.constant 9.99999997E-7 : f32
      %150 = vector.broadcast %cst_59 : f32 to vector<8x1xf32>
      %151 = arith.addf %147, %150 : vector<8x1xf32>
      %152 = math.rsqrt %151 : vector<8x1xf32>
      %153 = vector.broadcast %152 : vector<8x1xf32> to vector<8x128xf32>
      %154 = arith.mulf %149, %153 : vector<8x128xf32>
      %155 = vector.shape_cast %1 : vector<128xf32> to vector<1x128xf32>
      %156 = vector.broadcast %155 : vector<1x128xf32> to vector<8x128xf32>
      %157 = arith.mulf %154, %156 : vector<8x128xf32>
      %158 = vector.shape_cast %3 : vector<128xf32> to vector<1x128xf32>
      %159 = vector.broadcast %158 : vector<1x128xf32> to vector<8x128xf32>
      %160 = arith.addf %157, %159 : vector<8x128xf32>
      %161 = arith.truncf %160 : vector<8x128xf32> to vector<8x128xbf16>
      %c0_60 = arith.constant 0 : index
      %c0_61 = arith.constant 0 : index
      %162 = vector.load %arg8[%c0_60, %c0_61] : memref<128x256xbf16, #tpu.memory_space<vmem>>, vector<128x256xbf16>
      %cst_62 = arith.constant dense<0.000000e+00> : vector<8x256xf32>
      %163 = tpu.matmul %161, %162, %cst_62 {dimension_numbers = #tpu.dot_dimension_numbers<[1], [0], [0], [1], [0, 0, 1, 1], [], []>} : vector<8x128xbf16>, vector<128x256xbf16>, vector<8x256xf32> -> vector<8x256xf32>
      %c0_63 = arith.constant 0 : index
      %c0_64 = arith.constant 0 : index
      %164 = vector.load %arg9[%c0_63, %c0_64] : memref<1x256xf32, #tpu.memory_space<vmem>>, vector<1x256xf32>
      %165 = vector.shape_cast %164 : vector<1x256xf32> to vector<256xf32>
      %166 = vector.shape_cast %165 : vector<256xf32> to vector<1x256xf32>
      %167 = vector.broadcast %166 : vector<1x256xf32> to vector<8x256xf32>
      %168 = arith.addf %163, %167 : vector<8x256xf32>
      %169 = arith.truncf %168 : vector<8x256xf32> to vector<8x256xbf16>
      %c0_65 = arith.constant 0 : index
      %c0_66 = arith.constant 0 : index
      %170 = vector.load %arg19[%c0_65, %c0_66] : memref<8x256xbf16, #tpu.memory_space<vmem>>, vector<8x256xbf16>
      tpu.vector_store %arg19[%c0_65, %c0_66], %169 {strides = array<i32>} : memref<8x256xbf16, #tpu.memory_space<vmem>>, vector<8x256xbf16>,
    } else {
    }
    %c8_i32 = arith.constant 8 : i32
    %7 = arith.muli %arg1, %c8_i32 : i32
    %8 = tpu.assume_multiple %7, 8 : i32
    %c0_4 = arith.constant 0 : index
    %9 = arith.index_cast %8 : i32 to index
    %c0_5 = arith.constant 0 : index
    %10 = vector.load %arg3[%c0_4, %9, %c0_5] : memref<1x8x128xf32, #tpu.memory_space<vmem>>, vector<1x8x128xf32>
    %11 = vector.shape_cast %10 : vector<1x8x128xf32> to vector<8x128xf32>
    %cst = arith.constant dense<0.000000e+00> : vector<8xf32>
    %12 = vector.multi_reduction <add>, %11, %cst [1] : vector<8x128xf32> to vector<8xf32>
    %13 = vector.shape_cast %12 : vector<8xf32> to vector<8x1xf32>
    %cst_6 = arith.constant 1.280000e+02 : f32
    %14 = vector.broadcast %cst_6 : f32 to vector<8x1xf32>
    %15 = arith.divf %13, %14 : vector<8x1xf32>
    %16 = vector.broadcast %15 : vector<8x1xf32> to vector<8x128xf32>
    %17 = arith.subf %11, %16 : vector<8x128xf32>
    %18 = arith.mulf %17, %17 : vector<8x128xf32>
    %cst_7 = arith.constant dense<0.000000e+00> : vector<8xf32>
    %19 = vector.multi_reduction <add>, %18, %cst_7 [1] : vector<8x128xf32> to vector<8xf32>
    %20 = vector.shape_cast %19 : vector<8xf32> to vector<8x1xf32>
    %cst_8 = arith.constant 1.280000e+02 : f32
    %21 = vector.broadcast %cst_8 : f32 to vector<8x1xf32>
    %22 = arith.divf %20, %21 : vector<8x1xf32>
    %23 = vector.broadcast %15 : vector<8x1xf32> to vector<8x128xf32>
    %24 = arith.subf %11, %23 : vector<8x128xf32>
    %cst_9 = arith.constant 9.99999997E-7 : f32
    %25 = vector.broadcast %cst_9 : f32 to vector<8x1xf32>
    %26 = arith.addf %22, %25 : vector<8x1xf32>
    %27 = math.rsqrt %26 : vector<8x1xf32>
    %28 = vector.broadcast %27 : vector<8x1xf32> to vector<8x128xf32>
    %29 = arith.mulf %24, %28 : vector<8x128xf32>
    %30 = vector.shape_cast %1 : vector<128xf32> to vector<1x128xf32>
    %31 = vector.broadcast %30 : vector<1x128xf32> to vector<8x128xf32>
    %32 = arith.mulf %29, %31 : vector<8x128xf32>
    %33 = vector.shape_cast %3 : vector<128xf32> to vector<1x128xf32>
    %34 = vector.broadcast %33 : vector<1x128xf32> to vector<8x128xf32>
    %35 = arith.addf %32, %34 : vector<8x128xf32>
    %36 = arith.truncf %35 : vector<8x128xf32> to vector<8x128xbf16>
    %c0_10 = arith.constant 0 : index
    %c0_11 = arith.constant 0 : index
    %37 = vector.load %arg6[%c0_10, %c0_11] : memref<128x128xbf16, #tpu.memory_space<vmem>>, vector<128x128xbf16>
    %cst_12 = arith.constant dense<0.000000e+00> : vector<8x128xf32>
    %38 = tpu.matmul %36, %37, %cst_12 {dimension_numbers = #tpu.dot_dimension_numbers<[1], [0], [0], [1], [0, 0, 1, 1], [], []>} : vector<8x128xbf16>, vector<128x128xbf16>, vector<8x128xf32> -> vector<8x128xf32>
    %c0_13 = arith.constant 0 : index
    %c0_14 = arith.constant 0 : index
    %39 = vector.load %arg7[%c0_13, %c0_14] : memref<1x128xf32, #tpu.memory_space<vmem>>, vector<1x128xf32>
    %40 = vector.shape_cast %39 : vector<1x128xf32> to vector<128xf32>
    %41 = vector.shape_cast %40 : vector<128xf32> to vector<1x128xf32>
    %42 = vector.broadcast %41 : vector<1x128xf32> to vector<8x128xf32>
    %43 = arith.addf %38, %42 : vector<8x128xf32>
    %cst_15 = arith.constant 0.176776692 : f32
    %44 = vector.broadcast %cst_15 : f32 to vector<8x128xf32>
    %45 = arith.mulf %43, %44 : vector<8x128xf32>
    %46 = arith.truncf %45 : vector<8x128xf32> to vector<8x128xbf16>
    %47 = vector.shape_cast %46 : vector<8x128xbf16> to vector<8x4x32xbf16>
    %c0_16 = arith.constant 0 : index
    %c0_17 = arith.constant 0 : index
    %48 = vector.load %arg19[%c0_16, %c0_17] : memref<8x256xbf16, #tpu.memory_space<vmem>>, vector<8x128xbf16>
    %49 = vector.shape_cast %48 : vector<8x128xbf16> to vector<8x4x32xbf16>
    %c0_18 = arith.constant 0 : index
    %c128 = arith.constant 128 : index
    %50 = vector.load %arg19[%c0_18, %c128] : memref<8x256xbf16, #tpu.memory_space<vmem>>, vector<8x128xbf16>
    %51 = vector.shape_cast %50 : vector<8x128xbf16> to vector<8x4x32xbf16>
    "tpu.trace_start"() <{level = 10 : i32, message = "qhd,khd->hqk"}> : () -> ()
    %cst_19 = arith.constant dense<0.000000e+00> : vector<4x8x8xf32>
    %52 = tpu.matmul %47, %49, %cst_19 {dimension_numbers = #tpu.dot_dimension_numbers<[2], [2], [0], [0], [0, 1, 0, 0, 1, 0], [1], [1]>} : vector<8x4x32xbf16>, vector<8x4x32xbf16>, vector<4x8x8xf32> -> vector<4x8x8xf32>
    "tpu.trace_stop"() : () -> ()
    %53 = tpu.iota {dimensions = array<i32: 2>} : vector<1x1x8xi32>
    %54 = arith.index_cast %arg0 : i32 to index
    %55 = memref.load %arg2[%54] : memref<2xi32, #tpu.memory_space<smem>>
    %56 = vector.broadcast %55 : i32 to vector<1x1x8xi32>
    %57 = arith.cmpi sge, %53, %56 : vector<1x1x8xi32>
    %cst_20 = arith.constant -9.99999984E+17 : f32
    %58 = vector.shape_cast %57 : vector<1x1x8xi1> to vector<1x1x8xi1>
    %59 = vector.broadcast %58 : vector<1x1x8xi1> to vector<4x8x8xi1>
    %60 = vector.broadcast %cst_20 : f32 to vector<4x8x8xf32>
    %61 = arith.select %59, %60, %52 : vector<4x8x8xi1>, vector<4x8x8xf32>
    %cst_21 = arith.constant dense<0xFF800000> : vector<4x8xf32>
    %62 = vector.multi_reduction <maximumf>, %61, %cst_21 [2] : vector<4x8x8xf32> to vector<4x8xf32>
    %63 = vector.shape_cast %62 : vector<4x8xf32> to vector<4x8x1xf32>
    %64 = vector.broadcast %63 : vector<4x8x1xf32> to vector<4x8x8xf32>
    %65 = arith.subf %61, %64 : vector<4x8x8xf32>
    %66 = math.exp %65 : vector<4x8x8xf32>
    %cst_22 = arith.constant dense<0.000000e+00> : vector<4x8xf32>
    %67 = vector.multi_reduction <add>, %66, %cst_22 [2] : vector<4x8x8xf32> to vector<4x8xf32>
    %68 = vector.shape_cast %67 : vector<4x8xf32> to vector<4x8x1xf32>
    %69 = tpu.reciprocal %68 {approx = true} : vector<4x8x1xf32> -> vector<4x8x1xf32>
    %70 = vector.broadcast %69 : vector<4x8x1xf32> to vector<4x8x8xf32>
    %71 = arith.mulf %66, %70 : vector<4x8x8xf32>
    %72 = arith.truncf %71 : vector<4x8x8xf32> to vector<4x8x8xbf16>
    "tpu.trace_start"() <{level = 10 : i32, message = "hqk,khd->qhd"}> : () -> ()
    %cst_23 = arith.constant dense<0.000000e+00> : vector<4x32x8xf32>
    %73 = tpu.matmul %51, %72, %cst_23 {dimension_numbers = #tpu.dot_dimension_numbers<[0], [2], [2], [1], [0, 1, 0, 2, 1, 1], [1], [0]>} : vector<8x4x32xbf16>, vector<4x8x8xbf16>, vector<4x32x8xf32> -> vector<4x32x8xf32>
    %74 = tpu.transpose %73, [2, 0, 1] : vector<4x32x8xf32> -> vector<8x4x32xf32>
    "tpu.trace_stop"() : () -> ()
    %75 = vector.shape_cast %74 : vector<8x4x32xf32> to vector<8x128xf32>
    %76 = arith.truncf %75 : vector<8x128xf32> to vector<8x128xbf16>
    %c0_24 = arith.constant 0 : index
    %c0_25 = arith.constant 0 : index
    %77 = vector.load %arg10[%c0_24, %c0_25] : memref<128x128xbf16, #tpu.memory_space<vmem>>, vector<128x128xbf16>
    %cst_26 = arith.constant dense<0.000000e+00> : vector<8x128xf32>
    %78 = tpu.matmul %76, %77, %cst_26 {dimension_numbers = #tpu.dot_dimension_numbers<[1], [0], [0], [1], [0, 0, 1, 1], [], []>} : vector<8x128xbf16>, vector<128x128xbf16>, vector<8x128xf32> -> vector<8x128xf32>
    %c0_27 = arith.constant 0 : index
    %c0_28 = arith.constant 0 : index
    %79 = vector.load %arg11[%c0_27, %c0_28] : memref<1x128xf32, #tpu.memory_space<vmem>>, vector<1x128xf32>
    %80 = vector.shape_cast %79 : vector<1x128xf32> to vector<128xf32>
    %81 = vector.shape_cast %80 : vector<128xf32> to vector<1x128xf32>
    %82 = vector.broadcast %81 : vector<1x128xf32> to vector<8x128xf32>
    %83 = arith.addf %78, %82 : vector<8x128xf32>
    %84 = arith.addf %83, %11 : vector<8x128xf32>
    %c0_29 = arith.constant 0 : index
    %c0_30 = arith.constant 0 : index
    %85 = vector.load %arg12[%c0_29, %c0_30] : memref<1x128xf32, #tpu.memory_space<vmem>>, vector<1x128xf32>
    %86 = vector.shape_cast %85 : vector<1x128xf32> to vector<128xf32>
    %c0_31 = arith.constant 0 : index
    %c0_32 = arith.constant 0 : index
    %87 = vector.load %arg13[%c0_31, %c0_32] : memref<1x128xf32, #tpu.memory_space<vmem>>, vector<1x128xf32>
    %88 = vector.shape_cast %87 : vector<1x128xf32> to vector<128xf32>
    %cst_33 = arith.constant dense<0.000000e+00> : vector<8xf32>
    %89 = vector.multi_reduction <add>, %84, %cst_33 [1] : vector<8x128xf32> to vector<8xf32>
    %90 = vector.shape_cast %89 : vector<8xf32> to vector<8x1xf32>
    %cst_34 = arith.constant 1.280000e+02 : f32
    %91 = vector.broadcast %cst_34 : f32 to vector<8x1xf32>
    %92 = arith.divf %90, %91 : vector<8x1xf32>
    %93 = vector.broadcast %92 : vector<8x1xf32> to vector<8x128xf32>
    %94 = arith.subf %84, %93 : vector<8x128xf32>
    %95 = arith.mulf %94, %94 : vector<8x128xf32>
    %cst_35 = arith.constant dense<0.000000e+00> : vector<8xf32>
    %96 = vector.multi_reduction <add>, %95, %cst_35 [1] : vector<8x128xf32> to vector<8xf32>
    %97 = vector.shape_cast %96 : vector<8xf32> to vector<8x1xf32>
    %cst_36 = arith.constant 1.280000e+02 : f32
    %98 = vector.broadcast %cst_36 : f32 to vector<8x1xf32>
    %99 = arith.divf %97, %98 : vector<8x1xf32>
    %100 = vector.broadcast %92 : vector<8x1xf32> to vector<8x128xf32>
    %101 = arith.subf %84, %100 : vector<8x128xf32>
    %cst_37 = arith.constant 9.99999997E-7 : f32
    %102 = vector.broadcast %cst_37 : f32 to vector<8x1xf32>
    %103 = arith.addf %99, %102 : vector<8x1xf32>
    %104 = math.rsqrt %103 : vector<8x1xf32>
    %105 = vector.broadcast %104 : vector<8x1xf32> to vector<8x128xf32>
    %106 = arith.mulf %101, %105 : vector<8x128xf32>
    %107 = vector.shape_cast %86 : vector<128xf32> to vector<1x128xf32>
    %108 = vector.broadcast %107 : vector<1x128xf32> to vector<8x128xf32>
    %109 = arith.mulf %106, %108 : vector<8x128xf32>
    %110 = vector.shape_cast %88 : vector<128xf32> to vector<1x128xf32>
    %111 = vector.broadcast %110 : vector<1x128xf32> to vector<8x128xf32>
    %112 = arith.addf %109, %111 : vector<8x128xf32>
    %113 = arith.truncf %112 : vector<8x128xf32> to vector<8x128xbf16>
    %c0_38 = arith.constant 0 : index
    %c0_39 = arith.constant 0 : index
    %114 = vector.load %arg14[%c0_38, %c0_39] : memref<128x256xbf16, #tpu.memory_space<vmem>>, vector<128x256xbf16>
    %cst_40 = arith.constant dense<0.000000e+00> : vector<8x256xf32>
    %115 = tpu.matmul %113, %114, %cst_40 {dimension_numbers = #tpu.dot_dimension_numbers<[1], [0], [0], [1], [0, 0, 1, 1], [], []>} : vector<8x128xbf16>, vector<128x256xbf16>, vector<8x256xf32> -> vector<8x256xf32>
    %c0_41 = arith.constant 0 : index
    %c0_42 = arith.constant 0 : index
    %116 = vector.load %arg15[%c0_41, %c0_42] : memref<1x256xf32, #tpu.memory_space<vmem>>, vector<1x256xf32>
    %117 = vector.shape_cast %116 : vector<1x256xf32> to vector<256xf32>
    %118 = vector.shape_cast %117 : vector<256xf32> to vector<1x256xf32>
    %119 = vector.broadcast %118 : vector<1x256xf32> to vector<8x256xf32>
    %120 = arith.addf %115, %119 : vector<8x256xf32>
    %cst_43 = arith.constant 0.000000e+00 : f32
    %121 = vector.broadcast %cst_43 : f32 to vector<8x256xf32>
    %122 = arith.maximumf %120, %121 : vector<8x256xf32>
    %123 = arith.truncf %122 : vector<8x256xf32> to vector<8x256xbf16>
    %c0_44 = arith.constant 0 : index
    %c0_45 = arith.constant 0 : index
    %124 = vector.load %arg16[%c0_44, %c0_45] : memref<256x128xbf16, #tpu.memory_space<vmem>>, vector<256x128xbf16>
    %cst_46 = arith.constant dense<0.000000e+00> : vector<8x128xf32>
    %125 = tpu.matmul %123, %124, %cst_46 {dimension_numbers = #tpu.dot_dimension_numbers<[1], [0], [0], [1], [0, 0, 1, 1], [], []>} : vector<8x256xbf16>, vector<256x128xbf16>, vector<8x128xf32> -> vector<8x128xf32>
    %c0_47 = arith.constant 0 : index
    %c0_48 = arith.constant 0 : index
    %126 = vector.load %arg17[%c0_47, %c0_48] : memref<1x128xf32, #tpu.memory_space<vmem>>, vector<1x128xf32>
    %127 = vector.shape_cast %126 : vector<1x128xf32> to vector<128xf32>
    %128 = vector.shape_cast %127 : vector<128xf32> to vector<1x128xf32>
    %129 = vector.broadcast %128 : vector<1x128xf32> to vector<8x128xf32>
    %130 = arith.addf %125, %129 : vector<8x128xf32>
    %131 = arith.addf %130, %84 : vector<8x128xf32>
    %c0_49 = arith.constant 0 : index
    %c0_50 = arith.constant 0 : index
    %c0_51 = arith.constant 0 : index
    %132 = vector.load %arg18[%c0_49, %c0_50, %c0_51] : memref<1x8x128xf32, #tpu.memory_space<vmem>>, vector<1x8x128xf32>
    %133 = vector.shape_cast %132 : vector<1x8x128xf32> to vector<8x128xf32>
    %134 = vector.shape_cast %131 : vector<8x128xf32> to vector<1x8x128xf32>
    tpu.vector_store %arg18[%c0_49, %c0_50, %c0_51], %134 {strides = array<i32>} : memref<1x8x128xf32, #tpu.memory_space<vmem>>, vector<1x8x128xf32>,
    return
  }
  func.func @transform_0(%arg0: i32, %arg1: i32, %arg2: memref<2xi32, #tpu.memory_space<smem>>) -> (i32, i32, i32) {
    %c0_i32 = arith.constant 0 : i32
    %c0_i32_0 = arith.constant 0 : i32
    %c0_i32_1 = arith.constant 0 : i32
    return %arg0, %c0_i32, %c0_i32_0 : i32, i32, i32
  }
  func.func @transform_1(%arg0: i32, %arg1: i32, %arg2: memref<2xi32, #tpu.memory_space<smem>>) -> (i32, i32) {
    %c0_i32 = arith.constant 0 : i32
    %c0_i32_0 = arith.constant 0 : i32
    %c0_i32_1 = arith.constant 0 : i32
    return %c0_i32, %c0_i32_0 : i32, i32
  }
  func.func @transform_2(%arg0: i32, %arg1: i32, %arg2: memref<2xi32, #tpu.memory_space<smem>>) -> (i32, i32) {
    %c0_i32 = arith.constant 0 : i32
    %c0_i32_0 = arith.constant 0 : i32
    %c0_i32_1 = arith.constant 0 : i32
    return %c0_i32, %c0_i32_0 : i32, i32
  }
  func.func @transform_3(%arg0: i32, %arg1: i32, %arg2: memref<2xi32, #tpu.memory_space<smem>>) -> (i32, i32) {
    %c0_i32 = arith.constant 0 : i32
    %c0_i32_0 = arith.constant 0 : i32
    %c0_i32_1 = arith.constant 0 : i32
    return %c0_i32, %c0_i32_0 : i32, i32
  }
  func.func @transform_4(%arg0: i32, %arg1: i32, %arg2: memref<2xi32, #tpu.memory_space<smem>>) -> (i32, i32) {
    %c0_i32 = arith.constant 0 : i32
    %c0_i32_0 = arith.constant 0 : i32
    %c0_i32_1 = arith.constant 0 : i32
    return %c0_i32, %c0_i32_0 : i32, i32
  }
  func.func @transform_5(%arg0: i32, %arg1: i32, %arg2: memref<2xi32, #tpu.memory_space<smem>>) -> (i32, i32) {
    %c0_i32 = arith.constant 0 : i32
    %c0_i32_0 = arith.constant 0 : i32
    %c0_i32_1 = arith.constant 0 : i32
    return %c0_i32, %c0_i32_0 : i32, i32
  }
  func.func @transform_6(%arg0: i32, %arg1: i32, %arg2: memref<2xi32, #tpu.memory_space<smem>>) -> (i32, i32) {
    %c0_i32 = arith.constant 0 : i32
    %c0_i32_0 = arith.constant 0 : i32
    %c0_i32_1 = arith.constant 0 : i32
    return %c0_i32, %c0_i32_0 : i32, i32
  }
  func.func @transform_7(%arg0: i32, %arg1: i32, %arg2: memref<2xi32, #tpu.memory_space<smem>>) -> (i32, i32) {
    %c0_i32 = arith.constant 0 : i32
    %c0_i32_0 = arith.constant 0 : i32
    %c0_i32_1 = arith.constant 0 : i32
    return %c0_i32, %c0_i32_0 : i32, i32
  }
  func.func @transform_8(%arg0: i32, %arg1: i32, %arg2: memref<2xi32, #tpu.memory_space<smem>>) -> (i32, i32) {
    %c0_i32 = arith.constant 0 : i32
    %c0_i32_0 = arith.constant 0 : i32
    %c0_i32_1 = arith.constant 0 : i32
    return %c0_i32, %c0_i32_0 : i32, i32
  }
  func.func @transform_9(%arg0: i32, %arg1: i32, %arg2: memref<2xi32, #tpu.memory_space<smem>>) -> (i32, i32) {
    %c0_i32 = arith.constant 0 : i32
    %c0_i32_0 = arith.constant 0 : i32
    %c0_i32_1 = arith.constant 0 : i32
    return %c0_i32, %c0_i32_0 : i32, i32
  }
  func.func @transform_10(%arg0: i32, %arg1: i32, %arg2: memref<2xi32, #tpu.memory_space<smem>>) -> (i32, i32) {
    %c0_i32 = arith.constant 0 : i32
    %c0_i32_0 = arith.constant 0 : i32
    %c0_i32_1 = arith.constant 0 : i32
    return %c0_i32, %c0_i32_0 : i32, i32
  }
  func.func @transform_11(%arg0: i32, %arg1: i32, %arg2: memref<2xi32, #tpu.memory_space<smem>>) -> (i32, i32) {
    %c0_i32 = arith.constant 0 : i32
    %c0_i32_0 = arith.constant 0 : i32
    %c0_i32_1 = arith.constant 0 : i32
    return %c0_i32, %c0_i32_0 : i32, i32
  }
  func.func @transform_12(%arg0: i32, %arg1: i32, %arg2: memref<2xi32, #tpu.memory_space<smem>>) -> (i32, i32) {
    %c0_i32 = arith.constant 0 : i32
    %c0_i32_0 = arith.constant 0 : i32
    %c0_i32_1 = arith.constant 0 : i32
    return %c0_i32, %c0_i32_0 : i32, i32
  }
  func.func @transform_13(%arg0: i32, %arg1: i32, %arg2: memref<2xi32, #tpu.memory_space<smem>>) -> (i32, i32) {
    %c0_i32 = arith.constant 0 : i32
    %c0_i32_0 = arith.constant 0 : i32
    %c0_i32_1 = arith.constant 0 : i32
    return %c0_i32, %c0_i32_0 : i32, i32
  }
  func.func @transform_14(%arg0: i32, %arg1: i32, %arg2: memref<2xi32, #tpu.memory_space<smem>>) -> (i32, i32) {
    %c0_i32 = arith.constant 0 : i32
    %c0_i32_0 = arith.constant 0 : i32
    %c0_i32_1 = arith.constant 0 : i32
    return %c0_i32, %c0_i32_0 : i32, i32
  }
  func.func @transform_15(%arg0: i32, %arg1: i32, %arg2: memref<2xi32, #tpu.memory_space<smem>>) -> (i32, i32, i32) {
    %c0_i32 = arith.constant 0 : i32
    %c0_i32_0 = arith.constant 0 : i32
    return %arg0, %arg1, %c0_i32 : i32, i32, i32
  }
}

</mosaic_0001>

<llo_original>
// kernel: tpu_custom_call.1
$region0: #{tpu_custom_call.1}
  #allocation0 [shape = 'u32[]', space=smem, size = 0x4, offset = 0x4, fixed_abs, tag = 'smem constant byte address 0x4 - core index']
  #allocation1 [shape = 'u32[72,128]{1,0:T(1,128)}', space=vmem, size = 0x9000, scoped, tag = 'internal scratch']
  #allocation2 [shape = 'bf16[8,256]{1,0:T(8,128)(2,1)}', space=vmem, size = 0x1000, scoped, tag = 'scratch operand']
  #allocation3 [shape = 's32[1]{0}', space=sflag, size = 0x4, scoped, tag = 'scoped memory for tpu_custom_call.1']
  #allocation4 [shape = 'u8[512]{0}', space=smem, size = 0x200, scoped, tag = 'prefetched SMEM operand 0']
  %s0 = inlined_call_operand.hbm [shape: s32[2], index: 0, kind: input, shape index: {}]
  %s1 = inlined_call_operand.hbm [shape: f32[2,8,128], index: 1, kind: input, shape index: {}]
  %s2 = inlined_call_operand.hbm [shape: f32[1,128], index: 2, kind: input, shape index: {}]
  %s3 = inlined_call_operand.hbm [shape: f32[1,128], index: 3, kind: input, shape index: {}]
  %s4 = inlined_call_operand.hbm [shape: bf16[128,128], index: 4, kind: input, shape index: {}]
  %s5 = inlined_call_operand.hbm [shape: f32[1,128], index: 5, kind: input, shape index: {}]
  %s6 = inlined_call_operand.hbm [shape: bf16[128,256], index: 6, kind: input, shape index: {}]
  %s7 = inlined_call_operand.vmem [shape: f32[1,256], index: 7, kind: input, shape index: {}]
  %s8 = inlined_call_operand.hbm [shape: bf16[128,128], index: 8, kind: input, shape index: {}]
  %s9 = inlined_call_operand.vmem [shape: f32[1,128], index: 9, kind: input, shape index: {}]
  %s10 = inlined_call_operand.vmem [shape: f32[1,128], index: 10, kind: input, shape index: {}]
  %s11 = inlined_call_operand.vmem [shape: f32[1,128], index: 11, kind: input, shape index: {}]
  %s12 = inlined_call_operand.hbm [shape: bf16[128,256], index: 12, kind: input, shape index: {}]
  %s13 = inlined_call_operand.vmem [shape: f32[1,256], index: 13, kind: input, shape index: {}]
  %s14 = inlined_call_operand.hbm [shape: bf16[256,128], index: 14, kind: input, shape index: {}]
  %s15 = inlined_call_operand.vmem [shape: f32[1,128], index: 15, kind: input, shape index: {}]
  %s16 = inlined_call_operand.hbm [shape: f32[2,8,128], index: 16, kind: output, shape index: {}]
  %s17 = sld [smem:[#allocation0]]
  $region133: #{tpu_custom_call.1} parent=0
    _
  %s19 = ssub.s32 1, %s17
  %s20 = scalar_select 0, %s19, %s17
  %s22 = sshll.u32 %s0, 4
  %s23 = int_to_ptr.hbm [resolvable:$true] %s22
  %25 = dma.hbm_to_smem %s23, 16, [#allocation4], [#allocation3]
  %27 = dma.done [#allocation3], 16
  %28 = sfence
  $region1: #{tpu_custom_call.1} parent=0
    #allocation5 [shape = 'u8[8192]{0}', space=vmem, size = 0x2000, scoped, tag = 'input window, operand 1']
    #allocation6 [shape = 's32[2]{0}', space=sflag, size = 0x8, scoped, tag = 'scoped memory for tpu_custom_call.1']
    #allocation7 [shape = 's32[2]{0}', space=sflag, size = 0x8, scoped, tag = 'scoped memory for tpu_custom_call.1']
    #allocation8 [shape = 'u8[512]{0}', space=vmem, size = 0x400, scoped, tag = 'input window, operand 2, single buffered']
    #allocation9 [shape = 's32[1]{0}', space=sflag, size = 0x4, scoped, tag = 'scoped memory for tpu_custom_call.1']
    #allocation10 [shape = 'u8[512]{0}', space=vmem, size = 0x400, scoped, tag = 'input window, operand 3, single buffered']
    #allocation11 [shape = 'u8[32768]{0}', space=vmem, size = 0x8000, scoped, tag = 'input window, operand 4, single buffered']
    #allocation12 [shape = 's32[1]{0}', space=sflag, size = 0x4, scoped, tag = 'scoped memory for tpu_custom_call.1']
    #allocation13 [shape = 'u8[512]{0}', space=vmem, size = 0x400, scoped, tag = 'input window, operand 5, single buffered']
    #allocation14 [shape = 'u8[65536]{0}', space=vmem, size = 0x10000, scoped, tag = 'input window, operand 6, single buffered']
    #allocation15 [shape = 's32[1]{0}', space=sflag, size = 0x4, scoped, tag = 'scoped memory for tpu_custom_call.1']
    #allocation16 [shape = 'u8[32768]{0}', space=vmem, size = 0x8000, scoped, tag = 'input window, operand 8, single buffered']
    #allocation17 [shape = 'u8[65536]{0}', space=vmem, size = 0x10000, scoped, tag = 'input window, operand 12, single buffered']
    #allocation18 [shape = 's32[1]{0}', space=sflag, size = 0x4, scoped, tag = 'scoped memory for tpu_custom_call.1']
    #allocation19 [shape = 'u8[65536]{0}', space=vmem, size = 0x10000, scoped, tag = 'input window, operand 14, single buffered']
    #allocation20 [shape = 'u8[8192]{0}', space=vmem, size = 0x2000, scoped, tag = 'output window, operand 0']
    %29 = vsyncpa [#allocation6], 0
    %s30 = scalar_lea.sflag [#allocation6], 1
    %31 = vsyncpa %s30, 0
    %32 = vsyncpa [#allocation9], 0
    %33 = vsyncpa [#allocation12], 0
    %34 = vsyncpa [#allocation15], 0
    %35 = vsyncpa [#allocation18], 0
    %36 = vsyncpa [#allocation7], 0
    %s37 = scalar_lea.sflag [#allocation7], 1
    %38 = vsyncpa %s37, 0
    loop: start=0, step=1, limit=4
    $region2: #{tpu_custom_call.1} parent=1 // loop_pre_header
      _
    $region3: #{tpu_custom_call.1} parent=1 // loop_header
      %s40 = sphi 0, %s44
      %p41 = scmp.ge.s32.totalorder %s40, 4
      %s47 = sphi 0, %s59
      %s48 = sphi 0, %s55
      %s49 = sphi 0, %s47
      %s50 = sphi 0, %s48
      %s51 = sphi 0, %s49
      %s52 = sphi 0, %s50
      %s62 = sphi 0, %s64
      %s65 = sphi 0, %s62
      %s66 = sphi 0, %s65
      %s82 = sphi 0, %s66
      %s86 = sphi 0, %s86
      %s88 = sphi 0, %s86
      %s89 = sphi 0, %s88
      %s103 = sphi 0, %s89
      %s107 = sphi 0, %s107
      %s109 = sphi 0, %s107
      %s110 = sphi 0, %s109
      %s124 = sphi 0, %s110
      %s128 = sphi 0, %s128
      %s130 = sphi 0, %s128
      %s131 = sphi 0, %s130
      %s145 = sphi 0, %s131
      %s149 = sphi 0, %s149
      %s151 = sphi 0, %s149
      %s152 = sphi 0, %s151
      %s166 = sphi 0, %s152
      %s170 = sphi 0, %s170
      %s172 = sphi 0, %s170
      %s173 = sphi 0, %s172
      %s187 = sphi 0, %s173
      %s191 = sphi 0, %s191
      %s193 = sphi 0, %s191
      %s194 = sphi 0, %s193
      %s208 = sphi 0, %s194
      %s212 = sphi 0, %s212
      %s214 = sphi 0, %s212
      %s215 = sphi 0, %s214
      %s229 = sphi 0, %s215
      %s233 = sphi 0, %s233
      %s235 = sphi 0, %s233
      %s236 = sphi 0, %s235
      %s250 = sphi 0, %s236
      %s254 = sphi 0, %s254
      %s256 = sphi 0, %s254
      %s257 = sphi 0, %s256
      %s271 = sphi 0, %s257
      %s275 = sphi 0, %s275
      %s277 = sphi 0, %s275
      %s278 = sphi 0, %s277
      %s292 = sphi 0, %s278
      %s296 = sphi 0, %s296
      %s298 = sphi 0, %s296
      %s299 = sphi 0, %s298
      %s313 = sphi 0, %s299
      %s317 = sphi 0, %s317
      %s319 = sphi 0, %s317
      %s320 = sphi 0, %s319
      %s334 = sphi 0, %s320
      %s338 = sphi 0, %s338
      %s340 = sphi 0, %s338
      %s341 = sphi 0, %s340
      %s355 = sphi 0, %s341
      %s359 = sphi 0, %s359
      %s361 = sphi 0, %s359
      %s362 = sphi 0, %s361
      %s376 = sphi 0, %s362
      %s384 = sphi 0, %s386
      %s387 = sphi 0, %s384
      %s388 = sphi 0, %s387
      %s404 = sphi 0, %s388
    $region4: #{tpu_custom_call.1} parent=1 // loop_header_branch
      %43 = sbr.rel (%p41) target = $region8
    $region5: #{tpu_custom_call.1} parent=1 // loop_body
      %s45 = ssub.s32 %s40, 1
      %s46 = ssub.s32 %s40, 2
      %s53 = sadd.s32 1, %s48
      %p54 = scmp.ge.s32.totalorder %s53, 1
      %s55 = scalar_select %p54, 0, %s53
      %s56 = sadd.s32 1, %s47
      %s57 = scalar_select %p54, %s56, %s47
      %p58 = scmp.ge.s32.totalorder %s57, 2
      %s59 = scalar_select %p58, 0, %s57
      %s60 = ssub.s32 %s47, %s59
      %p61 = scmp.eq.s32.totalorder %s60, 0
      %s63 = sadd.s32 %s62, 1
      %s64 = scalar_select %p61, %s62, %s63
      %p67 = pneg %p61
      %p68 = scmp.eq.s32.totalorder %s40, 1
      %p69 = por %p67, %p68
      %p70 = scmp.ne.s32.totalorder %s62, %s65
      %p71 = scmp.eq.s32.totalorder %s40, 0
      %p72 = por %p70, %p71
      %p73 = scmp.ne.s32.totalorder %s62, %s65
      %p74 = scmp.eq.s32.totalorder %s45, 1
      %p75 = por %p73, %p74
      %p76 = scmp.ne.s32.totalorder %s65, %s66
      %p77 = scmp.eq.s32.totalorder %s45, 0
      %p78 = por %p76, %p77
      %p79 = scmp.ne.s32.totalorder %s65, %s66
      %p80 = scmp.eq.s32.totalorder %s46, 1
      %p81 = por %p79, %p80
      %p83 = scmp.ne.s32.totalorder %s66, %s82
      %p84 = scmp.eq.s32.totalorder %s46, 0
      %p85 = por %p83, %p84
      %s87 = sadd.s32 %s86, 1
      %p90 = scmp.eq.s32.totalorder %s40, 1
      %p91 = scmp.ne.s32.totalorder %s86, %s88
      %p92 = scmp.eq.s32.totalorder %s40, 0
      %p93 = por %p91, %p92
      %p94 = scmp.ne.s32.totalorder %s86, %s88
      %p95 = scmp.eq.s32.totalorder %s45, 1
      %p96 = por %p94, %p95
      %p97 = scmp.ne.s32.totalorder %s88, %s89
      %p98 = scmp.eq.s32.totalorder %s45, 0
      %p99 = por %p97, %p98
      %p100 = scmp.ne.s32.totalorder %s88, %s89
      %p101 = scmp.eq.s32.totalorder %s46, 1
      %p102 = por %p100, %p101
      %p104 = scmp.ne.s32.totalorder %s89, %s103
      %p105 = scmp.eq.s32.totalorder %s46, 0
      %p106 = por %p104, %p105
      %s108 = sadd.s32 %s107, 1
      %p111 = scmp.eq.s32.totalorder %s40, 1
      %p112 = scmp.ne.s32.totalorder %s107, %s109
      %p113 = scmp.eq.s32.totalorder %s40, 0
      %p114 = por %p112, %p113
      %p115 = scmp.ne.s32.totalorder %s107, %s109
      %p116 = scmp.eq.s32.totalorder %s45, 1
      %p117 = por %p115, %p116
      %p118 = scmp.ne.s32.totalorder %s109, %s110
      %p119 = scmp.eq.s32.totalorder %s45, 0
      %p120 = por %p118, %p119
      %p121 = scmp.ne.s32.totalorder %s109, %s110
      %p122 = scmp.eq.s32.totalorder %s46, 1
      %p123 = por %p121, %p122
      %p125 = scmp.ne.s32.totalorder %s110, %s124
      %p126 = scmp.eq.s32.totalorder %s46, 0
      %p127 = por %p125, %p126
      %s129 = sadd.s32 %s128, 1
      %p132 = scmp.eq.s32.totalorder %s40, 1
      %p133 = scmp.ne.s32.totalorder %s128, %s130
      %p134 = scmp.eq.s32.totalorder %s40, 0
      %p135 = por %p133, %p134
      %p136 = scmp.ne.s32.totalorder %s128, %s130
      %p137 = scmp.eq.s32.totalorder %s45, 1
      %p138 = por %p136, %p137
      %p139 = scmp.ne.s32.totalorder %s130, %s131
      %p140 = scmp.eq.s32.totalorder %s45, 0
      %p141 = por %p139, %p140
      %p142 = scmp.ne.s32.totalorder %s130, %s131
      %p143 = scmp.eq.s32.totalorder %s46, 1
      %p144 = por %p142, %p143
      %p146 = scmp.ne.s32.totalorder %s131, %s145
      %p147 = scmp.eq.s32.totalorder %s46, 0
      %p148 = por %p146, %p147
      %s150 = sadd.s32 %s149, 1
      %p153 = scmp.eq.s32.totalorder %s40, 1
      %p154 = scmp.ne.s32.totalorder %s149, %s151
      %p155 = scmp.eq.s32.totalorder %s40, 0
      %p156 = por %p154, %p155
      %p157 = scmp.ne.s32.totalorder %s149, %s151
      %p158 = scmp.eq.s32.totalorder %s45, 1
      %p159 = por %p157, %p158
      %p160 = scmp.ne.s32.totalorder %s151, %s152
      %p161 = scmp.eq.s32.totalorder %s45, 0
      %p162 = por %p160, %p161
      %p163 = scmp.ne.s32.totalorder %s151, %s152
      %p164 = scmp.eq.s32.totalorder %s46, 1
      %p165 = por %p163, %p164
      %p167 = scmp.ne.s32.totalorder %s152, %s166
      %p168 = scmp.eq.s32.totalorder %s46, 0
      %p169 = por %p167, %p168
      %s171 = sadd.s32 %s170, 1
      %p174 = scmp.eq.s32.totalorder %s40, 1
      %p175 = scmp.ne.s32.totalorder %s170, %s172
      %p176 = scmp.eq.s32.totalorder %s40, 0
      %p177 = por %p175, %p176
      %p178 = scmp.ne.s32.totalorder %s170, %s172
      %p179 = scmp.eq.s32.totalorder %s45, 1
      %p180 = por %p178, %p179
      %p181 = scmp.ne.s32.totalorder %s172, %s173
      %p182 = scmp.eq.s32.totalorder %s45, 0
      %p183 = por %p181, %p182
      %p184 = scmp.ne.s32.totalorder %s172, %s173
      %p185 = scmp.eq.s32.totalorder %s46, 1
      %p186 = por %p184, %p185
      %p188 = scmp.ne.s32.totalorder %s173, %s187
      %p189 = scmp.eq.s32.totalorder %s46, 0
      %p190 = por %p188, %p189
      %s192 = sadd.s32 %s191, 1
      %p195 = scmp.eq.s32.totalorder %s40, 1
      %p196 = scmp.ne.s32.totalorder %s191, %s193
      %p197 = scmp.eq.s32.totalorder %s40, 0
      %p198 = por %p196, %p197
      %p199 = scmp.ne.s32.totalorder %s191, %s193
      %p200 = scmp.eq.s32.totalorder %s45, 1
      %p201 = por %p199, %p200
      %p202 = scmp.ne.s32.totalorder %s193, %s194
      %p203 = scmp.eq.s32.totalorder %s45, 0
      %p204 = por %p202, %p203
      %p205 = scmp.ne.s32.totalorder %s193, %s194
      %p206 = scmp.eq.s32.totalorder %s46, 1
      %p207 = por %p205, %p206
      %p209 = scmp.ne.s32.totalorder %s194, %s208
      %p210 = scmp.eq.s32.totalorder %s46, 0
      %p211 = por %p209, %p210
      %s213 = sadd.s32 %s212, 1
      %p216 = scmp.eq.s32.totalorder %s40, 1
      %p217 = scmp.ne.s32.totalorder %s212, %s214
      %p218 = scmp.eq.s32.totalorder %s40, 0
      %p219 = por %p217, %p218
      %p220 = scmp.ne.s32.totalorder %s212, %s214
      %p221 = scmp.eq.s32.totalorder %s45, 1
      %p222 = por %p220, %p221
      %p223 = scmp.ne.s32.totalorder %s214, %s215
      %p224 = scmp.eq.s32.totalorder %s45, 0
      %p225 = por %p223, %p224
      %p226 = scmp.ne.s32.totalorder %s214, %s215
      %p227 = scmp.eq.s32.totalorder %s46, 1
      %p228 = por %p226, %p227
      %p230 = scmp.ne.s32.totalorder %s215, %s229
      %p231 = scmp.eq.s32.totalorder %s46, 0
      %p232 = por %p230, %p231
      %s234 = sadd.s32 %s233, 1
      %p237 = scmp.eq.s32.totalorder %s40, 1
      %p238 = scmp.ne.s32.totalorder %s233, %s235
      %p239 = scmp.eq.s32.totalorder %s40, 0
      %p240 = por %p238, %p239
      %p241 = scmp.ne.s32.totalorder %s233, %s235
      %p242 = scmp.eq.s32.totalorder %s45, 1
      %p243 = por %p241, %p242
      %p244 = scmp.ne.s32.totalorder %s235, %s236
      %p245 = scmp.eq.s32.totalorder %s45, 0
      %p246 = por %p244, %p245
      %p247 = scmp.ne.s32.totalorder %s235, %s236
      %p248 = scmp.eq.s32.totalorder %s46, 1
      %p249 = por %p247, %p248
      %p251 = scmp.ne.s32.totalorder %s236, %s250
      %p252 = scmp.eq.s32.totalorder %s46, 0
      %p253 = por %p251, %p252
      %s255 = sadd.s32 %s254, 1
      %p258 = scmp.eq.s32.totalorder %s40, 1
      %p259 = scmp.ne.s32.totalorder %s254, %s256
      %p260 = scmp.eq.s32.totalorder %s40, 0
      %p261 = por %p259, %p260
      %p262 = scmp.ne.s32.totalorder %s254, %s256
      %p263 = scmp.eq.s32.totalorder %s45, 1
      %p264 = por %p262, %p263
      %p265 = scmp.ne.s32.totalorder %s256, %s257
      %p266 = scmp.eq.s32.totalorder %s45, 0
      %p267 = por %p265, %p266
      %p268 = scmp.ne.s32.totalorder %s256, %s257
      %p269 = scmp.eq.s32.totalorder %s46, 1
      %p270 = por %p268, %p269
      %p272 = scmp.ne.s32.totalorder %s257, %s271
      %p273 = scmp.eq.s32.totalorder %s46, 0
      %p274 = por %p272, %p273
      %s276 = sadd.s32 %s275, 1
      %p279 = scmp.eq.s32.totalorder %s40, 1
      %p280 = scmp.ne.s32.totalorder %s275, %s277
      %p281 = scmp.eq.s32.totalorder %s40, 0
      %p282 = por %p280, %p281
      %p283 = scmp.ne.s32.totalorder %s275, %s277
      %p284 = scmp.eq.s32.totalorder %s45, 1
      %p285 = por %p283, %p284
      %p286 = scmp.ne.s32.totalorder %s277, %s278
      %p287 = scmp.eq.s32.totalorder %s45, 0
      %p288 = por %p286, %p287
      %p289 = scmp.ne.s32.totalorder %s277, %s278
      %p290 = scmp.eq.s32.totalorder %s46, 1
      %p291 = por %p289, %p290
      %p293 = scmp.ne.s32.totalorder %s278, %s292
      %p294 = scmp.eq.s32.totalorder %s46, 0
      %p295 = por %p293, %p294
      %s297 = sadd.s32 %s296, 1
      %p300 = scmp.eq.s32.totalorder %s40, 1
      %p301 = scmp.ne.s32.totalorder %s296, %s298
      %p302 = scmp.eq.s32.totalorder %s40, 0
      %p303 = por %p301, %p302
      %p304 = scmp.ne.s32.totalorder %s296, %s298
      %p305 = scmp.eq.s32.totalorder %s45, 1
      %p306 = por %p304, %p305
      %p307 = scmp.ne.s32.totalorder %s298, %s299
      %p308 = scmp.eq.s32.totalorder %s45, 0
      %p309 = por %p307, %p308
      %p310 = scmp.ne.s32.totalorder %s298, %s299
      %p311 = scmp.eq.s32.totalorder %s46, 1
      %p312 = por %p310, %p311
      %p314 = scmp.ne.s32.totalorder %s299, %s313
      %p315 = scmp.eq.s32.totalorder %s46, 0
      %p316 = por %p314, %p315
      %s318 = sadd.s32 %s317, 1
      %p321 = scmp.eq.s32.totalorder %s40, 1
      %p322 = scmp.ne.s32.totalorder %s317, %s319
      %p323 = scmp.eq.s32.totalorder %s40, 0
      %p324 = por %p322, %p323
      %p325 = scmp.ne.s32.totalorder %s317, %s319
      %p326 = scmp.eq.s32.totalorder %s45, 1
      %p327 = por %p325, %p326
      %p328 = scmp.ne.s32.totalorder %s319, %s320
      %p329 = scmp.eq.s32.totalorder %s45, 0
      %p330 = por %p328, %p329
      %p331 = scmp.ne.s32.totalorder %s319, %s320
      %p332 = scmp.eq.s32.totalorder %s46, 1
      %p333 = por %p331, %p332
      %p335 = scmp.ne.s32.totalorder %s320, %s334
      %p336 = scmp.eq.s32.totalorder %s46, 0
      %p337 = por %p335, %p336
      %s339 = sadd.s32 %s338, 1
      %p342 = scmp.eq.s32.totalorder %s40, 1
      %p343 = scmp.ne.s32.totalorder %s338, %s340
      %p344 = scmp.eq.s32.totalorder %s40, 0
      %p345 = por %p343, %p344
      %p346 = scmp.ne.s32.totalorder %s338, %s340
      %p347 = scmp.eq.s32.totalorder %s45, 1
      %p348 = por %p346, %p347
      %p349 = scmp.ne.s32.totalorder %s340, %s341
      %p350 = scmp.eq.s32.totalorder %s45, 0
      %p351 = por %p349, %p350
      %p352 = scmp.ne.s32.totalorder %s340, %s341
      %p353 = scmp.eq.s32.totalorder %s46, 1
      %p354 = por %p352, %p353
      %p356 = scmp.ne.s32.totalorder %s341, %s355
      %p357 = scmp.eq.s32.totalorder %s46, 0
      %p358 = por %p356, %p357
      %s360 = sadd.s32 %s359, 1
      %p363 = scmp.eq.s32.totalorder %s40, 1
      %p364 = scmp.ne.s32.totalorder %s359, %s361
      %p365 = scmp.eq.s32.totalorder %s40, 0
      %p366 = por %p364, %p365
      %p367 = scmp.ne.s32.totalorder %s359, %s361
      %p368 = scmp.eq.s32.totalorder %s45, 1
      %p369 = por %p367, %p368
      %p370 = scmp.ne.s32.totalorder %s361, %s362
      %p371 = scmp.eq.s32.totalorder %s45, 0
      %p372 = por %p370, %p371
      %p373 = scmp.ne.s32.totalorder %s361, %s362
      %p374 = scmp.eq.s32.totalorder %s46, 1
      %p375 = por %p373, %p374
      %p377 = scmp.ne.s32.totalorder %s362, %s376
      %p378 = scmp.eq.s32.totalorder %s46, 0
      %p379 = por %p377, %p378
      %s380 = ssub.s32 %s47, %s59
      %s381 = ssub.s32 %s48, %s55
      %s382 = sor.u32 %s380, %s381
      %p383 = scmp.eq.s32.totalorder %s382, 0
      %s385 = sadd.s32 %s384, 1
      %s386 = scalar_select %p383, %s384, %s385
      %p389 = pneg %p383
      %p390 = scmp.eq.s32.totalorder %s40, 1
      %p391 = por %p389, %p390
      %p392 = scmp.ne.s32.totalorder %s384, %s387
      %p393 = scmp.eq.s32.totalorder %s40, 0
      %p394 = por %p392, %p393
      %p395 = scmp.ne.s32.totalorder %s384, %s387
      %p396 = scmp.eq.s32.totalorder %s45, 1
      %p397 = por %p395, %p396
      %p398 = scmp.ne.s32.totalorder %s387, %s388
      %p399 = scmp.eq.s32.totalorder %s45, 0
      %p400 = por %p398, %p399
      %p401 = scmp.ne.s32.totalorder %s387, %s388
      %p402 = scmp.eq.s32.totalorder %s46, 1
      %p403 = por %p401, %p402
      %p405 = scmp.ne.s32.totalorder %s388, %s404
      %p406 = scmp.eq.s32.totalorder %s46, 0
      %p407 = por %p405, %p406
      %p408 = scmp.le.s32.totalorder 1, %s40
      %p409 = scmp.lt.s32.totalorder %s40, 3
      %p410 = pnand %p408, %p409
      %p411 = pneg %p410
      // Predicated region
      $region9: #{tpu_custom_call.1} parent=5 // pred_check
        _
      $region10: #{tpu_custom_call.1} parent=5 // pred_check_branch
        %413 = sbr.rel (%p410) target = $region12
      $region11: #{tpu_custom_call.1} parent=5 // pred_region
        %s414 = ssub.s32 %s40, 1
        // Predicated region
        $region13: #{tpu_custom_call.1} parent=11 // pred_check
          %p415 = pneg %p99
        $region14: #{tpu_custom_call.1} parent=11 // pred_check_branch
          %417 = sbr.rel (%p415) target = $region16
        $region15: #{tpu_custom_call.1} parent=11 // pred_region
          %419 = vsyncadd [#allocation9], 0
          %s421 = sshll.u32 %s2, 4
          %s422 = int_to_ptr.hbm [resolvable:$true] %s421
          %s423 = sshll.u32 [#allocation8], 4
          %s424 = int_to_ptr.vmem [resolvable:$true] %s423
          %426 = dma.hbm_to_vmem [thread:$0]  %s422, 16, %s424, [#allocation9]
        $region16: #{tpu_custom_call.1} parent=11 // pred_fallthru
          _
        // Predicated region
        $region17: #{tpu_custom_call.1} parent=11 // pred_check
          %p427 = pneg %p120
        $region18: #{tpu_custom_call.1} parent=11 // pred_check_branch
          %429 = sbr.rel (%p427) target = $region20
        $region19: #{tpu_custom_call.1} parent=11 // pred_region
          %431 = vsyncadd [#allocation9], 0
          %s433 = sshll.u32 %s3, 4
          %s434 = int_to_ptr.hbm [resolvable:$true] %s433
          %s435 = sshll.u32 [#allocation10], 4
          %s436 = int_to_ptr.vmem [resolvable:$true] %s435
          %438 = dma.hbm_to_vmem [thread:$0]  %s434, 16, %s436, [#allocation9]
        $region20: #{tpu_custom_call.1} parent=11 // pred_fallthru
          _
        // Predicated region
        $region21: #{tpu_custom_call.1} parent=11 // pred_check
          %p439 = pneg %p141
        $region22: #{tpu_custom_call.1} parent=11 // pred_check_branch
          %441 = sbr.rel (%p439) target = $region24
        $region23: #{tpu_custom_call.1} parent=11 // pred_region
          %443 = vsyncadd [#allocation12], 0
          %s444 = sshll.u32 %s4, 4
          %s445 = int_to_ptr.hbm [resolvable:$true] %s444
          %s446 = sshll.u32 [#allocation11], 4
          %s447 = int_to_ptr.vmem [resolvable:$true] %s446
          %452 = dma.hbm_to_vmem [thread:$0]  %s445, 1024, %s447, [#allocation12], 64, 64, 4
        $region24: #{tpu_custom_call.1} parent=11 // pred_fallthru
          _
        // Predicated region
        $region25: #{tpu_custom_call.1} parent=11 // pred_check
          %p453 = pneg %p162
        $region26: #{tpu_custom_call.1} parent=11 // pred_check_branch
          %455 = sbr.rel (%p453) target = $region28
        $region27: #{tpu_custom_call.1} parent=11 // pred_region
          %457 = vsyncadd [#allocation12], 0
          %s459 = sshll.u32 %s5, 4
          %s460 = int_to_ptr.hbm [resolvable:$true] %s459
          %s461 = sshll.u32 [#allocation13], 4
          %s462 = int_to_ptr.vmem [resolvable:$true] %s461
          %464 = dma.hbm_to_vmem [thread:$0]  %s460, 16, %s462, [#allocation12]
        $region28: #{tpu_custom_call.1} parent=11 // pred_fallthru
          _
        // Predicated region
        $region29: #{tpu_custom_call.1} parent=11 // pred_check
          %p465 = pneg %p183
        $region30: #{tpu_custom_call.1} parent=11 // pred_check_branch
          %467 = sbr.rel (%p465) target = $region32
        $region31: #{tpu_custom_call.1} parent=11 // pred_region
          %469 = vsyncadd [#allocation15], 0
          %s470 = sshll.u32 %s6, 4
          %s471 = int_to_ptr.hbm [resolvable:$true] %s470
          %s472 = sshll.u32 [#allocation14], 4
          %s473 = int_to_ptr.vmem [resolvable:$true] %s472
          %478 = dma.hbm_to_vmem [thread:$0]  %s471, 2048, %s473, [#allocation15], 128, 128, 8
        $region32: #{tpu_custom_call.1} parent=11 // pred_fallthru
          _
        // Predicated region
        $region33: #{tpu_custom_call.1} parent=11 // pred_check
          %p479 = pneg %p204
        $region34: #{tpu_custom_call.1} parent=11 // pred_check_branch
          %481 = sbr.rel (%p479) target = $region36
        $region35: #{tpu_custom_call.1} parent=11 // pred_region
          _
        $region36: #{tpu_custom_call.1} parent=11 // pred_fallthru
          _
        // Predicated region
        $region37: #{tpu_custom_call.1} parent=11 // pred_check
          %p482 = pneg %p225
        $region38: #{tpu_custom_call.1} parent=11 // pred_check_branch
          %484 = sbr.rel (%p482) target = $region40
        $region39: #{tpu_custom_call.1} parent=11 // pred_region
          %486 = vsyncadd [#allocation15], 0
          %s487 = sshll.u32 %s8, 4
          %s488 = int_to_ptr.hbm [resolvable:$true] %s487
          %s489 = sshll.u32 [#allocation16], 4
          %s490 = int_to_ptr.vmem [resolvable:$true] %s489
          %495 = dma.hbm_to_vmem [thread:$0]  %s488, 1024, %s490, [#allocation15], 64, 64, 4
        $region40: #{tpu_custom_call.1} parent=11 // pred_fallthru
          _
        // Predicated region
        $region41: #{tpu_custom_call.1} parent=11 // pred_check
          %p496 = pneg %p246
        $region42: #{tpu_custom_call.1} parent=11 // pred_check_branch
          %498 = sbr.rel (%p496) target = $region44
        $region43: #{tpu_custom_call.1} parent=11 // pred_region
          _
        $region44: #{tpu_custom_call.1} parent=11 // pred_fallthru
          _
        // Predicated region
        $region45: #{tpu_custom_call.1} parent=11 // pred_check
          %p499 = pneg %p267
        $region46: #{tpu_custom_call.1} parent=11 // pred_check_branch
          %501 = sbr.rel (%p499) target = $region48
        $region47: #{tpu_custom_call.1} parent=11 // pred_region
          _
        $region48: #{tpu_custom_call.1} parent=11 // pred_fallthru
          _
        // Predicated region
        $region49: #{tpu_custom_call.1} parent=11 // pred_check
          %p502 = pneg %p288
        $region50: #{tpu_custom_call.1} parent=11 // pred_check_branch
          %504 = sbr.rel (%p502) target = $region52
        $region51: #{tpu_custom_call.1} parent=11 // pred_region
          _
        $region52: #{tpu_custom_call.1} parent=11 // pred_fallthru
          _
        // Predicated region
        $region53: #{tpu_custom_call.1} parent=11 // pred_check
          %p505 = pneg %p309
        $region54: #{tpu_custom_call.1} parent=11 // pred_check_branch
          %507 = sbr.rel (%p505) target = $region56
        $region55: #{tpu_custom_call.1} parent=11 // pred_region
          %509 = vsyncadd [#allocation18], 0
          %s510 = sshll.u32 %s12, 4
          %s511 = int_to_ptr.hbm [resolvable:$true] %s510
          %s512 = sshll.u32 [#allocation17], 4
          %s513 = int_to_ptr.vmem [resolvable:$true] %s512
          %518 = dma.hbm_to_vmem [thread:$0]  %s511, 2048, %s513, [#allocation18], 128, 128, 8
        $region56: #{tpu_custom_call.1} parent=11 // pred_fallthru
          _
        // Predicated region
        $region57: #{tpu_custom_call.1} parent=11 // pred_check
          %p519 = pneg %p330
        $region58: #{tpu_custom_call.1} parent=11 // pred_check_branch
          %521 = sbr.rel (%p519) target = $region60
        $region59: #{tpu_custom_call.1} parent=11 // pred_region
          _
        $region60: #{tpu_custom_call.1} parent=11 // pred_fallthru
          _
        // Predicated region
        $region61: #{tpu_custom_call.1} parent=11 // pred_check
          %p522 = pneg %p351
        $region62: #{tpu_custom_call.1} parent=11 // pred_check_branch
          %524 = sbr.rel (%p522) target = $region64
        $region63: #{tpu_custom_call.1} parent=11 // pred_region
          %526 = vsyncadd [#allocation18], 0
          %s527 = sshll.u32 %s14, 4
          %s528 = int_to_ptr.hbm [resolvable:$true] %s527
          %s529 = sshll.u32 [#allocation19], 4
          %s530 = int_to_ptr.vmem [resolvable:$true] %s529
          %535 = dma.hbm_to_vmem [thread:$0]  %s528, 2048, %s530, [#allocation18], 64, 64, 4
        $region64: #{tpu_custom_call.1} parent=11 // pred_fallthru
          _
        // Predicated region
        $region65: #{tpu_custom_call.1} parent=11 // pred_check
          %p536 = pneg %p372
        $region66: #{tpu_custom_call.1} parent=11 // pred_check_branch
          %538 = sbr.rel (%p536) target = $region68
        $region67: #{tpu_custom_call.1} parent=11 // pred_region
          _
        $region68: #{tpu_custom_call.1} parent=11 // pred_fallthru
          _
      $region12: #{tpu_custom_call.1} parent=5 // pred_fallthru
        _
      %p539 = scmp.lt.s32.totalorder %s40, 2
      // Predicated region
      $region69: #{tpu_custom_call.1} parent=5 // pred_check
        %p540 = pneg %p539
      $region70: #{tpu_custom_call.1} parent=5 // pred_check_branch
        %542 = sbr.rel (%p540) target = $region72
      $region71: #{tpu_custom_call.1} parent=5 // pred_region
        // Predicated region
        $region73: #{tpu_custom_call.1} parent=71 // pred_check
          %p543 = pneg %p72
        $region74: #{tpu_custom_call.1} parent=71 // pred_check_branch
          %545 = sbr.rel (%p543) target = $region76
        $region75: #{tpu_custom_call.1} parent=71 // pred_region
          %s546 = sand.u32 %s62, 1
          %s547 = scalar_lea.sflag [#allocation6], %s546
          %s548 = sand.u32 %s62, 1
          %s549 = smul.addr %s548, 8
          %s550 = scalar_lea.vmem [#allocation5], %s549
          %552 = vsyncadd %s547, 0
          %s553 = smul.addr %s47, 8
          %s554 = scalar_lea.hbm %s1, %s553
          %s556 = sshll.u32 %s554, 4
          %s557 = int_to_ptr.hbm [resolvable:$true] %s556
          %s558 = sshll.u32 %s550, 4
          %s559 = int_to_ptr.vmem [resolvable:$true] %s558
          %561 = dma.hbm_to_vmem [thread:$0]  %s557, 128, %s559, %s547
        $region76: #{tpu_custom_call.1} parent=71 // pred_fallthru
          _
      $region72: #{tpu_custom_call.1} parent=5 // pred_fallthru
        _
      %p562 = scmp.le.s32.totalorder 1, %s40
      %p563 = scmp.lt.s32.totalorder %s40, 3
      %p564 = pnand %p562, %p563
      %p565 = pneg %p564
      // Predicated region
      $region77: #{tpu_custom_call.1} parent=5 // pred_check
        _
      $region78: #{tpu_custom_call.1} parent=5 // pred_check_branch
        %567 = sbr.rel (%p564) target = $region80
      $region79: #{tpu_custom_call.1} parent=5 // pred_region
        %s568 = ssub.s32 %s40, 1
        %s569 = sand.u32 %s65, 1
        %s570 = scalar_lea.sflag [#allocation6], %s569
        %s571 = sand.u32 %s65, 1
        %s572 = smul.addr %s571, 8
        %s573 = scalar_lea.vmem [#allocation5], %s572
        // Predicated region
        $region81: #{tpu_custom_call.1} parent=79 // pred_check
          %p574 = pneg %p78
        $region82: #{tpu_custom_call.1} parent=79 // pred_check_branch
          %576 = sbr.rel (%p574) target = $region84
        $region83: #{tpu_custom_call.1} parent=79 // pred_region
          %578 = dma.done %s570, 128
        $region84: #{tpu_custom_call.1} parent=79 // pred_fallthru
          _
        // Predicated region
        $region85: #{tpu_custom_call.1} parent=79 // pred_check
          %p579 = pneg %p99
        $region86: #{tpu_custom_call.1} parent=79 // pred_check_branch
          %581 = sbr.rel (%p579) target = $region88
        $region87: #{tpu_custom_call.1} parent=79 // pred_region
          %583 = dma.done [#allocation9], 16
        $region88: #{tpu_custom_call.1} parent=79 // pred_fallthru
          _
        // Predicated region
        $region89: #{tpu_custom_call.1} parent=79 // pred_check
          %p584 = pneg %p120
        $region90: #{tpu_custom_call.1} parent=79 // pred_check_branch
          %586 = sbr.rel (%p584) target = $region92
        $region91: #{tpu_custom_call.1} parent=79 // pred_region
          %588 = dma.done [#allocation9], 16
        $region92: #{tpu_custom_call.1} parent=79 // pred_fallthru
          _
        // Predicated region
        $region93: #{tpu_custom_call.1} parent=79 // pred_check
          %p589 = pneg %p141
        $region94: #{tpu_custom_call.1} parent=79 // pred_check_branch
          %591 = sbr.rel (%p589) target = $region96
        $region95: #{tpu_custom_call.1} parent=79 // pred_region
          %593 = dma.done [#allocation12], 1024
        $region96: #{tpu_custom_call.1} parent=79 // pred_fallthru
          _
        // Predicated region
        $region97: #{tpu_custom_call.1} parent=79 // pred_check
          %p594 = pneg %p162
        $region98: #{tpu_custom_call.1} parent=79 // pred_check_branch
          %596 = sbr.rel (%p594) target = $region100
        $region99: #{tpu_custom_call.1} parent=79 // pred_region
          %598 = dma.done [#allocation12], 16
        $region100: #{tpu_custom_call.1} parent=79 // pred_fallthru
          _
        // Predicated region
        $region101: #{tpu_custom_call.1} parent=79 // pred_check
          %p599 = pneg %p183
        $region102: #{tpu_custom_call.1} parent=79 // pred_check_branch
          %601 = sbr.rel (%p599) target = $region104
        $region103: #{tpu_custom_call.1} parent=79 // pred_region
          %603 = dma.done [#allocation15], 2048
        $region104: #{tpu_custom_call.1} parent=79 // pred_fallthru
          _
        // Predicated region
        $region105: #{tpu_custom_call.1} parent=79 // pred_check
          %p604 = pneg %p225
        $region106: #{tpu_custom_call.1} parent=79 // pred_check_branch
          %606 = sbr.rel (%p604) target = $region108
        $region107: #{tpu_custom_call.1} parent=79 // pred_region
          %608 = dma.done [#allocation15], 1024
        $region108: #{tpu_custom_call.1} parent=79 // pred_fallthru
          _
        // Predicated region
        $region109: #{tpu_custom_call.1} parent=79 // pred_check
          %p609 = pneg %p309
        $region110: #{tpu_custom_call.1} parent=79 // pred_check_branch
          %611 = sbr.rel (%p609) target = $region112
        $region111: #{tpu_custom_call.1} parent=79 // pred_region
          %613 = dma.done [#allocation18], 2048
        $region112: #{tpu_custom_call.1} parent=79 // pred_fallthru
          _
        // Predicated region
        $region113: #{tpu_custom_call.1} parent=79 // pred_check
          %p614 = pneg %p351
        $region114: #{tpu_custom_call.1} parent=79 // pred_check_branch
          %616 = sbr.rel (%p614) target = $region116
        $region115: #{tpu_custom_call.1} parent=79 // pred_region
          %618 = dma.done [#allocation18], 2048
        $region116: #{tpu_custom_call.1} parent=79 // pred_fallthru
          _
        %s619 = sand.u32 %s65, 1
        %s620 = scalar_lea.sflag [#allocation6], %s619
        %s621 = sand.u32 %s65, 1
        %s622 = smul.addr %s621, 8
        %s623 = scalar_lea.vmem [#allocation5], %s622
        %p624 = pneg %p78
        %p625 = pneg %p75
        %p626 = pneg %p99
        %p627 = pneg %p96
        %p628 = pneg %p120
        %p629 = pneg %p117
        %p630 = pneg %p141
        %p631 = pneg %p138
        %p632 = pneg %p162
        %p633 = pneg %p159
        %p634 = pneg %p183
        %p635 = pneg %p180
        %p636 = pneg %p204
        %p637 = pneg %p201
        %p638 = pneg %p225
        %p639 = pneg %p222
        %p640 = pneg %p246
        %p641 = pneg %p243
        %p642 = pneg %p267
        %p643 = pneg %p264
        %p644 = pneg %p288
        %p645 = pneg %p285
        %p646 = pneg %p309
        %p647 = pneg %p306
        %p648 = pneg %p330
        %p649 = pneg %p327
        %p650 = pneg %p351
        %p651 = pneg %p348
        %p652 = pneg %p372
        %p653 = pneg %p369
        %p654 = pneg %p400
        %p655 = pneg %p397
        %s656 = sand.u32 %s387, 1
        %s657 = scalar_lea.sflag [#allocation7], %s656
        %s658 = sand.u32 %s387, 1
        %s659 = smul.addr %s658, 8
        %s660 = scalar_lea.vmem [#allocation20], %s659
        %v662 = vld [vmem:[#allocation8] sm:$0x1]
        %v663 = vld [vmem:[#allocation10] sm:$0x1]
        %p664 = scmp.eq.s32.totalorder %s50, 0
        // Predicated region
        $region117: #{tpu_custom_call.1} parent=79 // pred_check
          %p665 = pneg %p664
        $region118: #{tpu_custom_call.1} parent=79 // pred_check_branch
          %667 = sbr.rel (%p665) target = $region120
        $region119: #{tpu_custom_call.1} parent=79 // pred_region
          %v668 = vld [vmem:[%s573] sm:$0xff]
          %669 = vadd.xlane.f32.xlu0 %v668
          %v670 = vpop.xlane.xlu0 %669
          %v671 = vrcp.pop 128.0
          %v672 = vmul.f32 128.0, %v671
          %v673 = vsub.f32 1.0, %v672
          %v674 = vmul.f32 %v671, %v673
          %v675 = vadd.f32 %v671, %v674
          %vm676 = vweird.f32 %v671
          %v677 = vsel %vm676, %v671, %v675
          %v678 = vmul.f32 %v670, %v677
          %v679 = vsub.f32 %v668, %v678
          %v680 = vmul.f32 %v679, %v679
          %681 = vadd.xlane.f32.xlu0 %v680
          %v682 = vpop.xlane.xlu0 %681
          %v683 = vmul.f32 %v682, %v677
          %v684 = vadd.f32 %v683, 1e-06
          %v685 = vrsqrt.pop %v684
          %v686 = vmul.f32 %v685, %v684
          %v687 = vmul.f32 %v686, %v685
          %v688 = vmul.f32 0.5, %v687
          %v689 = vsub.f32 1.5, %v688
          %v690 = vmul.f32 %v685, %v689
          %vm691 = vweird.f32 %v684
          %vm692 = vweird.f32 %v685
          %vm693 = vmor %vm691, %vm692
          %v694 = vsel %vm693, %v685, %v690
          %v695 = vmul.f32 %v679, %v694
          %v697 = vperm.slane %v662, 0
          %v699 = vmul.f32 %v695, %v697
          %v701 = vperm.slane %v663, 0
          %v703 = vadd.f32 %v699, %v701
          %v704 = vpack.c.bf16 %v703, %v703
          %v705 = vld [vmem:[#allocation14] sm:$0xff]
          %v706 = vld [vmem:[#allocation14 + $0x8] sm:$0xff]
          %v707 = vld [vmem:[#allocation14 + $0x10] sm:$0xff]
          %v708 = vld [vmem:[#allocation14 + $0x18] sm:$0xff]
          %v709 = vld [vmem:[#allocation14 + $0x20] sm:$0xff]
          %v710 = vld [vmem:[#allocation14 + $0x28] sm:$0xff]
          %v711 = vld [vmem:[#allocation14 + $0x30] sm:$0xff]
          %v712 = vld [vmem:[#allocation14 + $0x38] sm:$0xff]
          %v713 = vld [vmem:[#allocation14 + $0x40] sm:$0xff]
          %v714 = vld [vmem:[#allocation14 + $0x48] sm:$0xff]
          %v715 = vld [vmem:[#allocation14 + $0x50] sm:$0xff]
          %v716 = vld [vmem:[#allocation14 + $0x58] sm:$0xff]
          %v717 = vld [vmem:[#allocation14 + $0x60] sm:$0xff]
          %v718 = vld [vmem:[#allocation14 + $0x68] sm:$0xff]
          %v719 = vld [vmem:[#allocation14 + $0x70] sm:$0xff]
          %v720 = vld [vmem:[#allocation14 + $0x78] sm:$0xff]
          %v721 = vld [vmem:[%s7] sm:$0x3]
          %v723 = vperm.slane %v721, 0
          %v724 = vperm.slane %v721, 1
          %v743 = vunpack.c.l.b16 %v705
          %v744 = vunpack.c.h.b16 %v705
          %v745 = vunpack.c.l.b16 %v706
          %v746 = vunpack.c.h.b16 %v706
          %v747 = vunpack.c.l.b16 %v707
          %v748 = vunpack.c.h.b16 %v707
          %v749 = vunpack.c.l.b16 %v708
          %v750 = vunpack.c.h.b16 %v708
          %v751 = vunpack.c.l.b16 %v709
          %v752 = vunpack.c.h.b16 %v709
          %v753 = vunpack.c.l.b16 %v710
          %v754 = vunpack.c.h.b16 %v710
          %v755 = vunpack.c.l.b16 %v711
          %v756 = vunpack.c.h.b16 %v711
          %v757 = vunpack.c.l.b16 %v712
          %v758 = vunpack.c.h.b16 %v712
          %v759 = vunpack.c.l.b16 %v713
          %v760 = vunpack.c.h.b16 %v713
          %v761 = vunpack.c.l.b16 %v714
          %v762 = vunpack.c.h.b16 %v714
          %v763 = vunpack.c.l.b16 %v715
          %v764 = vunpack.c.h.b16 %v715
          %v765 = vunpack.c.l.b16 %v716
          %v766 = vunpack.c.h.b16 %v716
          %v767 = vunpack.c.l.b16 %v717
          %v768 = vunpack.c.h.b16 %v717
          %v769 = vunpack.c.l.b16 %v718
          %v770 = vunpack.c.h.b16 %v718
          %v771 = vunpack.c.l.b16 %v719
          %v772 = vunpack.c.h.b16 %v719
          %v773 = vunpack.c.l.b16 %v720
          %v774 = vunpack.c.h.b16 %v720
          %v775 = vpack.c.b16 %v745, %v743
          %v776 = vpack.c.b16 %v746, %v744
          %v777 = vpack.c.b16 %v749, %v747
          %v778 = vpack.c.b16 %v750, %v748
          %v779 = vpack.c.b16 %v753, %v751
          %v780 = vpack.c.b16 %v754, %v752
          %v781 = vpack.c.b16 %v757, %v755
          %v782 = vpack.c.b16 %v758, %v756
          %v783 = vpack.c.b16 %v761, %v759
          %v784 = vpack.c.b16 %v762, %v760
          %v785 = vpack.c.b16 %v765, %v763
          %v786 = vpack.c.b16 %v766, %v764
          %v787 = vpack.c.b16 %v769, %v767
          %v788 = vpack.c.b16 %v770, %v768
          %v789 = vpack.c.b16 %v773, %v771
          %v790 = vpack.c.b16 %v774, %v772
          %807 = vmatpush.bf16.msra.mxu0 %v789
          %808 = vmatpush.bf16.msra.mxu0 %v787
          %809 = vmatpush.bf16.msra.mxu0 %v785
          %810 = vmatpush.bf16.msra.mxu0 %v783
          %811 = vmatpush.bf16.msra.mxu0 %v781
          %812 = vmatpush.bf16.msra.mxu0 %v779
          %813 = vmatpush.bf16.msra.mxu0 %v777
          %814 = vmatpush.bf16.msra.mxu0 %v775
          %815 = vmatmul.bf16.gmra.mxu0 %v704
          %v816 = vpop.f32.mrf.mxu0
          %v817 = vadd.f32 %v723, %v816
          %v818 = vpop.f32.mrf.mxu0
          %819 = vdwg.mxu0
          %820 = vmatpush.bf16.msra.mxu0 %v790
          %821 = vmatpush.bf16.msra.mxu0 %v788
          %822 = vmatpush.bf16.msra.mxu0 %v786
          %823 = vmatpush.bf16.msra.mxu0 %v784
          %824 = vmatpush.bf16.msra.mxu0 %v782
          %825 = vmatpush.bf16.msra.mxu0 %v780
          %826 = vmatpush.bf16.msra.mxu0 %v778
          %827 = vmatpush.bf16.msra.mxu0 %v776
          %828 = vmatmul.bf16.gmra.mxu0 %v704
          %v829 = vpop.f32.mrf.mxu0
          %v830 = vadd.f32 %v724, %v829
          %v831 = vpop.f32.mrf.mxu0
          %832 = vdwg.mxu0
          %v833 = vpack.c.bf16 %v830, %v817
          %834 = vst [vmem:[#allocation2] sm:$0xff] %v833
        $region120: #{tpu_custom_call.1} parent=79 // pred_fallthru
          _
        %s835 = smul.u32 %s50, 8
        %s836 = scalar_lea.vmem %s573, %s835 [#allocation5]
        %v837 = vld [vmem:[%s836] sm:$0xff]
        %838 = vadd.xlane.f32.xlu0 %v837
        %v839 = vpop.xlane.xlu0 %838
        %v840 = vrcp.pop 128.0
        %v841 = vmul.f32 128.0, %v840
        %v842 = vsub.f32 1.0, %v841
        %v843 = vmul.f32 %v840, %v842
        %v844 = vadd.f32 %v840, %v843
        %vm845 = vweird.f32 %v840
        %v846 = vsel %vm845, %v840, %v844
        %v847 = vmul.f32 %v839, %v846
        %v848 = vsub.f32 %v837, %v847
        %v849 = vmul.f32 %v848, %v848
        %850 = vadd.xlane.f32.xlu0 %v849
        %v851 = vpop.xlane.xlu0 %850
        %v852 = vmul.f32 %v851, %v846
        %v853 = vadd.f32 %v852, 1e-06
        %v854 = vrsqrt.pop %v853
        %v855 = vmul.f32 %v854, %v853
        %v856 = vmul.f32 %v855, %v854
        %v857 = vmul.f32 0.5, %v856
        %v858 = vsub.f32 1.5, %v857
        %v859 = vmul.f32 %v854, %v858
        %vm860 = vweird.f32 %v853
        %vm861 = vweird.f32 %v854
        %vm862 = vmor %vm860, %vm861
        %v863 = vsel %vm862, %v854, %v859
        %v864 = vmul.f32 %v848, %v863
        %v866 = vperm.slane %v662, 0
        %v868 = vmul.f32 %v864, %v866
        %v870 = vperm.slane %v663, 0
        %v872 = vadd.f32 %v868, %v870
        %v873 = vpack.c.bf16 %v872, %v872
        %v874 = vld [vmem:[#allocation11] sm:$0xf]
        %v875 = vld [vmem:[#allocation11 + $0x4] sm:$0xf]
        %v876 = vld [vmem:[#allocation11 + $0x8] sm:$0xf]
        %v877 = vld [vmem:[#allocation11 + $0xc] sm:$0xf]
        %v878 = vld [vmem:[#allocation11 + $0x10] sm:$0xf]
        %v879 = vld [vmem:[#allocation11 + $0x14] sm:$0xf]
        %v880 = vld [vmem:[#allocation11 + $0x18] sm:$0xf]
        %v881 = vld [vmem:[#allocation11 + $0x1c] sm:$0xf]
        %v882 = vld [vmem:[#allocation11 + $0x20] sm:$0xf]
        %v883 = vld [vmem:[#allocation11 + $0x24] sm:$0xf]
        %v884 = vld [vmem:[#allocation11 + $0x28] sm:$0xf]
        %v885 = vld [vmem:[#allocation11 + $0x2c] sm:$0xf]
        %v886 = vld [vmem:[#allocation11 + $0x30] sm:$0xf]
        %v887 = vld [vmem:[#allocation11 + $0x34] sm:$0xf]
        %v888 = vld [vmem:[#allocation11 + $0x38] sm:$0xf]
        %v889 = vld [vmem:[#allocation11 + $0x3c] sm:$0xf]
        %v890 = vld [vmem:[#allocation13] sm:$0x1]
        %v892 = vperm.slane %v890, 0
        %v910 = vunpack.c.l.b16 %v874
        %v911 = vunpack.c.l.b16 %v875
        %v912 = vunpack.c.l.b16 %v876
        %v913 = vunpack.c.l.b16 %v877
        %v914 = vunpack.c.l.b16 %v878
        %v915 = vunpack.c.l.b16 %v879
        %v916 = vunpack.c.l.b16 %v880
        %v917 = vunpack.c.l.b16 %v881
        %v918 = vunpack.c.l.b16 %v882
        %v919 = vunpack.c.l.b16 %v883
        %v920 = vunpack.c.l.b16 %v884
        %v921 = vunpack.c.l.b16 %v885
        %v922 = vunpack.c.l.b16 %v886
        %v923 = vunpack.c.l.b16 %v887
        %v924 = vunpack.c.l.b16 %v888
        %v925 = vunpack.c.l.b16 %v889
        %v926 = vpack.c.b16 %v911, %v910
        %v927 = vpack.c.b16 %v913, %v912
        %v928 = vpack.c.b16 %v915, %v914
        %v929 = vpack.c.b16 %v917, %v916
        %v930 = vpack.c.b16 %v919, %v918
        %v931 = vpack.c.b16 %v921, %v920
        %v932 = vpack.c.b16 %v923, %v922
        %v933 = vpack.c.b16 %v925, %v924
        %942 = vmatpush.bf16.msra.mxu0 %v933
        %943 = vmatpush.bf16.msra.mxu0 %v932
        %944 = vmatpush.bf16.msra.mxu0 %v931
        %945 = vmatpush.bf16.msra.mxu0 %v930
        %946 = vmatpush.bf16.msra.mxu0 %v929
        %947 = vmatpush.bf16.msra.mxu0 %v928
        %948 = vmatpush.bf16.msra.mxu0 %v927
        %949 = vmatpush.bf16.msra.mxu0 %v926
        %950 = vmatmul.bf16.gmra.mxu0 %v873
        %v951 = vpop.f32.mrf.mxu0
        %v952 = vadd.f32 %v892, %v951
        %v953 = vpop.f32.mrf.mxu0
        %954 = vdwg.mxu0
        %v955 = vmul.f32 %v952, 0.17677669
        %v956 = vpack.c.bf16 %v955, %v955
        %958 = vrot.lane.b32.xlu0 %v956, 96
        %v959 = vpop.permute.xlu0 %958
        %960 = vrot.lane.b32.xlu0 %v956, 64
        %v961 = vpop.permute.xlu0 %960
        %962 = vrot.lane.b32.xlu0 %v956, 32
        %v963 = vpop.permute.xlu0 %962
        %v964 = vld [vmem:[#allocation2] sm:$0xf]
        %966 = vrot.lane.b32.xlu0 %v964, 96
        %v967 = vpop.permute.xlu0 %966
        %969 = vrot.lane.b32.xlu0 %v964, 64
        %v970 = vpop.permute.xlu0 %969
        %972 = vrot.lane.b32.xlu0 %v964, 32
        %v973 = vpop.permute.xlu0 %972
        %v975 = vld [vmem:[#allocation2 + $0x4] sm:$0xf]
        %977 = vrot.lane.b32.xlu0 %v975, 96
        %v978 = vpop.permute.xlu0 %977
        %980 = vrot.lane.b32.xlu0 %v975, 64
        %v981 = vpop.permute.xlu0 %980
        %983 = vrot.lane.b32.xlu0 %v975, 32
        %v984 = vpop.permute.xlu0 %983
        %986 = vxpose.xlu0.c.b16.start [1/8] %v964, 128
        %987 = vxpose.xlu0.c.b16.cont [2/8] 0, 128
        %988 = vxpose.xlu0.c.b16.cont [3/8] 0, 128
        %989 = vxpose.xlu0.c.b16.cont [4/8] 0, 128
        %990 = vxpose.xlu0.c.b16.cont [5/8] 0, 128
        %991 = vxpose.xlu0.c.b16.cont [6/8] 0, 128
        %992 = vxpose.xlu0.c.b16.cont [7/8] 0, 128
        %993 = vxpose.xlu0.c.b16.end [8/8] 0, 128
        %v994 = vpop.trf.xlu0
        %v995 = vpop.trf.xlu0
        %v996 = vpop.trf.xlu0
        %v997 = vpop.trf.xlu0
        %v998 = vpop.trf.xlu0
        %v999 = vpop.trf.xlu0
        %v1000 = vpop.trf.xlu0
        %v1001 = vpop.trf.xlu0
        %1002 = vxpose.xlu0.c.b16.start [1/8] %v967, 128
        %1003 = vxpose.xlu0.c.b16.cont [2/8] 0, 128
        %1004 = vxpose.xlu0.c.b16.cont [3/8] 0, 128
        %1005 = vxpose.xlu0.c.b16.cont [4/8] 0, 128
        %1006 = vxpose.xlu0.c.b16.cont [5/8] 0, 128
        %1007 = vxpose.xlu0.c.b16.cont [6/8] 0, 128
        %1008 = vxpose.xlu0.c.b16.cont [7/8] 0, 128
        %1009 = vxpose.xlu0.c.b16.end [8/8] 0, 128
        %v1010 = vpop.trf.xlu0
        %v1011 = vpop.trf.xlu0
        %v1012 = vpop.trf.xlu0
        %v1013 = vpop.trf.xlu0
        %v1014 = vpop.trf.xlu0
        %v1015 = vpop.trf.xlu0
        %v1016 = vpop.trf.xlu0
        %v1017 = vpop.trf.xlu0
        %1018 = vxpose.xlu0.c.b16.start [1/8] %v970, 128
        %1019 = vxpose.xlu0.c.b16.cont [2/8] 0, 128
        %1020 = vxpose.xlu0.c.b16.cont [3/8] 0, 128
        %1021 = vxpose.xlu0.c.b16.cont [4/8] 0, 128
        %1022 = vxpose.xlu0.c.b16.cont [5/8] 0, 128
        %1023 = vxpose.xlu0.c.b16.cont [6/8] 0, 128
        %1024 = vxpose.xlu0.c.b16.cont [7/8] 0, 128
        %1025 = vxpose.xlu0.c.b16.end [8/8] 0, 128
        %v1026 = vpop.trf.xlu0
        %v1027 = vpop.trf.xlu0
        %v1028 = vpop.trf.xlu0
        %v1029 = vpop.trf.xlu0
        %v1030 = vpop.trf.xlu0
        %v1031 = vpop.trf.xlu0
        %v1032 = vpop.trf.xlu0
        %v1033 = vpop.trf.xlu0
        %1034 = vxpose.xlu0.c.b16.start [1/8] %v973, 128
        %1035 = vxpose.xlu0.c.b16.cont [2/8] 0, 128
        %1036 = vxpose.xlu0.c.b16.cont [3/8] 0, 128
        %1037 = vxpose.xlu0.c.b16.cont [4/8] 0, 128
        %1038 = vxpose.xlu0.c.b16.cont [5/8] 0, 128
        %1039 = vxpose.xlu0.c.b16.cont [6/8] 0, 128
        %1040 = vxpose.xlu0.c.b16.cont [7/8] 0, 128
        %1041 = vxpose.xlu0.c.b16.end [8/8] 0, 128
        %v1042 = vpop.trf.xlu0
        %v1043 = vpop.trf.xlu0
        %v1044 = vpop.trf.xlu0
        %v1045 = vpop.trf.xlu0
        %v1046 = vpop.trf.xlu0
        %v1047 = vpop.trf.xlu0
        %v1048 = vpop.trf.xlu0
        %v1049 = vpop.trf.xlu0
        %vm1050 = vcmask 261120
        %v1052 = vsel %vm1050, %v956, 0
        %1054 = vmatpush.bf16.msra.mxu0 0
        %1055 = vmatpush.bf16.msra.mxu0 0
        %1056 = vmatpush.bf16.msra.mxu0 0
        %1057 = vmatpush.bf16.msra.mxu0 0
        %1058 = vmatpush.bf16.msra.mxu0 0
        %1059 = vmatpush.bf16.msra.mxu0 0
        %1060 = vmatpush.bf16.msra.mxu0 %v995
        %1061 = vmatpush.bf16.msra.mxu0 %v994
        %1062 = vmatmul.bf16.gmra.mxu0 %v1052
        %v1063 = vpop.f32.mrf.mxu0
        %v1064 = vadd.f32 0.0, %v1063
        %v1065 = vpop.f32.mrf.mxu0
        %1066 = vdwg.mxu0
        %v1068 = vsel %vm1050, %v959, 0
        %1070 = vmatpush.bf16.msra.mxu0 0
        %1071 = vmatpush.bf16.msra.mxu0 0
        %1072 = vmatpush.bf16.msra.mxu0 0
        %1073 = vmatpush.bf16.msra.mxu0 0
        %1074 = vmatpush.bf16.msra.mxu0 0
        %1075 = vmatpush.bf16.msra.mxu0 0
        %1076 = vmatpush.bf16.msra.mxu0 %v1011
        %1077 = vmatpush.bf16.msra.mxu0 %v1010
        %1078 = vmatmul.bf16.gmra.mxu0 %v1068
        %v1079 = vpop.f32.mrf.mxu0
        %v1080 = vadd.f32 0.0, %v1079
        %v1081 = vpop.f32.mrf.mxu0
        %1082 = vdwg.mxu0
        %v1084 = vsel %vm1050, %v961, 0
        %1086 = vmatpush.bf16.msra.mxu0 0
        %1087 = vmatpush.bf16.msra.mxu0 0
        %1088 = vmatpush.bf16.msra.mxu0 0
        %1089 = vmatpush.bf16.msra.mxu0 0
        %1090 = vmatpush.bf16.msra.mxu0 0
        %1091 = vmatpush.bf16.msra.mxu0 0
        %1092 = vmatpush.bf16.msra.mxu0 %v1027
        %1093 = vmatpush.bf16.msra.mxu0 %v1026
        %1094 = vmatmul.bf16.gmra.mxu0 %v1084
        %v1095 = vpop.f32.mrf.mxu0
        %v1096 = vadd.f32 0.0, %v1095
        %v1097 = vpop.f32.mrf.mxu0
        %1098 = vdwg.mxu0
        %v1100 = vsel %vm1050, %v963, 0
        %1102 = vmatpush.bf16.msra.mxu0 0
        %1103 = vmatpush.bf16.msra.mxu0 0
        %1104 = vmatpush.bf16.msra.mxu0 0
        %1105 = vmatpush.bf16.msra.mxu0 0
        %1106 = vmatpush.bf16.msra.mxu0 0
        %1107 = vmatpush.bf16.msra.mxu0 0
        %1108 = vmatpush.bf16.msra.mxu0 %v1043
        %1109 = vmatpush.bf16.msra.mxu0 %v1042
        %1110 = vmatmul.bf16.gmra.mxu0 %v1100
        %v1111 = vpop.f32.mrf.mxu0
        %v1112 = vadd.f32 0.0, %v1111
        %v1113 = vpop.f32.mrf.mxu0
        %1114 = vdwg.mxu0
        %v1115 = vlaneseq
        %v1116 = vand.u32 %v1115, 127
        %s1117 = sld [smem:[#allocation4 + %s49]]
        %v1118 = vstv %s1117
        %vm1119 = vcmp.ge.s32.totalorder %v1116, %v1118
        %v1120 = vsel %vm1119, 1, 0
        %vm1121 = vcmp.eq.s32.totalorder %v1120, 1
        %v1122 = vsel %vm1121, -1e+18, %v1064
        %v1123 = vsel %vm1121, -1e+18, %v1080
        %v1124 = vsel %vm1121, -1e+18, %v1096
        %v1125 = vsel %vm1121, -1e+18, %v1112
        %vm1126 = vcmask 64512
        %v1127 = vsel %vm1126, %v1122, -inf
        %1128 = vmax.xlane.f32.xlu0 %v1127
        %v1129 = vpop.xlane.xlu0 %1128
        %v1130 = vsel %vm1126, %v1123, -inf
        %1131 = vmax.xlane.f32.xlu0 %v1130
        %v1132 = vpop.xlane.xlu0 %1131
        %v1133 = vsel %vm1126, %v1124, -inf
        %1134 = vmax.xlane.f32.xlu0 %v1133
        %v1135 = vpop.xlane.xlu0 %1134
        %v1136 = vsel %vm1126, %v1125, -inf
        %1137 = vmax.xlane.f32.xlu0 %v1136
        %v1138 = vpop.xlane.xlu0 %1137
        %v1139 = vsub.f32 %v1122, %v1129
        %v1140 = vsub.f32 %v1123, %v1132
        %v1141 = vsub.f32 %v1124, %v1135
        %v1142 = vsub.f32 %v1125, %v1138
        %v1143 = vmul.f32 %v1139, 1.442695
        %v1144 = vpow.pop %v1143
        %v1145 = vmul.f32 %v1140, 1.442695
        %v1146 = vpow.pop %v1145
        %v1147 = vmul.f32 %v1141, 1.442695
        %v1148 = vpow.pop %v1147
        %v1149 = vmul.f32 %v1142, 1.442695
        %v1150 = vpow.pop %v1149
        %v1151 = vsel %vm1126, %v1144, 0.0
        %1152 = vadd.xlane.f32.xlu0 %v1151
        %v1153 = vpop.xlane.xlu0 %1152
        %v1154 = vsel %vm1126, %v1146, 0.0
        %1155 = vadd.xlane.f32.xlu0 %v1154
        %v1156 = vpop.xlane.xlu0 %1155
        %v1157 = vsel %vm1126, %v1148, 0.0
        %1158 = vadd.xlane.f32.xlu0 %v1157
        %v1159 = vpop.xlane.xlu0 %1158
        %v1160 = vsel %vm1126, %v1150, 0.0
        %1161 = vadd.xlane.f32.xlu0 %v1160
        %v1162 = vpop.xlane.xlu0 %1161
        %v1163 = vrcp.pop %v1153
        %v1164 = vrcp.pop %v1156
        %v1165 = vrcp.pop %v1159
        %v1166 = vrcp.pop %v1162
        %v1167 = vmul.f32 %v1144, %v1163
        %v1168 = vmul.f32 %v1146, %v1164
        %v1169 = vmul.f32 %v1148, %v1165
        %v1170 = vmul.f32 %v1150, %v1166
        %v1171 = vpack.c.bf16 %v1167, %v1167
        %v1172 = vpack.c.bf16 %v1168, %v1168
        %v1173 = vpack.c.bf16 %v1169, %v1169
        %v1174 = vpack.c.bf16 %v1170, %v1170
        %1175 = vxpose.xlu0.c.b16.start [1/8] %v975, 128
        %1176 = vxpose.xlu0.c.b16.cont [2/8] 0, 128
        %1177 = vxpose.xlu0.c.b16.cont [3/8] 0, 128
        %1178 = vxpose.xlu0.c.b16.cont [4/8] 0, 128
        %1179 = vxpose.xlu0.c.b16.cont [5/8] 0, 128
        %1180 = vxpose.xlu0.c.b16.cont [6/8] 0, 128
        %1181 = vxpose.xlu0.c.b16.cont [7/8] 0, 128
        %1182 = vxpose.xlu0.c.b16.end [8/8] 0, 128
        %v1183 = vpop.trf.xlu0
        %v1184 = vpop.trf.xlu0
        %v1185 = vpop.trf.xlu0
        %v1186 = vpop.trf.xlu0
        %v1187 = vpop.trf.xlu0
        %v1188 = vpop.trf.xlu0
        %v1189 = vpop.trf.xlu0
        %v1190 = vpop.trf.xlu0
        %1191 = vxpose.xlu0.c.b16.start [1/8] %v978, 128
        %1192 = vxpose.xlu0.c.b16.cont [2/8] 0, 128
        %1193 = vxpose.xlu0.c.b16.cont [3/8] 0, 128
        %1194 = vxpose.xlu0.c.b16.cont [4/8] 0, 128
        %1195 = vxpose.xlu0.c.b16.cont [5/8] 0, 128
        %1196 = vxpose.xlu0.c.b16.cont [6/8] 0, 128
        %1197 = vxpose.xlu0.c.b16.cont [7/8] 0, 128
        %1198 = vxpose.xlu0.c.b16.end [8/8] 0, 128
        %v1199 = vpop.trf.xlu0
        %v1200 = vpop.trf.xlu0
        %v1201 = vpop.trf.xlu0
        %v1202 = vpop.trf.xlu0
        %v1203 = vpop.trf.xlu0
        %v1204 = vpop.trf.xlu0
        %v1205 = vpop.trf.xlu0
        %v1206 = vpop.trf.xlu0
        %1207 = vxpose.xlu0.c.b16.start [1/8] %v981, 128
        %1208 = vxpose.xlu0.c.b16.cont [2/8] 0, 128
        %1209 = vxpose.xlu0.c.b16.cont [3/8] 0, 128
        %1210 = vxpose.xlu0.c.b16.cont [4/8] 0, 128
        %1211 = vxpose.xlu0.c.b16.cont [5/8] 0, 128
        %1212 = vxpose.xlu0.c.b16.cont [6/8] 0, 128
        %1213 = vxpose.xlu0.c.b16.cont [7/8] 0, 128
        %1214 = vxpose.xlu0.c.b16.end [8/8] 0, 128
        %v1215 = vpop.trf.xlu0
        %v1216 = vpop.trf.xlu0
        %v1217 = vpop.trf.xlu0
        %v1218 = vpop.trf.xlu0
        %v1219 = vpop.trf.xlu0
        %v1220 = vpop.trf.xlu0
        %v1221 = vpop.trf.xlu0
        %v1222 = vpop.trf.xlu0
        %1223 = vxpose.xlu0.c.b16.start [1/8] %v984, 128
        %1224 = vxpose.xlu0.c.b16.cont [2/8] 0, 128
        %1225 = vxpose.xlu0.c.b16.cont [3/8] 0, 128
        %1226 = vxpose.xlu0.c.b16.cont [4/8] 0, 128
        %1227 = vxpose.xlu0.c.b16.cont [5/8] 0, 128
        %1228 = vxpose.xlu0.c.b16.cont [6/8] 0, 128
        %1229 = vxpose.xlu0.c.b16.cont [7/8] 0, 128
        %1230 = vxpose.xlu0.c.b16.end [8/8] 0, 128
        %v1231 = vpop.trf.xlu0
        %v1232 = vpop.trf.xlu0
        %v1233 = vpop.trf.xlu0
        %v1234 = vpop.trf.xlu0
        %v1235 = vpop.trf.xlu0
        %v1236 = vpop.trf.xlu0
        %v1237 = vpop.trf.xlu0
        %v1238 = vpop.trf.xlu0
        %v1240 = vsel %vm1126, %v1183, 0
        %v1243 = vsel %vm1126, %v1184, 0
        %v1246 = vsel %vm1126, %v1171, 0
        %1248 = vmatpush.bf16.xpose.msra.mxu0 0
        %1249 = vmatpush.bf16.xpose.msra.mxu0 0
        %1250 = vmatpush.bf16.xpose.msra.mxu0 0
        %1251 = vmatpush.bf16.xpose.msra.mxu0 0
        %1252 = vmatpush.bf16.xpose.msra.mxu0 0
        %1253 = vmatpush.bf16.xpose.msra.mxu0 0
        %1254 = vmatpush.bf16.xpose.msra.mxu0 0
        %1255 = vmatpush.bf16.xpose.msra.mxu0 %v1246
        %1256 = vmatmul.bf16.gmra.mxu0 %v1240
        %v1257 = vpop.f32.mrf.mxu0
        %v1258 = vadd.f32 0.0, %v1257
        %v1259 = vpop.f32.mrf.mxu0
        %v1260 = vadd.f32 0.0, %v1259
        %1261 = vmatmul.bf16.gmra.mxu0 %v1243
        %v1262 = vpop.f32.mrf.mxu0
        %v1263 = vadd.f32 0.0, %v1262
        %v1264 = vpop.f32.mrf.mxu0
        %v1265 = vadd.f32 0.0, %v1264
        %1266 = vdwg.mxu0
        %v1268 = vsel %vm1126, %v1199, 0
        %v1271 = vsel %vm1126, %v1200, 0
        %v1274 = vsel %vm1126, %v1172, 0
        %1276 = vmatpush.bf16.xpose.msra.mxu0 0
        %1277 = vmatpush.bf16.xpose.msra.mxu0 0
        %1278 = vmatpush.bf16.xpose.msra.mxu0 0
        %1279 = vmatpush.bf16.xpose.msra.mxu0 0
        %1280 = vmatpush.bf16.xpose.msra.mxu0 0
        %1281 = vmatpush.bf16.xpose.msra.mxu0 0
        %1282 = vmatpush.bf16.xpose.msra.mxu0 0
        %1283 = vmatpush.bf16.xpose.msra.mxu0 %v1274
        %1284 = vmatmul.bf16.gmra.mxu0 %v1268
        %v1285 = vpop.f32.mrf.mxu0
        %v1286 = vadd.f32 0.0, %v1285
        %v1287 = vpop.f32.mrf.mxu0
        %v1288 = vadd.f32 0.0, %v1287
        %1289 = vmatmul.bf16.gmra.mxu0 %v1271
        %v1290 = vpop.f32.mrf.mxu0
        %v1291 = vadd.f32 0.0, %v1290
        %v1292 = vpop.f32.mrf.mxu0
        %v1293 = vadd.f32 0.0, %v1292
        %1294 = vdwg.mxu0
        %v1296 = vsel %vm1126, %v1215, 0
        %v1299 = vsel %vm1126, %v1216, 0
        %v1302 = vsel %vm1126, %v1173, 0
        %1304 = vmatpush.bf16.xpose.msra.mxu0 0
        %1305 = vmatpush.bf16.xpose.msra.mxu0 0
        %1306 = vmatpush.bf16.xpose.msra.mxu0 0
        %1307 = vmatpush.bf16.xpose.msra.mxu0 0
        %1308 = vmatpush.bf16.xpose.msra.mxu0 0
        %1309 = vmatpush.bf16.xpose.msra.mxu0 0
        %1310 = vmatpush.bf16.xpose.msra.mxu0 0
        %1311 = vmatpush.bf16.xpose.msra.mxu0 %v1302
        %1312 = vmatmul.bf16.gmra.mxu0 %v1296
        %v1313 = vpop.f32.mrf.mxu0
        %v1314 = vadd.f32 0.0, %v1313
        %v1315 = vpop.f32.mrf.mxu0
        %v1316 = vadd.f32 0.0, %v1315
        %1317 = vmatmul.bf16.gmra.mxu0 %v1299
        %v1318 = vpop.f32.mrf.mxu0
        %v1319 = vadd.f32 0.0, %v1318
        %v1320 = vpop.f32.mrf.mxu0
        %v1321 = vadd.f32 0.0, %v1320
        %1322 = vdwg.mxu0
        %v1324 = vsel %vm1126, %v1231, 0
        %v1327 = vsel %vm1126, %v1232, 0
        %v1330 = vsel %vm1126, %v1174, 0
        %1332 = vmatpush.bf16.xpose.msra.mxu0 0
        %1333 = vmatpush.bf16.xpose.msra.mxu0 0
        %1334 = vmatpush.bf16.xpose.msra.mxu0 0
        %1335 = vmatpush.bf16.xpose.msra.mxu0 0
        %1336 = vmatpush.bf16.xpose.msra.mxu0 0
        %1337 = vmatpush.bf16.xpose.msra.mxu0 0
        %1338 = vmatpush.bf16.xpose.msra.mxu0 0
        %1339 = vmatpush.bf16.xpose.msra.mxu0 %v1330
        %1340 = vmatmul.bf16.gmra.mxu0 %v1324
        %v1341 = vpop.f32.mrf.mxu0
        %v1342 = vadd.f32 0.0, %v1341
        %v1343 = vpop.f32.mrf.mxu0
        %v1344 = vadd.f32 0.0, %v1343
        %1345 = vmatmul.bf16.gmra.mxu0 %v1327
        %v1346 = vpop.f32.mrf.mxu0
        %v1347 = vadd.f32 0.0, %v1346
        %v1348 = vpop.f32.mrf.mxu0
        %v1349 = vadd.f32 0.0, %v1348
        %1350 = vdwg.mxu0
        %1351 = vxpose.xlu0.b32.start [1/16] %v1258, 128
        %1352 = vxpose.xlu0.b32.cont [2/16] %v1260, 128
        %1353 = vxpose.xlu0.b32.cont [3/16] %v1263, 128
        %1354 = vxpose.xlu0.b32.cont [4/16] %v1265, 128
        %1355 = vxpose.xlu0.b32.cont [5/16] 0.0, 128
        %1356 = vxpose.xlu0.b32.cont [6/16] 0.0, 128
        %1357 = vxpose.xlu0.b32.cont [7/16] 0.0, 128
        %1358 = vxpose.xlu0.b32.cont [8/16] 0.0, 128
        %1359 = vxpose.xlu0.b32.cont [9/16] 0.0, 128
        %1360 = vxpose.xlu0.b32.cont [10/16] 0.0, 128
        %1361 = vxpose.xlu0.b32.cont [11/16] 0.0, 128
        %1362 = vxpose.xlu0.b32.cont [12/16] 0.0, 128
        %1363 = vxpose.xlu0.b32.cont [13/16] 0.0, 128
        %1364 = vxpose.xlu0.b32.cont [14/16] 0.0, 128
        %1365 = vxpose.xlu0.b32.cont [15/16] 0.0, 128
        %1366 = vxpose.xlu0.b32.end [16/16] 0.0, 128
        %v1367 = vpop.trf.xlu0
        %v1368 = vpop.trf.xlu0
        %v1369 = vpop.trf.xlu0
        %v1370 = vpop.trf.xlu0
        %v1371 = vpop.trf.xlu0
        %v1372 = vpop.trf.xlu0
        %v1373 = vpop.trf.xlu0
        %v1374 = vpop.trf.xlu0
        %v1375 = vpop.trf.xlu0
        %v1376 = vpop.trf.xlu0
        %v1377 = vpop.trf.xlu0
        %v1378 = vpop.trf.xlu0
        %v1379 = vpop.trf.xlu0
        %v1380 = vpop.trf.xlu0
        %v1381 = vpop.trf.xlu0
        %v1382 = vpop.trf.xlu0
        %1383 = vxpose.xlu0.b32.start [1/16] %v1286, 128
        %1384 = vxpose.xlu0.b32.cont [2/16] %v1288, 128
        %1385 = vxpose.xlu0.b32.cont [3/16] %v1291, 128
        %1386 = vxpose.xlu0.b32.cont [4/16] %v1293, 128
        %1387 = vxpose.xlu0.b32.cont [5/16] 0.0, 128
        %1388 = vxpose.xlu0.b32.cont [6/16] 0.0, 128
        %1389 = vxpose.xlu0.b32.cont [7/16] 0.0, 128
        %1390 = vxpose.xlu0.b32.cont [8/16] 0.0, 128
        %1391 = vxpose.xlu0.b32.cont [9/16] 0.0, 128
        %1392 = vxpose.xlu0.b32.cont [10/16] 0.0, 128
        %1393 = vxpose.xlu0.b32.cont [11/16] 0.0, 128
        %1394 = vxpose.xlu0.b32.cont [12/16] 0.0, 128
        %1395 = vxpose.xlu0.b32.cont [13/16] 0.0, 128
        %1396 = vxpose.xlu0.b32.cont [14/16] 0.0, 128
        %1397 = vxpose.xlu0.b32.cont [15/16] 0.0, 128
        %1398 = vxpose.xlu0.b32.end [16/16] 0.0, 128
        %v1399 = vpop.trf.xlu0
        %v1400 = vpop.trf.xlu0
        %v1401 = vpop.trf.xlu0
        %v1402 = vpop.trf.xlu0
        %v1403 = vpop.trf.xlu0
        %v1404 = vpop.trf.xlu0
        %v1405 = vpop.trf.xlu0
        %v1406 = vpop.trf.xlu0
        %v1407 = vpop.trf.xlu0
        %v1408 = vpop.trf.xlu0
        %v1409 = vpop.trf.xlu0
        %v1410 = vpop.trf.xlu0
        %v1411 = vpop.trf.xlu0
        %v1412 = vpop.trf.xlu0
        %v1413 = vpop.trf.xlu0
        %v1414 = vpop.trf.xlu0
        %1415 = vxpose.xlu0.b32.start [1/16] %v1314, 128
        %1416 = vxpose.xlu0.b32.cont [2/16] %v1316, 128
        %1417 = vxpose.xlu0.b32.cont [3/16] %v1319, 128
        %1418 = vxpose.xlu0.b32.cont [4/16] %v1321, 128
        %1419 = vxpose.xlu0.b32.cont [5/16] 0.0, 128
        %1420 = vxpose.xlu0.b32.cont [6/16] 0.0, 128
        %1421 = vxpose.xlu0.b32.cont [7/16] 0.0, 128
        %1422 = vxpose.xlu0.b32.cont [8/16] 0.0, 128
        %1423 = vxpose.xlu0.b32.cont [9/16] 0.0, 128
        %1424 = vxpose.xlu0.b32.cont [10/16] 0.0, 128
        %1425 = vxpose.xlu0.b32.cont [11/16] 0.0, 128
        %1426 = vxpose.xlu0.b32.cont [12/16] 0.0, 128
        %1427 = vxpose.xlu0.b32.cont [13/16] 0.0, 128
        %1428 = vxpose.xlu0.b32.cont [14/16] 0.0, 128
        %1429 = vxpose.xlu0.b32.cont [15/16] 0.0, 128
        %1430 = vxpose.xlu0.b32.end [16/16] 0.0, 128
        %v1431 = vpop.trf.xlu0
        %v1432 = vpop.trf.xlu0
        %v1433 = vpop.trf.xlu0
        %v1434 = vpop.trf.xlu0
        %v1435 = vpop.trf.xlu0
        %v1436 = vpop.trf.xlu0
        %v1437 = vpop.trf.xlu0
        %v1438 = vpop.trf.xlu0
        %v1439 = vpop.trf.xlu0
        %v1440 = vpop.trf.xlu0
        %v1441 = vpop.trf.xlu0
        %v1442 = vpop.trf.xlu0
        %v1443 = vpop.trf.xlu0
        %v1444 = vpop.trf.xlu0
        %v1445 = vpop.trf.xlu0
        %v1446 = vpop.trf.xlu0
        %1447 = vxpose.xlu0.b32.start [1/16] %v1342, 128
        %1448 = vxpose.xlu0.b32.cont [2/16] %v1344, 128
        %1449 = vxpose.xlu0.b32.cont [3/16] %v1347, 128
        %1450 = vxpose.xlu0.b32.cont [4/16] %v1349, 128
        %1451 = vxpose.xlu0.b32.cont [5/16] 0.0, 128
        %1452 = vxpose.xlu0.b32.cont [6/16] 0.0, 128
        %1453 = vxpose.xlu0.b32.cont [7/16] 0.0, 128
        %1454 = vxpose.xlu0.b32.cont [8/16] 0.0, 128
        %1455 = vxpose.xlu0.b32.cont [9/16] 0.0, 128
        %1456 = vxpose.xlu0.b32.cont [10/16] 0.0, 128
        %1457 = vxpose.xlu0.b32.cont [11/16] 0.0, 128
        %1458 = vxpose.xlu0.b32.cont [12/16] 0.0, 128
        %1459 = vxpose.xlu0.b32.cont [13/16] 0.0, 128
        %1460 = vxpose.xlu0.b32.cont [14/16] 0.0, 128
        %1461 = vxpose.xlu0.b32.cont [15/16] 0.0, 128
        %1462 = vxpose.xlu0.b32.end [16/16] 0.0, 128
        %v1463 = vpop.trf.xlu0
        %v1464 = vpop.trf.xlu0
        %v1465 = vpop.trf.xlu0
        %v1466 = vpop.trf.xlu0
        %v1467 = vpop.trf.xlu0
        %v1468 = vpop.trf.xlu0
        %v1469 = vpop.trf.xlu0
        %v1470 = vpop.trf.xlu0
        %v1471 = vpop.trf.xlu0
        %v1472 = vpop.trf.xlu0
        %v1473 = vpop.trf.xlu0
        %v1474 = vpop.trf.xlu0
        %v1475 = vpop.trf.xlu0
        %v1476 = vpop.trf.xlu0
        %v1477 = vpop.trf.xlu0
        %v1478 = vpop.trf.xlu0
        %v1479 = vrot.slane %v1431, 4
        %vm1480 = vcmask 1047556
        %v1481 = vsel %vm1480, %v1479, %v1367
        %v1482 = vrot.slane %v1367, 4
        %v1483 = vsel %vm1480, %v1431, %v1482
        %v1485 = vunpack.c.l.s4 1983009808
        %v1486 = vunpack.c.0.s8 %v1485
        %v1487 = vperm.slane %v1481, %v1486
        %v1489 = vunpack.c.l.s4 1983009808
        %v1490 = vunpack.c.0.s8 %v1489
        %v1491 = vperm.slane %v1483, %v1490
        %v1492 = vrot.slane %v1463, 4
        %v1493 = vsel %vm1480, %v1492, %v1399
        %v1494 = vrot.slane %v1399, 4
        %v1495 = vsel %vm1480, %v1463, %v1494
        %v1497 = vunpack.c.l.s4 1983009808
        %v1498 = vunpack.c.0.s8 %v1497
        %v1499 = vperm.slane %v1493, %v1498
        %v1501 = vunpack.c.l.s4 1983009808
        %v1502 = vunpack.c.0.s8 %v1501
        %v1503 = vperm.slane %v1495, %v1502
        %v1504 = vrot.slane %v1499, 4
        %v1505 = vsel %vm1480, %v1504, %v1487
        %v1506 = vrot.slane %v1487, 4
        %v1507 = vsel %vm1480, %v1499, %v1506
        %v1509 = vunpack.c.l.s4 1934713408
        %v1510 = vunpack.c.0.s8 %v1509
        %v1511 = vperm.slane %v1505, %v1510
        %v1513 = vunpack.c.l.s4 1934713408
        %v1514 = vunpack.c.0.s8 %v1513
        %v1515 = vperm.slane %v1507, %v1514
        %v1516 = vrot.slane %v1503, 4
        %v1517 = vsel %vm1480, %v1516, %v1491
        %v1518 = vrot.slane %v1491, 4
        %v1519 = vsel %vm1480, %v1503, %v1518
        %v1521 = vunpack.c.l.s4 1934713408
        %v1522 = vunpack.c.0.s8 %v1521
        %v1523 = vperm.slane %v1517, %v1522
        %v1525 = vunpack.c.l.s4 1934713408
        %v1526 = vunpack.c.0.s8 %v1525
        %v1527 = vperm.slane %v1519, %v1526
        %v1528 = vrot.slane %v1511, 4
        %v1529 = vsel %vm1480, 0.0, %v1528
        %v1530 = vrot.slane %v1515, 4
        %v1531 = vsel %vm1480, 0.0, %v1530
        %v1532 = vrot.slane %v1523, 4
        %v1533 = vsel %vm1480, 0.0, %v1532
        %v1534 = vrot.slane %v1527, 4
        %v1535 = vsel %vm1480, 0.0, %v1534
        %v1536 = vsel %vm1480, %v1530, %v1511
        %v1538 = vunpack.c.l.s4 1983009808
        %v1539 = vunpack.c.0.s8 %v1538
        %v1540 = vperm.slane %v1536, %v1539
        %v1541 = vrot.slane %v1531, 4
        %v1542 = vsel %vm1480, %v1541, %v1529
        %v1544 = vunpack.c.l.s4 1983009808
        %v1545 = vunpack.c.0.s8 %v1544
        %v1546 = vperm.slane %v1542, %v1545
        %v1547 = vsel %vm1480, %v1534, %v1523
        %v1549 = vunpack.c.l.s4 1983009808
        %v1550 = vunpack.c.0.s8 %v1549
        %v1551 = vperm.slane %v1547, %v1550
        %v1552 = vrot.slane %v1535, 4
        %v1553 = vsel %vm1480, %v1552, %v1533
        %v1555 = vunpack.c.l.s4 1983009808
        %v1556 = vunpack.c.0.s8 %v1555
        %v1557 = vperm.slane %v1553, %v1556
        %v1558 = vrot.slane %v1546, 4
        %v1559 = vsel %vm1480, %v1558, %v1540
        %v1560 = vrot.slane %v1540, 4
        %v1561 = vsel %vm1480, %v1546, %v1560
        %v1563 = vunpack.c.l.s4 1934713408
        %v1564 = vunpack.c.0.s8 %v1563
        %v1565 = vperm.slane %v1559, %v1564
        %v1567 = vunpack.c.l.s4 1934713408
        %v1568 = vunpack.c.0.s8 %v1567
        %v1569 = vperm.slane %v1561, %v1568
        %v1570 = vrot.slane %v1557, 4
        %v1571 = vsel %vm1480, %v1570, %v1551
        %v1572 = vrot.slane %v1551, 4
        %v1573 = vsel %vm1480, %v1557, %v1572
        %v1575 = vunpack.c.l.s4 1934713408
        %v1576 = vunpack.c.0.s8 %v1575
        %v1577 = vperm.slane %v1571, %v1576
        %v1579 = vunpack.c.l.s4 1934713408
        %v1580 = vunpack.c.0.s8 %v1579
        %v1581 = vperm.slane %v1573, %v1580
        %v1582 = vrot.slane %v1577, 4
        %v1583 = vsel %vm1480, %v1582, %v1565
        %v1584 = vrot.slane %v1565, 4
        %v1585 = vsel %vm1480, %v1577, %v1584
        %v1586 = vrot.slane %v1581, 4
        %v1587 = vsel %vm1480, %v1586, %v1569
        %v1588 = vrot.slane %v1569, 4
        %v1589 = vsel %vm1480, %v1581, %v1588
        %1591 = vrot.lane.b32.xlu0 %v1585, 32
        %v1592 = vpop.permute.xlu0 %1591
        %1595 = vrot.lane.b32.xlu0 %v1587, 64
        %v1596 = vpop.permute.xlu0 %1595
        %1599 = vrot.lane.b32.xlu0 %v1589, 96
        %v1600 = vpop.permute.xlu0 %1599
        %v1602 = vsel %vm1050, %v1583, %v1592
        %vm1603 = vcmask 523264
        %v1604 = vsel %vm1603, %v1602, %v1596
        %vm1605 = vcmask 785408
        %v1606 = vsel %vm1605, %v1604, %v1600
        %v1607 = vpack.c.bf16 %v1606, %v1606
        %v1608 = vld [vmem:[#allocation16] sm:$0xf]
        %v1609 = vld [vmem:[#allocation16 + $0x4] sm:$0xf]
        %v1610 = vld [vmem:[#allocation16 + $0x8] sm:$0xf]
        %v1611 = vld [vmem:[#allocation16 + $0xc] sm:$0xf]
        %v1612 = vld [vmem:[#allocation16 + $0x10] sm:$0xf]
        %v1613 = vld [vmem:[#allocation16 + $0x14] sm:$0xf]
        %v1614 = vld [vmem:[#allocation16 + $0x18] sm:$0xf]
        %v1615 = vld [vmem:[#allocation16 + $0x1c] sm:$0xf]
        %v1616 = vld [vmem:[#allocation16 + $0x20] sm:$0xf]
        %v1617 = vld [vmem:[#allocation16 + $0x24] sm:$0xf]
        %v1618 = vld [vmem:[#allocation16 + $0x28] sm:$0xf]
        %v1619 = vld [vmem:[#allocation16 + $0x2c] sm:$0xf]
        %v1620 = vld [vmem:[#allocation16 + $0x30] sm:$0xf]
        %v1621 = vld [vmem:[#allocation16 + $0x34] sm:$0xf]
        %v1622 = vld [vmem:[#allocation16 + $0x38] sm:$0xf]
        %v1623 = vld [vmem:[#allocation16 + $0x3c] sm:$0xf]
        %v1624 = vld [vmem:[%s9] sm:$0x1]
        %v1626 = vperm.slane %v1624, 0
        %v1644 = vunpack.c.l.b16 %v1608
        %v1645 = vunpack.c.l.b16 %v1609
        %v1646 = vunpack.c.l.b16 %v1610
        %v1647 = vunpack.c.l.b16 %v1611
        %v1648 = vunpack.c.l.b16 %v1612
        %v1649 = vunpack.c.l.b16 %v1613
        %v1650 = vunpack.c.l.b16 %v1614
        %v1651 = vunpack.c.l.b16 %v1615
        %v1652 = vunpack.c.l.b16 %v1616
        %v1653 = vunpack.c.l.b16 %v1617
        %v1654 = vunpack.c.l.b16 %v1618
        %v1655 = vunpack.c.l.b16 %v1619
        %v1656 = vunpack.c.l.b16 %v1620
        %v1657 = vunpack.c.l.b16 %v1621
        %v1658 = vunpack.c.l.b16 %v1622
        %v1659 = vunpack.c.l.b16 %v1623
        %v1660 = vpack.c.b16 %v1645, %v1644
        %v1661 = vpack.c.b16 %v1647, %v1646
        %v1662 = vpack.c.b16 %v1649, %v1648
        %v1663 = vpack.c.b16 %v1651, %v1650
        %v1664 = vpack.c.b16 %v1653, %v1652
        %v1665 = vpack.c.b16 %v1655, %v1654
        %v1666 = vpack.c.b16 %v1657, %v1656
        %v1667 = vpack.c.b16 %v1659, %v1658
        %1676 = vmatpush.bf16.msra.mxu0 %v1667
        %1677 = vmatpush.bf16.msra.mxu0 %v1666
        %1678 = vmatpush.bf16.msra.mxu0 %v1665
        %1679 = vmatpush.bf16.msra.mxu0 %v1664
        %1680 = vmatpush.bf16.msra.mxu0 %v1663
        %1681 = vmatpush.bf16.msra.mxu0 %v1662
        %1682 = vmatpush.bf16.msra.mxu0 %v1661
        %1683 = vmatpush.bf16.msra.mxu0 %v1660
        %1684 = vmatmul.bf16.gmra.mxu0 %v1607
        %v1685 = vpop.f32.mrf.mxu0
        %v1686 = vadd.f32 %v1626, %v1685
        %v1687 = vpop.f32.mrf.mxu0
        %1688 = vdwg.mxu0
        %v1689 = vadd.f32 %v1686, %v837
        %v1690 = vld [vmem:[%s10] sm:$0x1]
        %v1691 = vld [vmem:[%s11] sm:$0x1]
        %1692 = vadd.xlane.f32.xlu0 %v1689
        %v1693 = vpop.xlane.xlu0 %1692
        %v1694 = vmul.f32 %v1693, %v846
        %v1695 = vsub.f32 %v1689, %v1694
        %v1696 = vmul.f32 %v1695, %v1695
        %1697 = vadd.xlane.f32.xlu0 %v1696
        %v1698 = vpop.xlane.xlu0 %1697
        %v1699 = vmul.f32 %v1698, %v846
        %v1700 = vadd.f32 %v1699, 1e-06
        %v1701 = vrsqrt.pop %v1700
        %v1702 = vmul.f32 %v1701, %v1700
        %v1703 = vmul.f32 %v1702, %v1701
        %v1704 = vmul.f32 0.5, %v1703
        %v1705 = vsub.f32 1.5, %v1704
        %v1706 = vmul.f32 %v1701, %v1705
        %vm1707 = vweird.f32 %v1700
        %vm1708 = vweird.f32 %v1701
        %vm1709 = vmor %vm1707, %vm1708
        %v1710 = vsel %vm1709, %v1701, %v1706
        %v1711 = vmul.f32 %v1695, %v1710
        %v1713 = vperm.slane %v1690, 0
        %v1715 = vmul.f32 %v1711, %v1713
        %v1717 = vperm.slane %v1691, 0
        %v1719 = vadd.f32 %v1715, %v1717
        %v1720 = vpack.c.bf16 %v1719, %v1719
        %v1721 = vld [vmem:[#allocation17] sm:$0xff]
        %v1722 = vld [vmem:[#allocation17 + $0x8] sm:$0xff]
        %v1723 = vld [vmem:[#allocation17 + $0x10] sm:$0xff]
        %v1724 = vld [vmem:[#allocation17 + $0x18] sm:$0xff]
        %v1725 = vld [vmem:[#allocation17 + $0x20] sm:$0xff]
        %v1726 = vld [vmem:[#allocation17 + $0x28] sm:$0xff]
        %v1727 = vld [vmem:[#allocation17 + $0x30] sm:$0xff]
        %v1728 = vld [vmem:[#allocation17 + $0x38] sm:$0xff]
        %v1729 = vld [vmem:[#allocation17 + $0x40] sm:$0xff]
        %v1730 = vld [vmem:[#allocation17 + $0x48] sm:$0xff]
        %v1731 = vld [vmem:[#allocation17 + $0x50] sm:$0xff]
        %v1732 = vld [vmem:[#allocation17 + $0x58] sm:$0xff]
        %v1733 = vld [vmem:[#allocation17 + $0x60] sm:$0xff]
        %v1734 = vld [vmem:[#allocation17 + $0x68] sm:$0xff]
        %v1735 = vld [vmem:[#allocation17 + $0x70] sm:$0xff]
        %v1736 = vld [vmem:[#allocation17 + $0x78] sm:$0xff]
        %v1737 = vld [vmem:[%s13] sm:$0x3]
        %v1739 = vperm.slane %v1737, 0
        %v1740 = vperm.slane %v1737, 1
        %v1759 = vunpack.c.l.b16 %v1721
        %v1760 = vunpack.c.h.b16 %v1721
        %v1761 = vunpack.c.l.b16 %v1722
        %v1762 = vunpack.c.h.b16 %v1722
        %v1763 = vunpack.c.l.b16 %v1723
        %v1764 = vunpack.c.h.b16 %v1723
        %v1765 = vunpack.c.l.b16 %v1724
        %v1766 = vunpack.c.h.b16 %v1724
        %v1767 = vunpack.c.l.b16 %v1725
        %v1768 = vunpack.c.h.b16 %v1725
        %v1769 = vunpack.c.l.b16 %v1726
        %v1770 = vunpack.c.h.b16 %v1726
        %v1771 = vunpack.c.l.b16 %v1727
        %v1772 = vunpack.c.h.b16 %v1727
        %v1773 = vunpack.c.l.b16 %v1728
        %v1774 = vunpack.c.h.b16 %v1728
        %v1775 = vunpack.c.l.b16 %v1729
        %v1776 = vunpack.c.h.b16 %v1729
        %v1777 = vunpack.c.l.b16 %v1730
        %v1778 = vunpack.c.h.b16 %v1730
        %v1779 = vunpack.c.l.b16 %v1731
        %v1780 = vunpack.c.h.b16 %v1731
        %v1781 = vunpack.c.l.b16 %v1732
        %v1782 = vunpack.c.h.b16 %v1732
        %v1783 = vunpack.c.l.b16 %v1733
        %v1784 = vunpack.c.h.b16 %v1733
        %v1785 = vunpack.c.l.b16 %v1734
        %v1786 = vunpack.c.h.b16 %v1734
        %v1787 = vunpack.c.l.b16 %v1735
        %v1788 = vunpack.c.h.b16 %v1735
        %v1789 = vunpack.c.l.b16 %v1736
        %v1790 = vunpack.c.h.b16 %v1736
        %v1791 = vpack.c.b16 %v1761, %v1759
        %v1792 = vpack.c.b16 %v1762, %v1760
        %v1793 = vpack.c.b16 %v1765, %v1763
        %v1794 = vpack.c.b16 %v1766, %v1764
        %v1795 = vpack.c.b16 %v1769, %v1767
        %v1796 = vpack.c.b16 %v1770, %v1768
        %v1797 = vpack.c.b16 %v1773, %v1771
        %v1798 = vpack.c.b16 %v1774, %v1772
        %v1799 = vpack.c.b16 %v1777, %v1775
        %v1800 = vpack.c.b16 %v1778, %v1776
        %v1801 = vpack.c.b16 %v1781, %v1779
        %v1802 = vpack.c.b16 %v1782, %v1780
        %v1803 = vpack.c.b16 %v1785, %v1783
        %v1804 = vpack.c.b16 %v1786, %v1784
        %v1805 = vpack.c.b16 %v1789, %v1787
        %v1806 = vpack.c.b16 %v1790, %v1788
        %1823 = vmatpush.bf16.msra.mxu0 %v1805
        %1824 = vmatpush.bf16.msra.mxu0 %v1803
        %1825 = vmatpush.bf16.msra.mxu0 %v1801
        %1826 = vmatpush.bf16.msra.mxu0 %v1799
        %1827 = vmatpush.bf16.msra.mxu0 %v1797
        %1828 = vmatpush.bf16.msra.mxu0 %v1795
        %1829 = vmatpush.bf16.msra.mxu0 %v1793
        %1830 = vmatpush.bf16.msra.mxu0 %v1791
        %1831 = vmatmul.bf16.gmra.mxu0 %v1720
        %v1832 = vpop.f32.mrf.mxu0
        %v1833 = vadd.f32 %v1739, %v1832
        %v1834 = vpop.f32.mrf.mxu0
        %1835 = vdwg.mxu0
        %1836 = vmatpush.bf16.msra.mxu0 %v1806
        %1837 = vmatpush.bf16.msra.mxu0 %v1804
        %1838 = vmatpush.bf16.msra.mxu0 %v1802
        %1839 = vmatpush.bf16.msra.mxu0 %v1800
        %1840 = vmatpush.bf16.msra.mxu0 %v1798
        %1841 = vmatpush.bf16.msra.mxu0 %v1796
        %1842 = vmatpush.bf16.msra.mxu0 %v1794
        %1843 = vmatpush.bf16.msra.mxu0 %v1792
        %1844 = vmatmul.bf16.gmra.mxu0 %v1720
        %v1845 = vpop.f32.mrf.mxu0
        %v1846 = vadd.f32 %v1740, %v1845
        %v1847 = vpop.f32.mrf.mxu0
        %1848 = vdwg.mxu0
        %v1849 = vmax.f32 %v1833, 0.0
        %v1850 = vmax.f32 %v1846, 0.0
        %v1851 = vpack.c.bf16 %v1849, %v1849
        %v1852 = vpack.c.bf16 %v1850, %v1850
        %v1853 = vld [vmem:[#allocation19] sm:$0xf]
        %v1854 = vld [vmem:[#allocation19 + $0x4] sm:$0xf]
        %v1855 = vld [vmem:[#allocation19 + $0x8] sm:$0xf]
        %v1856 = vld [vmem:[#allocation19 + $0xc] sm:$0xf]
        %v1857 = vld [vmem:[#allocation19 + $0x10] sm:$0xf]
        %v1858 = vld [vmem:[#allocation19 + $0x14] sm:$0xf]
        %v1859 = vld [vmem:[#allocation19 + $0x18] sm:$0xf]
        %v1860 = vld [vmem:[#allocation19 + $0x1c] sm:$0xf]
        %v1861 = vld [vmem:[#allocation19 + $0x20] sm:$0xf]
        %v1862 = vld [vmem:[#allocation19 + $0x24] sm:$0xf]
        %v1863 = vld [vmem:[#allocation19 + $0x28] sm:$0xf]
        %v1864 = vld [vmem:[#allocation19 + $0x2c] sm:$0xf]
        %v1865 = vld [vmem:[#allocation19 + $0x30] sm:$0xf]
        %v1866 = vld [vmem:[#allocation19 + $0x34] sm:$0xf]
        %v1867 = vld [vmem:[#allocation19 + $0x38] sm:$0xf]
        %v1868 = vld [vmem:[#allocation19 + $0x3c] sm:$0xf]
        %v1869 = vld [vmem:[#allocation19 + $0x40] sm:$0xf]
        %v1870 = vld [vmem:[#allocation19 + $0x44] sm:$0xf]
        %v1871 = vld [vmem:[#allocation19 + $0x48] sm:$0xf]
        %v1872 = vld [vmem:[#allocation19 + $0x4c] sm:$0xf]
        %v1873 = vld [vmem:[#allocation19 + $0x50] sm:$0xf]
        %v1874 = vld [vmem:[#allocation19 + $0x54] sm:$0xf]
        %v1875 = vld [vmem:[#allocation19 + $0x58] sm:$0xf]
        %v1876 = vld [vmem:[#allocation19 + $0x5c] sm:$0xf]
        %v1877 = vld [vmem:[#allocation19 + $0x60] sm:$0xf]
        %v1878 = vld [vmem:[#allocation19 + $0x64] sm:$0xf]
        %v1879 = vld [vmem:[#allocation19 + $0x68] sm:$0xf]
        %v1880 = vld [vmem:[#allocation19 + $0x6c] sm:$0xf]
        %v1881 = vld [vmem:[#allocation19 + $0x70] sm:$0xf]
        %v1882 = vld [vmem:[#allocation19 + $0x74] sm:$0xf]
        %v1883 = vld [vmem:[#allocation19 + $0x78] sm:$0xf]
        %v1884 = vld [vmem:[#allocation19 + $0x7c] sm:$0xf]
        %v1885 = vld [vmem:[%s15] sm:$0x1]
        %v1887 = vperm.slane %v1885, 0
        %v1921 = vunpack.c.l.b16 %v1853
        %v1922 = vunpack.c.l.b16 %v1854
        %v1923 = vunpack.c.l.b16 %v1855
        %v1924 = vunpack.c.l.b16 %v1856
        %v1925 = vunpack.c.l.b16 %v1857
        %v1926 = vunpack.c.l.b16 %v1858
        %v1927 = vunpack.c.l.b16 %v1859
        %v1928 = vunpack.c.l.b16 %v1860
        %v1929 = vunpack.c.l.b16 %v1861
        %v1930 = vunpack.c.l.b16 %v1862
        %v1931 = vunpack.c.l.b16 %v1863
        %v1932 = vunpack.c.l.b16 %v1864
        %v1933 = vunpack.c.l.b16 %v1865
        %v1934 = vunpack.c.l.b16 %v1866
        %v1935 = vunpack.c.l.b16 %v1867
        %v1936 = vunpack.c.l.b16 %v1868
        %v1937 = vunpack.c.l.b16 %v1869
        %v1938 = vunpack.c.l.b16 %v1870
        %v1939 = vunpack.c.l.b16 %v1871
        %v1940 = vunpack.c.l.b16 %v1872
        %v1941 = vunpack.c.l.b16 %v1873
        %v1942 = vunpack.c.l.b16 %v1874
        %v1943 = vunpack.c.l.b16 %v1875
        %v1944 = vunpack.c.l.b16 %v1876
        %v1945 = vunpack.c.l.b16 %v1877
        %v1946 = vunpack.c.l.b16 %v1878
        %v1947 = vunpack.c.l.b16 %v1879
        %v1948 = vunpack.c.l.b16 %v1880
        %v1949 = vunpack.c.l.b16 %v1881
        %v1950 = vunpack.c.l.b16 %v1882
        %v1951 = vunpack.c.l.b16 %v1883
        %v1952 = vunpack.c.l.b16 %v1884
        %v1953 = vpack.c.b16 %v1922, %v1921
        %v1954 = vpack.c.b16 %v1924, %v1923
        %v1955 = vpack.c.b16 %v1926, %v1925
        %v1956 = vpack.c.b16 %v1928, %v1927
        %v1957 = vpack.c.b16 %v1930, %v1929
        %v1958 = vpack.c.b16 %v1932, %v1931
        %v1959 = vpack.c.b16 %v1934, %v1933
        %v1960 = vpack.c.b16 %v1936, %v1935
        %v1961 = vpack.c.b16 %v1938, %v1937
        %v1962 = vpack.c.b16 %v1940, %v1939
        %v1963 = vpack.c.b16 %v1942, %v1941
        %v1964 = vpack.c.b16 %v1944, %v1943
        %v1965 = vpack.c.b16 %v1946, %v1945
        %v1966 = vpack.c.b16 %v1948, %v1947
        %v1967 = vpack.c.b16 %v1950, %v1949
        %v1968 = vpack.c.b16 %v1952, %v1951
        %1985 = vmatpush.bf16.msra.mxu0 %v1960
        %1986 = vmatpush.bf16.msra.mxu0 %v1959
        %1987 = vmatpush.bf16.msra.mxu0 %v1958
        %1988 = vmatpush.bf16.msra.mxu0 %v1957
        %1989 = vmatpush.bf16.msra.mxu0 %v1956
        %1990 = vmatpush.bf16.msra.mxu0 %v1955
        %1991 = vmatpush.bf16.msra.mxu0 %v1954
        %1992 = vmatpush.bf16.msra.mxu0 %v1953
        %1993 = vmatmul.bf16.gmra.mxu0 %v1851
        %v1994 = vpop.f32.mrf.mxu0
        %v1995 = vadd.f32 %v1887, %v1994
        %v1996 = vpop.f32.mrf.mxu0
        %1997 = vdwg.mxu0
        %1998 = vmatpush.bf16.msra.mxu0 %v1968
        %1999 = vmatpush.bf16.msra.mxu0 %v1967
        %2000 = vmatpush.bf16.msra.mxu0 %v1966
        %2001 = vmatpush.bf16.msra.mxu0 %v1965
        %2002 = vmatpush.bf16.msra.mxu0 %v1964
        %2003 = vmatpush.bf16.msra.mxu0 %v1963
        %2004 = vmatpush.bf16.msra.mxu0 %v1962
        %2005 = vmatpush.bf16.msra.mxu0 %v1961
        %2006 = vmatmul.bf16.gmra.mxu0 %v1852
        %v2007 = vpop.f32.mrf.mxu0
        %v2008 = vadd.f32 %v1995, %v2007
        %v2009 = vpop.f32.mrf.mxu0
        %2010 = vdwg.mxu0
        %v2011 = vadd.f32 %v2008, %v1689
        %2012 = vst [vmem:[%s660] sm:$0xff] %v2011
        %s2013 = sand.u32 %s387, 1
        %s2014 = scalar_lea.sflag [#allocation7], %s2013
        %s2015 = sand.u32 %s387, 1
        %s2016 = smul.addr %s2015, 8
        %s2017 = scalar_lea.vmem [#allocation20], %s2016
        // Predicated region
        $region121: #{tpu_custom_call.1} parent=79 // pred_check
          %p2018 = pneg %p397
        $region122: #{tpu_custom_call.1} parent=79 // pred_check_branch
          %2020 = sbr.rel (%p2018) target = $region124
        $region123: #{tpu_custom_call.1} parent=79 // pred_region
          %2022 = vsyncadd %s2014, 0
          %s2023 = sadd.s32 %s50, %s49
          %s2024 = smul.addr %s2023, 8
          %s2025 = scalar_lea.hbm %s16, %s2024
          %s2027 = sshll.u32 %s2017, 4
          %s2028 = int_to_ptr.vmem [resolvable:$true] %s2027
          %s2029 = sshll.u32 %s2025, 4
          %s2030 = int_to_ptr.hbm [resolvable:$true] %s2029
          %2032 = dma.vmem_to_hbm [thread:$0]  %s2028, 128, %s2030, %s2014
        $region124: #{tpu_custom_call.1} parent=79 // pred_fallthru
          _
      $region80: #{tpu_custom_call.1} parent=5 // pred_fallthru
        _
      %p2033 = scmp.le.s32.totalorder 2, %s40
      // Predicated region
      $region125: #{tpu_custom_call.1} parent=5 // pred_check
        %p2034 = pneg %p2033
      $region126: #{tpu_custom_call.1} parent=5 // pred_check_branch
        %2036 = sbr.rel (%p2034) target = $region128
      $region127: #{tpu_custom_call.1} parent=5 // pred_region
        %s2037 = ssub.s32 %s40, 2
        // Predicated region
        $region129: #{tpu_custom_call.1} parent=127 // pred_check
          %p2038 = pneg %p403
        $region130: #{tpu_custom_call.1} parent=127 // pred_check_branch
          %2040 = sbr.rel (%p2038) target = $region132
        $region131: #{tpu_custom_call.1} parent=127 // pred_region
          %s2041 = sand.u32 %s388, 1
          %s2042 = scalar_lea.sflag [#allocation7], %s2041
          %s2043 = sand.u32 %s388, 1
          %s2044 = smul.addr %s2043, 8
          %s2045 = scalar_lea.vmem [#allocation20], %s2044
          %2047 = dma.done %s2042, 128
        $region132: #{tpu_custom_call.1} parent=127 // pred_fallthru
          _
      $region128: #{tpu_custom_call.1} parent=5 // pred_fallthru
        _
    $region6: #{tpu_custom_call.1} parent=1 // loop_footer
      %s44 = sadd.s32 1, %s40
    $region7: #{tpu_custom_call.1} parent=1 // loop_footer_branch
      %39 = sbr.rel target = $region3
    $region8: #{tpu_custom_call.1} parent=1 // loop_exit
      _
    %2048 = vsyncpa [#allocation6], 1
    %s2049 = scalar_lea.sflag [#allocation6], 1
    %2050 = vsyncpa %s2049, 1
    %2051 = vsyncpa [#allocation9], 1
    %2052 = vsyncpa [#allocation12], 1
    %2053 = vsyncpa [#allocation15], 1
    %2054 = vsyncpa [#allocation18], 1
    %2055 = vsyncpa [#allocation7], 1
    %s2056 = scalar_lea.sflag [#allocation7], 1
    %2057 = vsyncpa %s2056, 1

// kernel: tpu_custom_call.1
$region0: #{tpu_custom_call.1}
  #allocation0 [shape = 'u32[]', space=smem, size = 0x4, offset = 0x4, fixed_abs, tag = 'smem constant byte address 0x4 - core index']
  #allocation1 [shape = 'u32[72,128]{1,0:T(1,128)}', space=vmem, size = 0x9000, scoped, tag = 'internal scratch']
  #allocation2 [shape = 'bf16[8,256]{1,0:T(8,128)(2,1)}', space=vmem, size = 0x1000, scoped, tag = 'scratch operand']
  #allocation3 [shape = 's32[1]{0}', space=sflag, size = 0x4, scoped, tag = 'scoped memory for tpu_custom_call.1']
  #allocation4 [shape = 'u8[512]{0}', space=smem, size = 0x200, scoped, tag = 'prefetched SMEM operand 0']
  %s0 = inlined_call_operand.hbm [shape: s32[2], index: 0, kind: input, shape index: {}]
  %s1 = inlined_call_operand.hbm [shape: f32[2,8,128], index: 1, kind: input, shape index: {}]
  %s2 = inlined_call_operand.hbm [shape: f32[1,128], index: 2, kind: input, shape index: {}]
  %s3 = inlined_call_operand.hbm [shape: f32[1,128], index: 3, kind: input, shape index: {}]
  %s4 = inlined_call_operand.hbm [shape: bf16[128,128], index: 4, kind: input, shape index: {}]
  %s5 = inlined_call_operand.hbm [shape: f32[1,128], index: 5, kind: input, shape index: {}]
  %s6 = inlined_call_operand.hbm [shape: bf16[128,256], index: 6, kind: input, shape index: {}]
  %s7 = inlined_call_operand.vmem [shape: f32[1,256], index: 7, kind: input, shape index: {}]
  %s8 = inlined_call_operand.hbm [shape: bf16[128,128], index: 8, kind: input, shape index: {}]
  %s9 = inlined_call_operand.vmem [shape: f32[1,128], index: 9, kind: input, shape index: {}]
  %s10 = inlined_call_operand.vmem [shape: f32[1,128], index: 10, kind: input, shape index: {}]
  %s11 = inlined_call_operand.vmem [shape: f32[1,128], index: 11, kind: input, shape index: {}]
  %s12 = inlined_call_operand.hbm [shape: bf16[128,256], index: 12, kind: input, shape index: {}]
  %s13 = inlined_call_operand.vmem [shape: f32[1,256], index: 13, kind: input, shape index: {}]
  %s14 = inlined_call_operand.hbm [shape: bf16[256,128], index: 14, kind: input, shape index: {}]
  %s15 = inlined_call_operand.vmem [shape: f32[1,128], index: 15, kind: input, shape index: {}]
  %s16 = inlined_call_operand.hbm [shape: f32[2,8,128], index: 16, kind: output, shape index: {}]
  %s17 = sld [smem:[#allocation0]]
  $region133: #{tpu_custom_call.1} parent=0
    _
  %s19 = ssub.s32 1, %s17
  %s20 = scalar_select 0, %s19, %s17
  %s22 = sshll.u32 %s0, 4
  %s23 = int_to_ptr.hbm [resolvable:$true] %s22
  %25 = dma.hbm_to_smem %s23, 16, [#allocation4], [#allocation3]
  %27 = dma.done [#allocation3], 16
  %28 = sfence
  $region1: #{tpu_custom_call.1} parent=0
    #allocation5 [shape = 'u8[8192]{0}', space=vmem, size = 0x2000, scoped, tag = 'input window, operand 1']
    #allocation6 [shape = 's32[2]{0}', space=sflag, size = 0x8, scoped, tag = 'scoped memory for tpu_custom_call.1']
    #allocation7 [shape = 's32[2]{0}', space=sflag, size = 0x8, scoped, tag = 'scoped memory for tpu_custom_call.1']
    #allocation8 [shape = 'u8[512]{0}', space=vmem, size = 0x400, scoped, tag = 'input window, operand 2, single buffered']
    #allocation9 [shape = 's32[1]{0}', space=sflag, size = 0x4, scoped, tag = 'scoped memory for tpu_custom_call.1']
    #allocation10 [shape = 'u8[512]{0}', space=vmem, size = 0x400, scoped, tag = 'input window, operand 3, single buffered']
    #allocation11 [shape = 'u8[32768]{0}', space=vmem, size = 0x8000, scoped, tag = 'input window, operand 4, single buffered']
    #allocation12 [shape = 's32[1]{0}', space=sflag, size = 0x4, scoped, tag = 'scoped memory for tpu_custom_call.1']
    #allocation13 [shape = 'u8[512]{0}', space=vmem, size = 0x400, scoped, tag = 'input window, operand 5, single buffered']
    #allocation14 [shape = 'u8[65536]{0}', space=vmem, size = 0x10000, scoped, tag = 'input window, operand 6, single buffered']
    #allocation15 [shape = 's32[1]{0}', space=sflag, size = 0x4, scoped, tag = 'scoped memory for tpu_custom_call.1']
    #allocation16 [shape = 'u8[32768]{0}', space=vmem, size = 0x8000, scoped, tag = 'input window, operand 8, single buffered']
    #allocation17 [shape = 'u8[65536]{0}', space=vmem, size = 0x10000, scoped, tag = 'input window, operand 12, single buffered']
    #allocation18 [shape = 's32[1]{0}', space=sflag, size = 0x4, scoped, tag = 'scoped memory for tpu_custom_call.1']
    #allocation19 [shape = 'u8[65536]{0}', space=vmem, size = 0x10000, scoped, tag = 'input window, operand 14, single buffered']
    #allocation20 [shape = 'u8[8192]{0}', space=vmem, size = 0x2000, scoped, tag = 'output window, operand 0']
    %29 = vsyncpa [#allocation6], 0
    %s30 = scalar_lea.sflag [#allocation6], 1
    %31 = vsyncpa %s30, 0
    %32 = vsyncpa [#allocation9], 0
    %33 = vsyncpa [#allocation12], 0
    %34 = vsyncpa [#allocation15], 0
    %35 = vsyncpa [#allocation18], 0
    %36 = vsyncpa [#allocation7], 0
    %s37 = scalar_lea.sflag [#allocation7], 1
    %38 = vsyncpa %s37, 0
    loop: start=0, step=1, limit=4
    $region2: #{tpu_custom_call.1} parent=1 // loop_pre_header
      _
    $region3: #{tpu_custom_call.1} parent=1 // loop_header
      %s40 = sphi 0, %s44
      %p41 = scmp.ge.s32.totalorder %s40, 4
      %s47 = sphi 0, %s59
      %s48 = sphi 0, %s55
      %s49 = sphi 0, %s47
      %s50 = sphi 0, %s48
      %s51 = sphi 0, %s49
      %s52 = sphi 0, %s50
      %s62 = sphi 0, %s64
      %s65 = sphi 0, %s62
      %s66 = sphi 0, %s65
      %s82 = sphi 0, %s66
      %s86 = sphi 0, %s86
      %s88 = sphi 0, %s86
      %s89 = sphi 0, %s88
      %s103 = sphi 0, %s89
      %s107 = sphi 0, %s107
      %s109 = sphi 0, %s107
      %s110 = sphi 0, %s109
      %s124 = sphi 0, %s110
      %s128 = sphi 0, %s128
      %s130 = sphi 0, %s128
      %s131 = sphi 0, %s130
      %s145 = sphi 0, %s131
      %s149 = sphi 0, %s149
      %s151 = sphi 0, %s149
      %s152 = sphi 0, %s151
      %s166 = sphi 0, %s152
      %s170 = sphi 0, %s170
      %s172 = sphi 0, %s170
      %s173 = sphi 0, %s172
      %s187 = sphi 0, %s173
      %s191 = sphi 0, %s191
      %s193 = sphi 0, %s191
      %s194 = sphi 0, %s193
      %s208 = sphi 0, %s194
      %s212 = sphi 0, %s212
      %s214 = sphi 0, %s212
      %s215 = sphi 0, %s214
      %s229 = sphi 0, %s215
      %s233 = sphi 0, %s233
      %s235 = sphi 0, %s233
      %s236 = sphi 0, %s235
      %s250 = sphi 0, %s236
      %s254 = sphi 0, %s254
      %s256 = sphi 0, %s254
      %s257 = sphi 0, %s256
      %s271 = sphi 0, %s257
      %s275 = sphi 0, %s275
      %s277 = sphi 0, %s275
      %s278 = sphi 0, %s277
      %s292 = sphi 0, %s278
      %s296 = sphi 0, %s296
      %s298 = sphi 0, %s296
      %s299 = sphi 0, %s298
      %s313 = sphi 0, %s299
      %s317 = sphi 0, %s317
      %s319 = sphi 0, %s317
      %s320 = sphi 0, %s319
      %s334 = sphi 0, %s320
      %s338 = sphi 0, %s338
      %s340 = sphi 0, %s338
      %s341 = sphi 0, %s340
      %s355 = sphi 0, %s341
      %s359 = sphi 0, %s359
      %s361 = sphi 0, %s359
      %s362 = sphi 0, %s361
      %s376 = sphi 0, %s362
      %s384 = sphi 0, %s386
      %s387 = sphi 0, %s384
      %s388 = sphi 0, %s387
      %s404 = sphi 0, %s388
    $region4: #{tpu_custom_call.1} parent=1 // loop_header_branch
      %43 = sbr.rel (%p41) target = $region8
    $region5: #{tpu_custom_call.1} parent=1 // loop_body
      %s45 = ssub.s32 %s40, 1
      %s46 = ssub.s32 %s40, 2
      %s53 = sadd.s32 1, %s48
      %p54 = scmp.ge.s32.totalorder %s53, 1
      %s55 = scalar_select %p54, 0, %s53
      %s56 = sadd.s32 1, %s47
      %s57 = scalar_select %p54, %s56, %s47
      %p58 = scmp.ge.s32.totalorder %s57, 2
      %s59 = scalar_select %p58, 0, %s57
      %s60 = ssub.s32 %s47, %s59
      %p61 = scmp.eq.s32.totalorder %s60, 0
      %s63 = sadd.s32 %s62, 1
      %s64 = scalar_select %p61, %s62, %s63
      %p67 = pneg %p61
      %p68 = scmp.eq.s32.totalorder %s40, 1
      %p69 = por %p67, %p68
      %p70 = scmp.ne.s32.totalorder %s62, %s65
      %p71 = scmp.eq.s32.totalorder %s40, 0
      %p72 = por %p70, %p71
      %p73 = scmp.ne.s32.totalorder %s62, %s65
      %p74 = scmp.eq.s32.totalorder %s45, 1
      %p75 = por %p73, %p74
      %p76 = scmp.ne.s32.totalorder %s65, %s66
      %p77 = scmp.eq.s32.totalorder %s45, 0
      %p78 = por %p76, %p77
      %p79 = scmp.ne.s32.totalorder %s65, %s66
      %p80 = scmp.eq.s32.totalorder %s46, 1
      %p81 = por %p79, %p80
      %p83 = scmp.ne.s32.totalorder %s66, %s82
      %p84 = scmp.eq.s32.totalorder %s46, 0
      %p85 = por %p83, %p84
      %s87 = sadd.s32 %s86, 1
      %p90 = scmp.eq.s32.totalorder %s40, 1
      %p91 = scmp.ne.s32.totalorder %s86, %s88
      %p92 = scmp.eq.s32.totalorder %s40, 0
      %p93 = por %p91, %p92
      %p94 = scmp.ne.s32.totalorder %s86, %s88
      %p95 = scmp.eq.s32.totalorder %s45, 1
      %p96 = por %p94, %p95
      %p97 = scmp.ne.s32.totalorder %s88, %s89
      %p98 = scmp.eq.s32.totalorder %s45, 0
      %p99 = por %p97, %p98
      %p100 = scmp.ne.s32.totalorder %s88, %s89
      %p101 = scmp.eq.s32.totalorder %s46, 1
      %p102 = por %p100, %p101
      %p104 = scmp.ne.s32.totalorder %s89, %s103
      %p105 = scmp.eq.s32.totalorder %s46, 0
      %p106 = por %p104, %p105
      %s108 = sadd.s32 %s107, 1
      %p111 = scmp.eq.s32.totalorder %s40, 1
      %p112 = scmp.ne.s32.totalorder %s107, %s109
      %p113 = scmp.eq.s32.totalorder %s40, 0
      %p114 = por %p112, %p113
      %p115 = scmp.ne.s32.totalorder %s107, %s109
      %p116 = scmp.eq.s32.totalorder %s45, 1
      %p117 = por %p115, %p116
      %p118 = scmp.ne.s32.totalorder %s109, %s110
      %p119 = scmp.eq.s32.totalorder %s45, 0
      %p120 = por %p118, %p119
      %p121 = scmp.ne.s32.totalorder %s109, %s110
      %p122 = scmp.eq.s32.totalorder %s46, 1
      %p123 = por %p121, %p122
      %p125 = scmp.ne.s32.totalorder %s110, %s124
      %p126 = scmp.eq.s32.totalorder %s46, 0
      %p127 = por %p125, %p126
      %s129 = sadd.s32 %s128, 1
      %p132 = scmp.eq.s32.totalorder %s40, 1
      %p133 = scmp.ne.s32.totalorder %s128, %s130
      %p134 = scmp.eq.s32.totalorder %s40, 0
      %p135 = por %p133, %p134
      %p136 = scmp.ne.s32.totalorder %s128, %s130
      %p137 = scmp.eq.s32.totalorder %s45, 1
      %p138 = por %p136, %p137
      %p139 = scmp.ne.s32.totalorder %s130, %s131
      %p140 = scmp.eq.s32.totalorder %s45, 0
      %p141 = por %p139, %p140
      %p142 = scmp.ne.s32.totalorder %s130, %s131
      %p143 = scmp.eq.s32.totalorder %s46, 1
      %p144 = por %p142, %p143
      %p146 = scmp.ne.s32.totalorder %s131, %s145
      %p147 = scmp.eq.s32.totalorder %s46, 0
      %p148 = por %p146, %p147
      %s150 = sadd.s32 %s149, 1
      %p153 = scmp.eq.s32.totalorder %s40, 1
      %p154 = scmp.ne.s32.totalorder %s149, %s151
      %p155 = scmp.eq.s32.totalorder %s40, 0
      %p156 = por %p154, %p155
      %p157 = scmp.ne.s32.totalorder %s149, %s151
      %p158 = scmp.eq.s32.totalorder %s45, 1
      %p159 = por %p157, %p158
      %p160 = scmp.ne.s32.totalorder %s151, %s152
      %p161 = scmp.eq.s32.totalorder %s45, 0
      %p162 = por %p160, %p161
      %p163 = scmp.ne.s32.totalorder %s151, %s152
      %p164 = scmp.eq.s32.totalorder %s46, 1
      %p165 = por %p163, %p164
      %p167 = scmp.ne.s32.totalorder %s152, %s166
      %p168 = scmp.eq.s32.totalorder %s46, 0
      %p169 = por %p167, %p168
      %s171 = sadd.s32 %s170, 1
      %p174 = scmp.eq.s32.totalorder %s40, 1
      %p175 = scmp.ne.s32.totalorder %s170, %s172
      %p176 = scmp.eq.s32.totalorder %s40, 0
      %p177 = por %p175, %p176
      %p178 = scmp.ne.s32.totalorder %s170, %s172
      %p179 = scmp.eq.s32.totalorder %s45, 1
      %p180 = por %p178, %p179
      %p181 = scmp.ne.s32.totalorder %s172, %s173
      %p182 = scmp.eq.s32.totalorder %s45, 0
      %p183 = por %p181, %p182
      %p184 = scmp.ne.s32.totalorder %s172, %s173
      %p185 = scmp.eq.s32.totalorder %s46, 1
      %p186 = por %p184, %p185
      %p188 = scmp.ne.s32.totalorder %s173, %s187
      %p189 = scmp.eq.s32.totalorder %s46, 0
      %p190 = por %p188, %p189
      %s192 = sadd.s32 %s191, 1
      %p195 = scmp.eq.s32.totalorder %s40, 1
      %p196 = scmp.ne.s32.totalorder %s191, %s193
      %p197 = scmp.eq.s32.totalorder %s40, 0
      %p198 = por %p196, %p197
      %p199 = scmp.ne.s32.totalorder %s191, %s193
      %p200 = scmp.eq.s32.totalorder %s45, 1
      %p201 = por %p199, %p200
      %p202 = scmp.ne.s32.totalorder %s193, %s194
      %p203 = scmp.eq.s32.totalorder %s45, 0
      %p204 = por %p202, %p203
      %p205 = scmp.ne.s32.totalorder %s193, %s194
      %p206 = scmp.eq.s32.totalorder %s46, 1
      %p207 = por %p205, %p206
      %p209 = scmp.ne.s32.totalorder %s194, %s208
      %p210 = scmp.eq.s32.totalorder %s46, 0
      %p211 = por %p209, %p210
      %s213 = sadd.s32 %s212, 1
      %p216 = scmp.eq.s32.totalorder %s40, 1
      %p217 = scmp.ne.s32.totalorder %s212, %s214
      %p218 = scmp.eq.s32.totalorder %s40, 0
      %p219 = por %p217, %p218
      %p220 = scmp.ne.s32.totalorder %s212, %s214
      %p221 = scmp.eq.s32.totalorder %s45, 1
      %p222 = por %p220, %p221
      %p223 = scmp.ne.s32.totalorder %s214, %s215
      %p224 = scmp.eq.s32.totalorder %s45, 0
      %p225 = por %p223, %p224
      %p226 = scmp.ne.s32.totalorder %s214, %s215
      %p227 = scmp.eq.s32.totalorder %s46, 1
      %p228 = por %p226, %p227
      %p230 = scmp.ne.s32.totalorder %s215, %s229
      %p231 = scmp.eq.s32.totalorder %s46, 0
      %p232 = por %p230, %p231
      %s234 = sadd.s32 %s233, 1
      %p237 = scmp.eq.s32.totalorder %s40, 1
      %p238 = scmp.ne.s32.totalorder %s233, %s235
      %p239 = scmp.eq.s32.totalorder %s40, 0
      %p240 = por %p238, %p239
      %p241 = scmp.ne.s32.totalorder %s233, %s235
      %p242 = scmp.eq.s32.totalorder %s45, 1
      %p243 = por %p241, %p242
      %p244 = scmp.ne.s32.totalorder %s235, %s236
      %p245 = scmp.eq.s32.totalorder %s45, 0
      %p246 = por %p244, %p245
      %p247 = scmp.ne.s32.totalorder %s235, %s236
      %p248 = scmp.eq.s32.totalorder %s46, 1
      %p249 = por %p247, %p248
      %p251 = scmp.ne.s32.totalorder %s236, %s250
      %p252 = scmp.eq.s32.totalorder %s46, 0
      %p253 = por %p251, %p252
      %s255 = sadd.s32 %s254, 1
      %p258 = scmp.eq.s32.totalorder %s40, 1
      %p259 = scmp.ne.s32.totalorder %s254, %s256
      %p260 = scmp.eq.s32.totalorder %s40, 0
      %p261 = por %p259, %p260
      %p262 = scmp.ne.s32.totalorder %s254, %s256
      %p263 = scmp.eq.s32.totalorder %s45, 1
      %p264 = por %p262, %p263
      %p265 = scmp.ne.s32.totalorder %s256, %s257
      %p266 = scmp.eq.s32.totalorder %s45, 0
      %p267 = por %p265, %p266
      %p268 = scmp.ne.s32.totalorder %s256, %s257
      %p269 = scmp.eq.s32.totalorder %s46, 1
      %p270 = por %p268, %p269
      %p272 = scmp.ne.s32.totalorder %s257, %s271
      %p273 = scmp.eq.s32.totalorder %s46, 0
      %p274 = por %p272, %p273
      %s276 = sadd.s32 %s275, 1
      %p279 = scmp.eq.s32.totalorder %s40, 1
      %p280 = scmp.ne.s32.totalorder %s275, %s277
      %p281 = scmp.eq.s32.totalorder %s40, 0
      %p282 = por %p280, %p281
      %p283 = scmp.ne.s32.totalorder %s275, %s277
      %p284 = scmp.eq.s32.totalorder %s45, 1
      %p285 = por %p283, %p284
      %p286 = scmp.ne.s32.totalorder %s277, %s278
      %p287 = scmp.eq.s32.totalorder %s45, 0
      %p288 = por %p286, %p287
      %p289 = scmp.ne.s32.totalorder %s277, %s278
      %p290 = scmp.eq.s32.totalorder %s46, 1
      %p291 = por %p289, %p290
      %p293 = scmp.ne.s32.totalorder %s278, %s292
      %p294 = scmp.eq.s32.totalorder %s46, 0
      %p295 = por %p293, %p294
      %s297 = sadd.s32 %s296, 1
      %p300 = scmp.eq.s32.totalorder %s40, 1
      %p301 = scmp.ne.s32.totalorder %s296, %s298
      %p302 = scmp.eq.s32.totalorder %s40, 0
      %p303 = por %p301, %p302
      %p304 = scmp.ne.s32.totalorder %s296, %s298
      %p305 = scmp.eq.s32.totalorder %s45, 1
      %p306 = por %p304, %p305
      %p307 = scmp.ne.s32.totalorder %s298, %s299
      %p308 = scmp.eq.s32.totalorder %s45, 0
      %p309 = por %p307, %p308
      %p310 = scmp.ne.s32.totalorder %s298, %s299
      %p311 = scmp.eq.s32.totalorder %s46, 1
      %p312 = por %p310, %p311
      %p314 = scmp.ne.s32.totalorder %s299, %s313
      %p315 = scmp.eq.s32.totalorder %s46, 0
      %p316 = por %p314, %p315
      %s318 = sadd.s32 %s317, 1
      %p321 = scmp.eq.s32.totalorder %s40, 1
      %p322 = scmp.ne.s32.totalorder %s317, %s319
      %p323 = scmp.eq.s32.totalorder %s40, 0
      %p324 = por %p322, %p323
      %p325 = scmp.ne.s32.totalorder %s317, %s319
      %p326 = scmp.eq.s32.totalorder %s45, 1
      %p327 = por %p325, %p326
      %p328 = scmp.ne.s32.totalorder %s319, %s320
      %p329 = scmp.eq.s32.totalorder %s45, 0
      %p330 = por %p328, %p329
      %p331 = scmp.ne.s32.totalorder %s319, %s320
      %p332 = scmp.eq.s32.totalorder %s46, 1
      %p333 = por %p331, %p332
      %p335 = scmp.ne.s32.totalorder %s320, %s334
      %p336 = scmp.eq.s32.totalorder %s46, 0
      %p337 = por %p335, %p336
      %s339 = sadd.s32 %s338, 1
      %p342 = scmp.eq.s32.totalorder %s40, 1
      %p343 = scmp.ne.s32.totalorder %s338, %s340
      %p344 = scmp.eq.s32.totalorder %s40, 0
      %p345 = por %p343, %p344
      %p346 = scmp.ne.s32.totalorder %s338, %s340
      %p347 = scmp.eq.s32.totalorder %s45, 1
      %p348 = por %p346, %p347
      %p349 = scmp.ne.s32.totalorder %s340, %s341
      %p350 = scmp.eq.s32.totalorder %s45, 0
      %p351 = por %p349, %p350
      %p352 = scmp.ne.s32.totalorder %s340, %s341
      %p353 = scmp.eq.s32.totalorder %s46, 1
      %p354 = por %p352, %p353
      %p356 = scmp.ne.s32.totalorder %s341, %s355
      %p357 = scmp.eq.s32.totalorder %s46, 0
      %p358 = por %p356, %p357
      %s360 = sadd.s32 %s359, 1
      %p363 = scmp.eq.s32.totalorder %s40, 1
      %p364 = scmp.ne.s32.totalorder %s359, %s361
      %p365 = scmp.eq.s32.totalorder %s40, 0
      %p366 = por %p364, %p365
      %p367 = scmp.ne.s32.totalorder %s359, %s361
      %p368 = scmp.eq.s32.totalorder %s45, 1
      %p369 = por %p367, %p368
      %p370 = scmp.ne.s32.totalorder %s361, %s362
      %p371 = scmp.eq.s32.totalorder %s45, 0
      %p372 = por %p370, %p371
      %p373 = scmp.ne.s32.totalorder %s361, %s362
      %p374 = scmp.eq.s32.totalorder %s46, 1
      %p375 = por %p373, %p374
      %p377 = scmp.ne.s32.totalorder %s362, %s376
      %p378 = scmp.eq.s32.totalorder %s46, 0
      %p379 = por %p377, %p378
      %s380 = ssub.s32 %s47, %s59
      %s381 = ssub.s32 %s48, %s55
      %s382 = sor.u32 %s380, %s381
      %p383 = scmp.eq.s32.totalorder %s382, 0
      %s385 = sadd.s32 %s384, 1
      %s386 = scalar_select %p383, %s384, %s385
      %p389 = pneg %p383
      %p390 = scmp.eq.s32.totalorder %s40, 1
      %p391 = por %p389, %p390
      %p392 = scmp.ne.s32.totalorder %s384, %s387
      %p393 = scmp.eq.s32.totalorder %s40, 0
      %p394 = por %p392, %p393
      %p395 = scmp.ne.s32.totalorder %s384, %s387
      %p396 = scmp.eq.s32.totalorder %s45, 1
      %p397 = por %p395, %p396
      %p398 = scmp.ne.s32.totalorder %s387, %s388
      %p399 = scmp.eq.s32.totalorder %s45, 0
      %p400 = por %p398, %p399
      %p401 = scmp.ne.s32.totalorder %s387, %s388
      %p402 = scmp.eq.s32.totalorder %s46, 1
      %p403 = por %p401, %p402
      %p405 = scmp.ne.s32.totalorder %s388, %s404
      %p406 = scmp.eq.s32.totalorder %s46, 0
      %p407 = por %p405, %p406
      %p408 = scmp.le.s32.totalorder 1, %s40
      %p409 = scmp.lt.s32.totalorder %s40, 3
      %p410 = pnand %p408, %p409
      %p411 = pneg %p410
      // Predicated region
      $region9: #{tpu_custom_call.1} parent=5 // pred_check
        _
      $region10: #{tpu_custom_call.1} parent=5 // pred_check_branch
        %413 = sbr.rel (%p410) target = $region12
      $region11: #{tpu_custom_call.1} parent=5 // pred_region
        %s414 = ssub.s32 %s40, 1
        // Predicated region
        $region13: #{tpu_custom_call.1} parent=11 // pred_check
          %p415 = pneg %p99
        $region14: #{tpu_custom_call.1} parent=11 // pred_check_branch
          %417 = sbr.rel (%p415) target = $region16
        $region15: #{tpu_custom_call.1} parent=11 // pred_region
          %419 = vsyncadd [#allocation9], 0
          %s421 = sshll.u32 %s2, 4
          %s422 = int_to_ptr.hbm [resolvable:$true] %s421
          %s423 = sshll.u32 [#allocation8], 4
          %s424 = int_to_ptr.vmem [resolvable:$true] %s423
          %426 = dma.hbm_to_vmem [thread:$0]  %s422, 16, %s424, [#allocation9]
        $region16: #{tpu_custom_call.1} parent=11 // pred_fallthru
          _
        // Predicated region
        $region17: #{tpu_custom_call.1} parent=11 // pred_check
          %p427 = pneg %p120
        $region18: #{tpu_custom_call.1} parent=11 // pred_check_branch
          %429 = sbr.rel (%p427) target = $region20
        $region19: #{tpu_custom_call.1} parent=11 // pred_region
          %431 = vsyncadd [#allocation9], 0
          %s433 = sshll.u32 %s3, 4
          %s434 = int_to_ptr.hbm [resolvable:$true] %s433
          %s435 = sshll.u32 [#allocation10], 4
          %s436 = int_to_ptr.vmem [resolvable:$true] %s435
          %438 = dma.hbm_to_vmem [thread:$0]  %s434, 16, %s436, [#allocation9]
        $region20: #{tpu_custom_call.1} parent=11 // pred_fallthru
          _
        // Predicated region
        $region21: #{tpu_custom_call.1} parent=11 // pred_check
          %p439 = pneg %p141
        $region22: #{tpu_custom_call.1} parent=11 // pred_check_branch
          %441 = sbr.rel (%p439) target = $region24
        $region23: #{tpu_custom_call.1} parent=11 // pred_region
          %443 = vsyncadd [#allocation12], 0
          %s444 = sshll.u32 %s4, 4
          %s445 = int_to_ptr.hbm [resolvable:$true] %s444
          %s446 = sshll.u32 [#allocation11], 4
          %s447 = int_to_ptr.vmem [resolvable:$true] %s446
          %452 = dma.hbm_to_vmem [thread:$0]  %s445, 1024, %s447, [#allocation12], 64, 64, 4
        $region24: #{tpu_custom_call.1} parent=11 // pred_fallthru
          _
        // Predicated region
        $region25: #{tpu_custom_call.1} parent=11 // pred_check
          %p453 = pneg %p162
        $region26: #{tpu_custom_call.1} parent=11 // pred_check_branch
          %455 = sbr.rel (%p453) target = $region28
        $region27: #{tpu_custom_call.1} parent=11 // pred_region
          %457 = vsyncadd [#allocation12], 0
          %s459 = sshll.u32 %s5, 4
          %s460 = int_to_ptr.hbm [resolvable:$true] %s459
          %s461 = sshll.u32 [#allocation13], 4
          %s462 = int_to_ptr.vmem [resolvable:$true] %s461
          %464 = dma.hbm_to_vmem [thread:$0]  %s460, 16, %s462, [#allocation12]
        $region28: #{tpu_custom_call.1} parent=11 // pred_fallthru
          _
        // Predicated region
        $region29: #{tpu_custom_call.1} parent=11 // pred_check
          %p465 = pneg %p183
        $region30: #{tpu_custom_call.1} parent=11 // pred_check_branch
          %467 = sbr.rel (%p465) target = $region32
        $region31: #{tpu_custom_call.1} parent=11 // pred_region
          %469 = vsyncadd [#allocation15], 0
          %s470 = sshll.u32 %s6, 4
          %s471 = int_to_ptr.hbm [resolvable:$true] %s470
          %s472 = sshll.u32 [#allocation14], 4
          %s473 = int_to_ptr.vmem [resolvable:$true] %s472
          %478 = dma.hbm_to_vmem [thread:$0]  %s471, 2048, %s473, [#allocation15], 128, 128, 8
        $region32: #{tpu_custom_call.1} parent=11 // pred_fallthru
          _
        // Predicated region
        $region33: #{tpu_custom_call.1} parent=11 // pred_check
          %p479 = pneg %p204
        $region34: #{tpu_custom_call.1} parent=11 // pred_check_branch
          %481 = sbr.rel (%p479) target = $region36
        $region35: #{tpu_custom_call.1} parent=11 // pred_region
          _
        $region36: #{tpu_custom_call.1} parent=11 // pred_fallthru
          _
        // Predicated region
        $region37: #{tpu_custom_call.1} parent=11 // pred_check
          %p482 = pneg %p225
        $region38: #{tpu_custom_call.1} parent=11 // pred_check_branch
          %484 = sbr.rel (%p482) target = $region40
        $region39: #{tpu_custom_call.1} parent=11 // pred_region
          %486 = vsyncadd [#allocation15], 0
          %s487 = sshll.u32 %s8, 4
          %s488 = int_to_ptr.hbm [resolvable:$true] %s487
          %s489 = sshll.u32 [#allocation16], 4
          %s490 = int_to_ptr.vmem [resolvable:$true] %s489
          %495 = dma.hbm_to_vmem [thread:$0]  %s488, 1024, %s490, [#allocation15], 64, 64, 4
        $region40: #{tpu_custom_call.1} parent=11 // pred_fallthru
          _
        // Predicated region
        $region41: #{tpu_custom_call.1} parent=11 // pred_check
          %p496 = pneg %p246
        $region42: #{tpu_custom_call.1} parent=11 // pred_check_branch
          %498 = sbr.rel (%p496) target = $region44
        $region43: #{tpu_custom_call.1} parent=11 // pred_region
          _
        $region44: #{tpu_custom_call.1} parent=11 // pred_fallthru
          _
        // Predicated region
        $region45: #{tpu_custom_call.1} parent=11 // pred_check
          %p499 = pneg %p267
        $region46: #{tpu_custom_call.1} parent=11 // pred_check_branch
          %501 = sbr.rel (%p499) target = $region48
        $region47: #{tpu_custom_call.1} parent=11 // pred_region
          _
        $region48: #{tpu_custom_call.1} parent=11 // pred_fallthru
          _
        // Predicated region
        $region49: #{tpu_custom_call.1} parent=11 // pred_check
          %p502 = pneg %p288
        $region50: #{tpu_custom_call.1} parent=11 // pred_check_branch
          %504 = sbr.rel (%p502) target = $region52
        $region51: #{tpu_custom_call.1} parent=11 // pred_region
          _
        $region52: #{tpu_custom_call.1} parent=11 // pred_fallthru
          _
        // Predicated region
        $region53: #{tpu_custom_call.1} parent=11 // pred_check
          %p505 = pneg %p309
        $region54: #{tpu_custom_call.1} parent=11 // pred_check_branch
          %507 = sbr.rel (%p505) target = $region56
        $region55: #{tpu_custom_call.1} parent=11 // pred_region
          %509 = vsyncadd [#allocation18], 0
          %s510 = sshll.u32 %s12, 4
          %s511 = int_to_ptr.hbm [resolvable:$true] %s510
          %s512 = sshll.u32 [#allocation17], 4
          %s513 = int_to_ptr.vmem [resolvable:$true] %s512
          %518 = dma.hbm_to_vmem [thread:$0]  %s511, 2048, %s513, [#allocation18], 128, 128, 8
        $region56: #{tpu_custom_call.1} parent=11 // pred_fallthru
          _
        // Predicated region
        $region57: #{tpu_custom_call.1} parent=11 // pred_check
          %p519 = pneg %p330
        $region58: #{tpu_custom_call.1} parent=11 // pred_check_branch
          %521 = sbr.rel (%p519) target = $region60
        $region59: #{tpu_custom_call.1} parent=11 // pred_region
          _
        $region60: #{tpu_custom_call.1} parent=11 // pred_fallthru
          _
        // Predicated region
        $region61: #{tpu_custom_call.1} parent=11 // pred_check
          %p522 = pneg %p351
        $region62: #{tpu_custom_call.1} parent=11 // pred_check_branch
          %524 = sbr.rel (%p522) target = $region64
        $region63: #{tpu_custom_call.1} parent=11 // pred_region
          %526 = vsyncadd [#allocation18], 0
          %s527 = sshll.u32 %s14, 4
          %s528 = int_to_ptr.hbm [resolvable:$true] %s527
          %s529 = sshll.u32 [#allocation19], 4
          %s530 = int_to_ptr.vmem [resolvable:$true] %s529
          %535 = dma.hbm_to_vmem [thread:$0]  %s528, 2048, %s530, [#allocation18], 64, 64, 4
        $region64: #{tpu_custom_call.1} parent=11 // pred_fallthru
          _
        // Predicated region
        $region65: #{tpu_custom_call.1} parent=11 // pred_check
          %p536 = pneg %p372
        $region66: #{tpu_custom_call.1} parent=11 // pred_check_branch
          %538 = sbr.rel (%p536) target = $region68
        $region67: #{tpu_custom_call.1} parent=11 // pred_region
          _
        $region68: #{tpu_custom_call.1} parent=11 // pred_fallthru
          _
      $region12: #{tpu_custom_call.1} parent=5 // pred_fallthru
        _
      %p539 = scmp.lt.s32.totalorder %s40, 2
      // Predicated region
      $region69: #{tpu_custom_call.1} parent=5 // pred_check
        %p540 = pneg %p539
      $region70: #{tpu_custom_call.1} parent=5 // pred_check_branch
        %542 = sbr.rel (%p540) target = $region72
      $region71: #{tpu_custom_call.1} parent=5 // pred_region
        // Predicated region
        $region73: #{tpu_custom_call.1} parent=71 // pred_check
          %p543 = pneg %p72
        $region74: #{tpu_custom_call.1} parent=71 // pred_check_branch
          %545 = sbr.rel (%p543) target = $region76
        $region75: #{tpu_custom_call.1} parent=71 // pred_region
          %s546 = sand.u32 %s62, 1
          %s547 = scalar_lea.sflag [#allocation6], %s546
          %s548 = sand.u32 %s62, 1
          %s549 = smul.addr %s548, 8
          %s550 = scalar_lea.vmem [#allocation5], %s549
          %552 = vsyncadd %s547, 0
          %s553 = smul.addr %s47, 8
          %s554 = scalar_lea.hbm %s1, %s553
          %s556 = sshll.u32 %s554, 4
          %s557 = int_to_ptr.hbm [resolvable:$true] %s556
          %s558 = sshll.u32 %s550, 4
          %s559 = int_to_ptr.vmem [resolvable:$true] %s558
          %561 = dma.hbm_to_vmem [thread:$0]  %s557, 128, %s559, %s547
        $region76: #{tpu_custom_call.1} parent=71 // pred_fallthru
          _
      $region72: #{tpu_custom_call.1} parent=5 // pred_fallthru
        _
      %p562 = scmp.le.s32.totalorder 1, %s40
      %p563 = scmp.lt.s32.totalorder %s40, 3
      %p564 = pnand %p562, %p563
      %p565 = pneg %p564
      // Predicated region
      $region77: #{tpu_custom_call.1} parent=5 // pred_check
        _
      $region78: #{tpu_custom_call.1} parent=5 // pred_check_branch
        %567 = sbr.rel (%p564) target = $region80
      $region79: #{tpu_custom_call.1} parent=5 // pred_region
        %s568 = ssub.s32 %s40, 1
        %s569 = sand.u32 %s65, 1
        %s570 = scalar_lea.sflag [#allocation6], %s569
        %s571 = sand.u32 %s65, 1
        %s572 = smul.addr %s571, 8
        %s573 = scalar_lea.vmem [#allocation5], %s572
        // Predicated region
        $region81: #{tpu_custom_call.1} parent=79 // pred_check
          %p574 = pneg %p78
        $region82: #{tpu_custom_call.1} parent=79 // pred_check_branch
          %576 = sbr.rel (%p574) target = $region84
        $region83: #{tpu_custom_call.1} parent=79 // pred_region
          %578 = dma.done %s570, 128
        $region84: #{tpu_custom_call.1} parent=79 // pred_fallthru
          _
        // Predicated region
        $region85: #{tpu_custom_call.1} parent=79 // pred_check
          %p579 = pneg %p99
        $region86: #{tpu_custom_call.1} parent=79 // pred_check_branch
          %581 = sbr.rel (%p579) target = $region88
        $region87: #{tpu_custom_call.1} parent=79 // pred_region
          %583 = dma.done [#allocation9], 16
        $region88: #{tpu_custom_call.1} parent=79 // pred_fallthru
          _
        // Predicated region
        $region89: #{tpu_custom_call.1} parent=79 // pred_check
          %p584 = pneg %p120
        $region90: #{tpu_custom_call.1} parent=79 // pred_check_branch
          %586 = sbr.rel (%p584) target = $region92
        $region91: #{tpu_custom_call.1} parent=79 // pred_region
          %588 = dma.done [#allocation9], 16
        $region92: #{tpu_custom_call.1} parent=79 // pred_fallthru
          _
        // Predicated region
        $region93: #{tpu_custom_call.1} parent=79 // pred_check
          %p589 = pneg %p141
        $region94: #{tpu_custom_call.1} parent=79 // pred_check_branch
          %591 = sbr.rel (%p589) target = $region96
        $region95: #{tpu_custom_call.1} parent=79 // pred_region
          %593 = dma.done [#allocation12], 1024
        $region96: #{tpu_custom_call.1} parent=79 // pred_fallthru
          _
        // Predicated region
        $region97: #{tpu_custom_call.1} parent=79 // pred_check
          %p594 = pneg %p162
        $region98: #{tpu_custom_call.1} parent=79 // pred_check_branch
          %596 = sbr.rel (%p594) target = $region100
        $region99: #{tpu_custom_call.1} parent=79 // pred_region
          %598 = dma.done [#allocation12], 16
        $region100: #{tpu_custom_call.1} parent=79 // pred_fallthru
          _
        // Predicated region
        $region101: #{tpu_custom_call.1} parent=79 // pred_check
          %p599 = pneg %p183
        $region102: #{tpu_custom_call.1} parent=79 // pred_check_branch
          %601 = sbr.rel (%p599) target = $region104
        $region103: #{tpu_custom_call.1} parent=79 // pred_region
          %603 = dma.done [#allocation15], 2048
        $region104: #{tpu_custom_call.1} parent=79 // pred_fallthru
          _
        // Predicated region
        $region105: #{tpu_custom_call.1} parent=79 // pred_check
          %p604 = pneg %p225
        $region106: #{tpu_custom_call.1} parent=79 // pred_check_branch
          %606 = sbr.rel (%p604) target = $region108
        $region107: #{tpu_custom_call.1} parent=79 // pred_region
          %608 = dma.done [#allocation15], 1024
        $region108: #{tpu_custom_call.1} parent=79 // pred_fallthru
          _
        // Predicated region
        $region109: #{tpu_custom_call.1} parent=79 // pred_check
          %p609 = pneg %p309
        $region110: #{tpu_custom_call.1} parent=79 // pred_check_branch
          %611 = sbr.rel (%p609) target = $region112
        $region111: #{tpu_custom_call.1} parent=79 // pred_region
          %613 = dma.done [#allocation18], 2048
        $region112: #{tpu_custom_call.1} parent=79 // pred_fallthru
          _
        // Predicated region
        $region113: #{tpu_custom_call.1} parent=79 // pred_check
          %p614 = pneg %p351
        $region114: #{tpu_custom_call.1} parent=79 // pred_check_branch
          %616 = sbr.rel (%p614) target = $region116
        $region115: #{tpu_custom_call.1} parent=79 // pred_region
          %618 = dma.done [#allocation18], 2048
        $region116: #{tpu_custom_call.1} parent=79 // pred_fallthru
          _
        %s619 = sand.u32 %s65, 1
        %s620 = scalar_lea.sflag [#allocation6], %s619
        %s621 = sand.u32 %s65, 1
        %s622 = smul.addr %s621, 8
        %s623 = scalar_lea.vmem [#allocation5], %s622
        %p624 = pneg %p78
        %p625 = pneg %p75
        %p626 = pneg %p99
        %p627 = pneg %p96
        %p628 = pneg %p120
        %p629 = pneg %p117
        %p630 = pneg %p141
        %p631 = pneg %p138
        %p632 = pneg %p162
        %p633 = pneg %p159
        %p634 = pneg %p183
        %p635 = pneg %p180
        %p636 = pneg %p204
        %p637 = pneg %p201
        %p638 = pneg %p225
        %p639 = pneg %p222
        %p640 = pneg %p246
        %p641 = pneg %p243
        %p642 = pneg %p267
        %p643 = pneg %p264
        %p644 = pneg %p288
        %p645 = pneg %p285
        %p646 = pneg %p309
        %p647 = pneg %p306
        %p648 = pneg %p330
        %p649 = pneg %p327
        %p650 = pneg %p351
        %p651 = pneg %p348
        %p652 = pneg %p372
        %p653 = pneg %p369
        %p654 = pneg %p400
        %p655 = pneg %p397
        %s656 = sand.u32 %s387, 1
        %s657 = scalar_lea.sflag [#allocation7], %s656
        %s658 = sand.u32 %s387, 1
        %s659 = smul.addr %s658, 8
        %s660 = scalar_lea.vmem [#allocation20], %s659
        %v662 = vld [vmem:[#allocation8] sm:$0x1]
        %v663 = vld [vmem:[#allocation10] sm:$0x1]
        %p664 = scmp.eq.s32.totalorder %s50, 0
        // Predicated region
        $region117: #{tpu_custom_call.1} parent=79 // pred_check
          %p665 = pneg %p664
        $region118: #{tpu_custom_call.1} parent=79 // pred_check_branch
          %667 = sbr.rel (%p665) target = $region120
        $region119: #{tpu_custom_call.1} parent=79 // pred_region
          %v668 = vld [vmem:[%s573] sm:$0xff]
          %669 = vadd.xlane.f32.xlu0 %v668
          %v670 = vpop.xlane.xlu0 %669
          %v671 = vrcp.pop 128.0
          %v672 = vmul.f32 128.0, %v671
          %v673 = vsub.f32 1.0, %v672
          %v674 = vmul.f32 %v671, %v673
          %v675 = vadd.f32 %v671, %v674
          %vm676 = vweird.f32 %v671
          %v677 = vsel %vm676, %v671, %v675
          %v678 = vmul.f32 %v670, %v677
          %v679 = vsub.f32 %v668, %v678
          %v680 = vmul.f32 %v679, %v679
          %681 = vadd.xlane.f32.xlu0 %v680
          %v682 = vpop.xlane.xlu0 %681
          %v683 = vmul.f32 %v682, %v677
          %v684 = vadd.f32 %v683, 1e-06
          %v685 = vrsqrt.pop %v684
          %v686 = vmul.f32 %v685, %v684
          %v687 = vmul.f32 %v686, %v685
          %v688 = vmul.f32 0.5, %v687
          %v689 = vsub.f32 1.5, %v688
          %v690 = vmul.f32 %v685, %v689
          %vm691 = vweird.f32 %v684
          %vm692 = vweird.f32 %v685
          %vm693 = vmor %vm691, %vm692
          %v694 = vsel %vm693, %v685, %v690
          %v695 = vmul.f32 %v679, %v694
          %v697 = vperm.slane %v662, 0
          %v699 = vmul.f32 %v695, %v697
          %v701 = vperm.slane %v663, 0
          %v703 = vadd.f32 %v699, %v701
          %v704 = vpack.c.bf16 %v703, %v703
          %v705 = vld [vmem:[#allocation14] sm:$0xff]
          %v706 = vld [vmem:[#allocation14 + $0x8] sm:$0xff]
          %v707 = vld [vmem:[#allocation14 + $0x10] sm:$0xff]
          %v708 = vld [vmem:[#allocation14 + $0x18] sm:$0xff]
          %v709 = vld [vmem:[#allocation14 + $0x20] sm:$0xff]
          %v710 = vld [vmem:[#allocation14 + $0x28] sm:$0xff]
          %v711 = vld [vmem:[#allocation14 + $0x30] sm:$0xff]
          %v712 = vld [vmem:[#allocation14 + $0x38] sm:$0xff]
          %v713 = vld [vmem:[#allocation14 + $0x40] sm:$0xff]
          %v714 = vld [vmem:[#allocation14 + $0x48] sm:$0xff]
          %v715 = vld [vmem:[#allocation14 + $0x50] sm:$0xff]
          %v716 = vld [vmem:[#allocation14 + $0x58] sm:$0xff]
          %v717 = vld [vmem:[#allocation14 + $0x60] sm:$0xff]
          %v718 = vld [vmem:[#allocation14 + $0x68] sm:$0xff]
          %v719 = vld [vmem:[#allocation14 + $0x70] sm:$0xff]
          %v720 = vld [vmem:[#allocation14 + $0x78] sm:$0xff]
          %v721 = vld [vmem:[%s7] sm:$0x3]
          %v723 = vperm.slane %v721, 0
          %v724 = vperm.slane %v721, 1
          %v743 = vunpack.c.l.b16 %v705
          %v744 = vunpack.c.h.b16 %v705
          %v745 = vunpack.c.l.b16 %v706
          %v746 = vunpack.c.h.b16 %v706
          %v747 = vunpack.c.l.b16 %v707
          %v748 = vunpack.c.h.b16 %v707
          %v749 = vunpack.c.l.b16 %v708
          %v750 = vunpack.c.h.b16 %v708
          %v751 = vunpack.c.l.b16 %v709
          %v752 = vunpack.c.h.b16 %v709
          %v753 = vunpack.c.l.b16 %v710
          %v754 = vunpack.c.h.b16 %v710
          %v755 = vunpack.c.l.b16 %v711
          %v756 = vunpack.c.h.b16 %v711
          %v757 = vunpack.c.l.b16 %v712
          %v758 = vunpack.c.h.b16 %v712
          %v759 = vunpack.c.l.b16 %v713
          %v760 = vunpack.c.h.b16 %v713
          %v761 = vunpack.c.l.b16 %v714
          %v762 = vunpack.c.h.b16 %v714
          %v763 = vunpack.c.l.b16 %v715
          %v764 = vunpack.c.h.b16 %v715
          %v765 = vunpack.c.l.b16 %v716
          %v766 = vunpack.c.h.b16 %v716
          %v767 = vunpack.c.l.b16 %v717
          %v768 = vunpack.c.h.b16 %v717
          %v769 = vunpack.c.l.b16 %v718
          %v770 = vunpack.c.h.b16 %v718
          %v771 = vunpack.c.l.b16 %v719
          %v772 = vunpack.c.h.b16 %v719
          %v773 = vunpack.c.l.b16 %v720
          %v774 = vunpack.c.h.b16 %v720
          %v775 = vpack.c.b16 %v745, %v743
          %v776 = vpack.c.b16 %v746, %v744
          %v777 = vpack.c.b16 %v749, %v747
          %v778 = vpack.c.b16 %v750, %v748
          %v779 = vpack.c.b16 %v753, %v751
          %v780 = vpack.c.b16 %v754, %v752
          %v781 = vpack.c.b16 %v757, %v755
          %v782 = vpack.c.b16 %v758, %v756
          %v783 = vpack.c.b16 %v761, %v759
          %v784 = vpack.c.b16 %v762, %v760
          %v785 = vpack.c.b16 %v765, %v763
          %v786 = vpack.c.b16 %v766, %v764
          %v787 = vpack.c.b16 %v769, %v767
          %v788 = vpack.c.b16 %v770, %v768
          %v789 = vpack.c.b16 %v773, %v771
          %v790 = vpack.c.b16 %v774, %v772
          %807 = vmatpush.bf16.msra.mxu0 %v789
          %808 = vmatpush.bf16.msra.mxu0 %v787
          %809 = vmatpush.bf16.msra.mxu0 %v785
          %810 = vmatpush.bf16.msra.mxu0 %v783
          %811 = vmatpush.bf16.msra.mxu0 %v781
          %812 = vmatpush.bf16.msra.mxu0 %v779
          %813 = vmatpush.bf16.msra.mxu0 %v777
          %814 = vmatpush.bf16.msra.mxu0 %v775
          %815 = vmatmul.bf16.gmra.mxu0 %v704
          %v816 = vpop.f32.mrf.mxu0
          %v817 = vadd.f32 %v723, %v816
          %v818 = vpop.f32.mrf.mxu0
          %819 = vdwg.mxu0
          %820 = vmatpush.bf16.msra.mxu0 %v790
          %821 = vmatpush.bf16.msra.mxu0 %v788
          %822 = vmatpush.bf16.msra.mxu0 %v786
          %823 = vmatpush.bf16.msra.mxu0 %v784
          %824 = vmatpush.bf16.msra.mxu0 %v782
          %825 = vmatpush.bf16.msra.mxu0 %v780
          %826 = vmatpush.bf16.msra.mxu0 %v778
          %827 = vmatpush.bf16.msra.mxu0 %v776
          %828 = vmatmul.bf16.gmra.mxu0 %v704
          %v829 = vpop.f32.mrf.mxu0
          %v830 = vadd.f32 %v724, %v829
          %v831 = vpop.f32.mrf.mxu0
          %832 = vdwg.mxu0
          %v833 = vpack.c.bf16 %v830, %v817
          %834 = vst [vmem:[#allocation2] sm:$0xff] %v833
        $region120: #{tpu_custom_call.1} parent=79 // pred_fallthru
          _
        %s835 = smul.u32 %s50, 8
        %s836 = scalar_lea.vmem %s573, %s835 [#allocation5]
        %v837 = vld [vmem:[%s836] sm:$0xff]
        %838 = vadd.xlane.f32.xlu0 %v837
        %v839 = vpop.xlane.xlu0 %838
        %v840 = vrcp.pop 128.0
        %v841 = vmul.f32 128.0, %v840
        %v842 = vsub.f32 1.0, %v841
        %v843 = vmul.f32 %v840, %v842
        %v844 = vadd.f32 %v840, %v843
        %vm845 = vweird.f32 %v840
        %v846 = vsel %vm845, %v840, %v844
        %v847 = vmul.f32 %v839, %v846
        %v848 = vsub.f32 %v837, %v847
        %v849 = vmul.f32 %v848, %v848
        %850 = vadd.xlane.f32.xlu0 %v849
        %v851 = vpop.xlane.xlu0 %850
        %v852 = vmul.f32 %v851, %v846
        %v853 = vadd.f32 %v852, 1e-06
        %v854 = vrsqrt.pop %v853
        %v855 = vmul.f32 %v854, %v853
        %v856 = vmul.f32 %v855, %v854
        %v857 = vmul.f32 0.5, %v856
        %v858 = vsub.f32 1.5, %v857
        %v859 = vmul.f32 %v854, %v858
        %vm860 = vweird.f32 %v853
        %vm861 = vweird.f32 %v854
        %vm862 = vmor %vm860, %vm861
        %v863 = vsel %vm862, %v854, %v859
        %v864 = vmul.f32 %v848, %v863
        %v866 = vperm.slane %v662, 0
        %v868 = vmul.f32 %v864, %v866
        %v870 = vperm.slane %v663, 0
        %v872 = vadd.f32 %v868, %v870
        %v873 = vpack.c.bf16 %v872, %v872
        %v874 = vld [vmem:[#allocation11] sm:$0xf]
        %v875 = vld [vmem:[#allocation11 + $0x4] sm:$0xf]
        %v876 = vld [vmem:[#allocation11 + $0x8] sm:$0xf]
        %v877 = vld [vmem:[#allocation11 + $0xc] sm:$0xf]
        %v878 = vld [vmem:[#allocation11 + $0x10] sm:$0xf]
        %v879 = vld [vmem:[#allocation11 + $0x14] sm:$0xf]
        %v880 = vld [vmem:[#allocation11 + $0x18] sm:$0xf]
        %v881 = vld [vmem:[#allocation11 + $0x1c] sm:$0xf]
        %v882 = vld [vmem:[#allocation11 + $0x20] sm:$0xf]
        %v883 = vld [vmem:[#allocation11 + $0x24] sm:$0xf]
        %v884 = vld [vmem:[#allocation11 + $0x28] sm:$0xf]
        %v885 = vld [vmem:[#allocation11 + $0x2c] sm:$0xf]
        %v886 = vld [vmem:[#allocation11 + $0x30] sm:$0xf]
        %v887 = vld [vmem:[#allocation11 + $0x34] sm:$0xf]
        %v888 = vld [vmem:[#allocation11 + $0x38] sm:$0xf]
        %v889 = vld [vmem:[#allocation11 + $0x3c] sm:$0xf]
        %v890 = vld [vmem:[#allocation13] sm:$0x1]
        %v892 = vperm.slane %v890, 0
        %v910 = vunpack.c.l.b16 %v874
        %v911 = vunpack.c.l.b16 %v875
        %v912 = vunpack.c.l.b16 %v876
        %v913 = vunpack.c.l.b16 %v877
        %v914 = vunpack.c.l.b16 %v878
        %v915 = vunpack.c.l.b16 %v879
        %v916 = vunpack.c.l.b16 %v880
        %v917 = vunpack.c.l.b16 %v881
        %v918 = vunpack.c.l.b16 %v882
        %v919 = vunpack.c.l.b16 %v883
        %v920 = vunpack.c.l.b16 %v884
        %v921 = vunpack.c.l.b16 %v885
        %v922 = vunpack.c.l.b16 %v886
        %v923 = vunpack.c.l.b16 %v887
        %v924 = vunpack.c.l.b16 %v888
        %v925 = vunpack.c.l.b16 %v889
        %v926 = vpack.c.b16 %v911, %v910
        %v927 = vpack.c.b16 %v913, %v912
        %v928 = vpack.c.b16 %v915, %v914
        %v929 = vpack.c.b16 %v917, %v916
        %v930 = vpack.c.b16 %v919, %v918
        %v931 = vpack.c.b16 %v921, %v920
        %v932 = vpack.c.b16 %v923, %v922
        %v933 = vpack.c.b16 %v925, %v924
        %942 = vmatpush.bf16.msra.mxu0 %v933
        %943 = vmatpush.bf16.msra.mxu0 %v932
        %944 = vmatpush.bf16.msra.mxu0 %v931
        %945 = vmatpush.bf16.msra.mxu0 %v930
        %946 = vmatpush.bf16.msra.mxu0 %v929
        %947 = vmatpush.bf16.msra.mxu0 %v928
        %948 = vmatpush.bf16.msra.mxu0 %v927
        %949 = vmatpush.bf16.msra.mxu0 %v926
        %950 = vmatmul.bf16.gmra.mxu0 %v873
        %v951 = vpop.f32.mrf.mxu0
        %v952 = vadd.f32 %v892, %v951
        %v953 = vpop.f32.mrf.mxu0
        %954 = vdwg.mxu0
        %v955 = vmul.f32 %v952, 0.17677669
        %v956 = vpack.c.bf16 %v955, %v955
        %958 = vrot.lane.b32.xlu0 %v956, 96
        %v959 = vpop.permute.xlu0 %958
        %960 = vrot.lane.b32.xlu0 %v956, 64
        %v961 = vpop.permute.xlu0 %960
        %962 = vrot.lane.b32.xlu0 %v956, 32
        %v963 = vpop.permute.xlu0 %962
        %v964 = vld [vmem:[#allocation2] sm:$0xf]
        %966 = vrot.lane.b32.xlu0 %v964, 96
        %v967 = vpop.permute.xlu0 %966
        %969 = vrot.lane.b32.xlu0 %v964, 64
        %v970 = vpop.permute.xlu0 %969
        %972 = vrot.lane.b32.xlu0 %v964, 32
        %v973 = vpop.permute.xlu0 %972
        %v975 = vld [vmem:[#allocation2 + $0x4] sm:$0xf]
        %977 = vrot.lane.b32.xlu0 %v975, 96
        %v978 = vpop.permute.xlu0 %977
        %980 = vrot.lane.b32.xlu0 %v975, 64
        %v981 = vpop.permute.xlu0 %980
        %983 = vrot.lane.b32.xlu0 %v975, 32
        %v984 = vpop.permute.xlu0 %983
        %986 = vxpose.xlu0.c.b16.start [1/8] %v964, 128
        %987 = vxpose.xlu0.c.b16.cont [2/8] 0, 128
        %988 = vxpose.xlu0.c.b16.cont [3/8] 0, 128
        %989 = vxpose.xlu0.c.b16.cont [4/8] 0, 128
        %990 = vxpose.xlu0.c.b16.cont [5/8] 0, 128
        %991 = vxpose.xlu0.c.b16.cont [6/8] 0, 128
        %992 = vxpose.xlu0.c.b16.cont [7/8] 0, 128
        %993 = vxpose.xlu0.c.b16.end [8/8] 0, 128
        %v994 = vpop.trf.xlu0
        %v995 = vpop.trf.xlu0
        %v996 = vpop.trf.xlu0
        %v997 = vpop.trf.xlu0
        %v998 = vpop.trf.xlu0
        %v999 = vpop.trf.xlu0
        %v1000 = vpop.trf.xlu0
        %v1001 = vpop.trf.xlu0
        %1002 = vxpose.xlu0.c.b16.start [1/8] %v967, 128
        %1003 = vxpose.xlu0.c.b16.cont [2/8] 0, 128
        %1004 = vxpose.xlu0.c.b16.cont [3/8] 0, 128
        %1005 = vxpose.xlu0.c.b16.cont [4/8] 0, 128
        %1006 = vxpose.xlu0.c.b16.cont [5/8] 0, 128
        %1007 = vxpose.xlu0.c.b16.cont [6/8] 0, 128
        %1008 = vxpose.xlu0.c.b16.cont [7/8] 0, 128
        %1009 = vxpose.xlu0.c.b16.end [8/8] 0, 128
        %v1010 = vpop.trf.xlu0
        %v1011 = vpop.trf.xlu0
        %v1012 = vpop.trf.xlu0
        %v1013 = vpop.trf.xlu0
        %v1014 = vpop.trf.xlu0
        %v1015 = vpop.trf.xlu0
        %v1016 = vpop.trf.xlu0
        %v1017 = vpop.trf.xlu0
        %1018 = vxpose.xlu0.c.b16.start [1/8] %v970, 128
        %1019 = vxpose.xlu0.c.b16.cont [2/8] 0, 128
        %1020 = vxpose.xlu0.c.b16.cont [3/8] 0, 128
        %1021 = vxpose.xlu0.c.b16.cont [4/8] 0, 128
        %1022 = vxpose.xlu0.c.b16.cont [5/8] 0, 128
        %1023 = vxpose.xlu0.c.b16.cont [6/8] 0, 128
        %1024 = vxpose.xlu0.c.b16.cont [7/8] 0, 128
        %1025 = vxpose.xlu0.c.b16.end [8/8] 0, 128
        %v1026 = vpop.trf.xlu0
        %v1027 = vpop.trf.xlu0
        %v1028 = vpop.trf.xlu0
        %v1029 = vpop.trf.xlu0
        %v1030 = vpop.trf.xlu0
        %v1031 = vpop.trf.xlu0
        %v1032 = vpop.trf.xlu0
        %v1033 = vpop.trf.xlu0
        %1034 = vxpose.xlu0.c.b16.start [1/8] %v973, 128
        %1035 = vxpose.xlu0.c.b16.cont [2/8] 0, 128
        %1036 = vxpose.xlu0.c.b16.cont [3/8] 0, 128
        %1037 = vxpose.xlu0.c.b16.cont [4/8] 0, 128
        %1038 = vxpose.xlu0.c.b16.cont [5/8] 0, 128
        %1039 = vxpose.xlu0.c.b16.cont [6/8] 0, 128
        %1040 = vxpose.xlu0.c.b16.cont [7/8] 0, 128
        %1041 = vxpose.xlu0.c.b16.end [8/8] 0, 128
        %v1042 = vpop.trf.xlu0
        %v1043 = vpop.trf.xlu0
        %v1044 = vpop.trf.xlu0
        %v1045 = vpop.trf.xlu0
        %v1046 = vpop.trf.xlu0
        %v1047 = vpop.trf.xlu0
        %v1048 = vpop.trf.xlu0
        %v1049 = vpop.trf.xlu0
        %vm1050 = vcmask 261120
        %v1052 = vsel %vm1050, %v956, 0
        %1054 = vmatpush.bf16.msra.mxu0 0
        %1055 = vmatpush.bf16.msra.mxu0 0
        %1056 = vmatpush.bf16.msra.mxu0 0
        %1057 = vmatpush.bf16.msra.mxu0 0
        %1058 = vmatpush.bf16.msra.mxu0 0
        %1059 = vmatpush.bf16.msra.mxu0 0
        %1060 = vmatpush.bf16.msra.mxu0 %v995
        %1061 = vmatpush.bf16.msra.mxu0 %v994
        %1062 = vmatmul.bf16.gmra.mxu0 %v1052
        %v1063 = vpop.f32.mrf.mxu0
        %v1064 = vadd.f32 0.0, %v1063
        %v1065 = vpop.f32.mrf.mxu0
        %1066 = vdwg.mxu0
        %v1068 = vsel %vm1050, %v959, 0
        %1070 = vmatpush.bf16.msra.mxu0 0
        %1071 = vmatpush.bf16.msra.mxu0 0
        %1072 = vmatpush.bf16.msra.mxu0 0
        %1073 = vmatpush.bf16.msra.mxu0 0
        %1074 = vmatpush.bf16.msra.mxu0 0
        %1075 = vmatpush.bf16.msra.mxu0 0
        %1076 = vmatpush.bf16.msra.mxu0 %v1011
        %1077 = vmatpush.bf16.msra.mxu0 %v1010
        %1078 = vmatmul.bf16.gmra.mxu0 %v1068
        %v1079 = vpop.f32.mrf.mxu0
        %v1080 = vadd.f32 0.0, %v1079
        %v1081 = vpop.f32.mrf.mxu0
        %1082 = vdwg.mxu0
        %v1084 = vsel %vm1050, %v961, 0
        %1086 = vmatpush.bf16.msra.mxu0 0
        %1087 = vmatpush.bf16.msra.mxu0 0
        %1088 = vmatpush.bf16.msra.mxu0 0
        %1089 = vmatpush.bf16.msra.mxu0 0
        %1090 = vmatpush.bf16.msra.mxu0 0
        %1091 = vmatpush.bf16.msra.mxu0 0
        %1092 = vmatpush.bf16.msra.mxu0 %v1027
        %1093 = vmatpush.bf16.msra.mxu0 %v1026
        %1094 = vmatmul.bf16.gmra.mxu0 %v1084
        %v1095 = vpop.f32.mrf.mxu0
        %v1096 = vadd.f32 0.0, %v1095
        %v1097 = vpop.f32.mrf.mxu0
        %1098 = vdwg.mxu0
        %v1100 = vsel %vm1050, %v963, 0
        %1102 = vmatpush.bf16.msra.mxu0 0
        %1103 = vmatpush.bf16.msra.mxu0 0
        %1104 = vmatpush.bf16.msra.mxu0 0
        %1105 = vmatpush.bf16.msra.mxu0 0
        %1106 = vmatpush.bf16.msra.mxu0 0
        %1107 = vmatpush.bf16.msra.mxu0 0
        %1108 = vmatpush.bf16.msra.mxu0 %v1043
        %1109 = vmatpush.bf16.msra.mxu0 %v1042
        %1110 = vmatmul.bf16.gmra.mxu0 %v1100
        %v1111 = vpop.f32.mrf.mxu0
        %v1112 = vadd.f32 0.0, %v1111
        %v1113 = vpop.f32.mrf.mxu0
        %1114 = vdwg.mxu0
        %v1115 = vlaneseq
        %v1116 = vand.u32 %v1115, 127
        %s1117 = sld [smem:[#allocation4 + %s49]]
        %v1118 = vstv %s1117
        %vm1119 = vcmp.ge.s32.totalorder %v1116, %v1118
        %v1120 = vsel %vm1119, 1, 0
        %vm1121 = vcmp.eq.s32.totalorder %v1120, 1
        %v1122 = vsel %vm1121, -1e+18, %v1064
        %v1123 = vsel %vm1121, -1e+18, %v1080
        %v1124 = vsel %vm1121, -1e+18, %v1096
        %v1125 = vsel %vm1121, -1e+18, %v1112
        %vm1126 = vcmask 64512
        %v1127 = vsel %vm1126, %v1122, -inf
        %1128 = vmax.xlane.f32.xlu0 %v1127
        %v1129 = vpop.xlane.xlu0 %1128
        %v1130 = vsel %vm1126, %v1123, -inf
        %1131 = vmax.xlane.f32.xlu0 %v1130
        %v1132 = vpop.xlane.xlu0 %1131
        %v1133 = vsel %vm1126, %v1124, -inf
        %1134 = vmax.xlane.f32.xlu0 %v1133
        %v1135 = vpop.xlane.xlu0 %1134
        %v1136 = vsel %vm1126, %v1125, -inf
        %1137 = vmax.xlane.f32.xlu0 %v1136
        %v1138 = vpop.xlane.xlu0 %1137
        %v1139 = vsub.f32 %v1122, %v1129
        %v1140 = vsub.f32 %v1123, %v1132
        %v1141 = vsub.f32 %v1124, %v1135
        %v1142 = vsub.f32 %v1125, %v1138
        %v1143 = vmul.f32 %v1139, 1.442695
        %v1144 = vpow.pop %v1143
        %v1145 = vmul.f32 %v1140, 1.442695
        %v1146 = vpow.pop %v1145
        %v1147 = vmul.f32 %v1141, 1.442695
        %v1148 = vpow.pop %v1147
        %v1149 = vmul.f32 %v1142, 1.442695
        %v1150 = vpow.pop %v1149
        %v1151 = vsel %vm1126, %v1144, 0.0
        %1152 = vadd.xlane.f32.xlu0 %v1151
        %v1153 = vpop.xlane.xlu0 %1152
        %v1154 = vsel %vm1126, %v1146, 0.0
        %1155 = vadd.xlane.f32.xlu0 %v1154
        %v1156 = vpop.xlane.xlu0 %1155
        %v1157 = vsel %vm1126, %v1148, 0.0
        %1158 = vadd.xlane.f32.xlu0 %v1157
        %v1159 = vpop.xlane.xlu0 %1158
        %v1160 = vsel %vm1126, %v1150, 0.0
        %1161 = vadd.xlane.f32.xlu0 %v1160
        %v1162 = vpop.xlane.xlu0 %1161
        %v1163 = vrcp.pop %v1153
        %v1164 = vrcp.pop %v1156
        %v1165 = vrcp.pop %v1159
        %v1166 = vrcp.pop %v1162
        %v1167 = vmul.f32 %v1144, %v1163
        %v1168 = vmul.f32 %v1146, %v1164
        %v1169 = vmul.f32 %v1148, %v1165
        %v1170 = vmul.f32 %v1150, %v1166
        %v1171 = vpack.c.bf16 %v1167, %v1167
        %v1172 = vpack.c.bf16 %v1168, %v1168
        %v1173 = vpack.c.bf16 %v1169, %v1169
        %v1174 = vpack.c.bf16 %v1170, %v1170
        %1175 = vxpose.xlu0.c.b16.start [1/8] %v975, 128
        %1176 = vxpose.xlu0.c.b16.cont [2/8] 0, 128
        %1177 = vxpose.xlu0.c.b16.cont [3/8] 0, 128
        %1178 = vxpose.xlu0.c.b16.cont [4/8] 0, 128
        %1179 = vxpose.xlu0.c.b16.cont [5/8] 0, 128
        %1180 = vxpose.xlu0.c.b16.cont [6/8] 0, 128
        %1181 = vxpose.xlu0.c.b16.cont [7/8] 0, 128
        %1182 = vxpose.xlu0.c.b16.end [8/8] 0, 128
        %v1183 = vpop.trf.xlu0
        %v1184 = vpop.trf.xlu0
        %v1185 = vpop.trf.xlu0
        %v1186 = vpop.trf.xlu0
        %v1187 = vpop.trf.xlu0
        %v1188 = vpop.trf.xlu0
        %v1189 = vpop.trf.xlu0
        %v1190 = vpop.trf.xlu0
        %1191 = vxpose.xlu0.c.b16.start [1/8] %v978, 128
        %1192 = vxpose.xlu0.c.b16.cont [2/8] 0, 128
        %1193 = vxpose.xlu0.c.b16.cont [3/8] 0, 128
        %1194 = vxpose.xlu0.c.b16.cont [4/8] 0, 128
        %1195 = vxpose.xlu0.c.b16.cont [5/8] 0, 128
        %1196 = vxpose.xlu0.c.b16.cont [6/8] 0, 128
        %1197 = vxpose.xlu0.c.b16.cont [7/8] 0, 128
        %1198 = vxpose.xlu0.c.b16.end [8/8] 0, 128
        %v1199 = vpop.trf.xlu0
        %v1200 = vpop.trf.xlu0
        %v1201 = vpop.trf.xlu0
        %v1202 = vpop.trf.xlu0
        %v1203 = vpop.trf.xlu0
        %v1204 = vpop.trf.xlu0
        %v1205 = vpop.trf.xlu0
        %v1206 = vpop.trf.xlu0
        %1207 = vxpose.xlu0.c.b16.start [1/8] %v981, 128
        %1208 = vxpose.xlu0.c.b16.cont [2/8] 0, 128
        %1209 = vxpose.xlu0.c.b16.cont [3/8] 0, 128
        %1210 = vxpose.xlu0.c.b16.cont [4/8] 0, 128
        %1211 = vxpose.xlu0.c.b16.cont [5/8] 0, 128
        %1212 = vxpose.xlu0.c.b16.cont [6/8] 0, 128
        %1213 = vxpose.xlu0.c.b16.cont [7/8] 0, 128
        %1214 = vxpose.xlu0.c.b16.end [8/8] 0, 128
        %v1215 = vpop.trf.xlu0
        %v1216 = vpop.trf.xlu0
        %v1217 = vpop.trf.xlu0
        %v1218 = vpop.trf.xlu0
        %v1219 = vpop.trf.xlu0
        %v1220 = vpop.trf.xlu0
        %v1221 = vpop.trf.xlu0
        %v1222 = vpop.trf.xlu0
        %1223 = vxpose.xlu0.c.b16.start [1/8] %v984, 128
        %1224 = vxpose.xlu0.c.b16.cont [2/8] 0, 128
        %1225 = vxpose.xlu0.c.b16.cont [3/8] 0, 128
        %1226 = vxpose.xlu0.c.b16.cont [4/8] 0, 128
        %1227 = vxpose.xlu0.c.b16.cont [5/8] 0, 128
        %1228 = vxpose.xlu0.c.b16.cont [6/8] 0, 128
        %1229 = vxpose.xlu0.c.b16.cont [7/8] 0, 128
        %1230 = vxpose.xlu0.c.b16.end [8/8] 0, 128
        %v1231 = vpop.trf.xlu0
        %v1232 = vpop.trf.xlu0
        %v1233 = vpop.trf.xlu0
        %v1234 = vpop.trf.xlu0
        %v1235 = vpop.trf.xlu0
        %v1236 = vpop.trf.xlu0
        %v1237 = vpop.trf.xlu0
        %v1238 = vpop.trf.xlu0
        %v1240 = vsel %vm1126, %v1183, 0
        %v1243 = vsel %vm1126, %v1184, 0
        %v1246 = vsel %vm1126, %v1171, 0
        %1248 = vmatpush.bf16.xpose.msra.mxu0 0
        %1249 = vmatpush.bf16.xpose.msra.mxu0 0
        %1250 = vmatpush.bf16.xpose.msra.mxu0 0
        %1251 = vmatpush.bf16.xpose.msra.mxu0 0
        %1252 = vmatpush.bf16.xpose.msra.mxu0 0
        %1253 = vmatpush.bf16.xpose.msra.mxu0 0
        %1254 = vmatpush.bf16.xpose.msra.mxu0 0
        %1255 = vmatpush.bf16.xpose.msra.mxu0 %v1246
        %1256 = vmatmul.bf16.gmra.mxu0 %v1240
        %v1257 = vpop.f32.mrf.mxu0
        %v1258 = vadd.f32 0.0, %v1257
        %v1259 = vpop.f32.mrf.mxu0
        %v1260 = vadd.f32 0.0, %v1259
        %1261 = vmatmul.bf16.gmra.mxu0 %v1243
        %v1262 = vpop.f32.mrf.mxu0
        %v1263 = vadd.f32 0.0, %v1262
        %v1264 = vpop.f32.mrf.mxu0
        %v1265 = vadd.f32 0.0, %v1264
        %1266 = vdwg.mxu0
        %v1268 = vsel %vm1126, %v1199, 0
        %v1271 = vsel %vm1126, %v1200, 0
        %v1274 = vsel %vm1126, %v1172, 0
        %1276 = vmatpush.bf16.xpose.msra.mxu0 0
        %1277 = vmatpush.bf16.xpose.msra.mxu0 0
        %1278 = vmatpush.bf16.xpose.msra.mxu0 0
        %1279 = vmatpush.bf16.xpose.msra.mxu0 0
        %1280 = vmatpush.bf16.xpose.msra.mxu0 0
        %1281 = vmatpush.bf16.xpose.msra.mxu0 0
        %1282 = vmatpush.bf16.xpose.msra.mxu0 0
        %1283 = vmatpush.bf16.xpose.msra.mxu0 %v1274
        %1284 = vmatmul.bf16.gmra.mxu0 %v1268
        %v1285 = vpop.f32.mrf.mxu0
        %v1286 = vadd.f32 0.0, %v1285
        %v1287 = vpop.f32.mrf.mxu0
        %v1288 = vadd.f32 0.0, %v1287
        %1289 = vmatmul.bf16.gmra.mxu0 %v1271
        %v1290 = vpop.f32.mrf.mxu0
        %v1291 = vadd.f32 0.0, %v1290
        %v1292 = vpop.f32.mrf.mxu0
        %v1293 = vadd.f32 0.0, %v1292
        %1294 = vdwg.mxu0
        %v1296 = vsel %vm1126, %v1215, 0
        %v1299 = vsel %vm1126, %v1216, 0
        %v1302 = vsel %vm1126, %v1173, 0
        %1304 = vmatpush.bf16.xpose.msra.mxu0 0
        %1305 = vmatpush.bf16.xpose.msra.mxu0 0
        %1306 = vmatpush.bf16.xpose.msra.mxu0 0
        %1307 = vmatpush.bf16.xpose.msra.mxu0 0
        %1308 = vmatpush.bf16.xpose.msra.mxu0 0
        %1309 = vmatpush.bf16.xpose.msra.mxu0 0
        %1310 = vmatpush.bf16.xpose.msra.mxu0 0
        %1311 = vmatpush.bf16.xpose.msra.mxu0 %v1302
        %1312 = vmatmul.bf16.gmra.mxu0 %v1296
        %v1313 = vpop.f32.mrf.mxu0
        %v1314 = vadd.f32 0.0, %v1313
        %v1315 = vpop.f32.mrf.mxu0
        %v1316 = vadd.f32 0.0, %v1315
        %1317 = vmatmul.bf16.gmra.mxu0 %v1299
        %v1318 = vpop.f32.mrf.mxu0
        %v1319 = vadd.f32 0.0, %v1318
        %v1320 = vpop.f32.mrf.mxu0
        %v1321 = vadd.f32 0.0, %v1320
        %1322 = vdwg.mxu0
        %v1324 = vsel %vm1126, %v1231, 0
        %v1327 = vsel %vm1126, %v1232, 0
        %v1330 = vsel %vm1126, %v1174, 0
        %1332 = vmatpush.bf16.xpose.msra.mxu0 0
        %1333 = vmatpush.bf16.xpose.msra.mxu0 0
        %1334 = vmatpush.bf16.xpose.msra.mxu0 0
        %1335 = vmatpush.bf16.xpose.msra.mxu0 0
        %1336 = vmatpush.bf16.xpose.msra.mxu0 0
        %1337 = vmatpush.bf16.xpose.msra.mxu0 0
        %1338 = vmatpush.bf16.xpose.msra.mxu0 0
        %1339 = vmatpush.bf16.xpose.msra.mxu0 %v1330
        %1340 = vmatmul.bf16.gmra.mxu0 %v1324
        %v1341 = vpop.f32.mrf.mxu0
        %v1342 = vadd.f32 0.0, %v1341
        %v1343 = vpop.f32.mrf.mxu0
        %v1344 = vadd.f32 0.0, %v1343
        %1345 = vmatmul.bf16.gmra.mxu0 %v1327
        %v1346 = vpop.f32.mrf.mxu0
        %v1347 = vadd.f32 0.0, %v1346
        %v1348 = vpop.f32.mrf.mxu0
        %v1349 = vadd.f32 0.0, %v1348
        %1350 = vdwg.mxu0
        %1351 = vxpose.xlu0.b32.start [1/16] %v1258, 128
        %1352 = vxpose.xlu0.b32.cont [2/16] %v1260, 128
        %1353 = vxpose.xlu0.b32.cont [3/16] %v1263, 128
        %1354 = vxpose.xlu0.b32.cont [4/16] %v1265, 128
        %1355 = vxpose.xlu0.b32.cont [5/16] 0.0, 128
        %1356 = vxpose.xlu0.b32.cont [6/16] 0.0, 128
        %1357 = vxpose.xlu0.b32.cont [7/16] 0.0, 128
        %1358 = vxpose.xlu0.b32.cont [8/16] 0.0, 128
        %1359 = vxpose.xlu0.b32.cont [9/16] 0.0, 128
        %1360 = vxpose.xlu0.b32.cont [10/16] 0.0, 128
        %1361 = vxpose.xlu0.b32.cont [11/16] 0.0, 128
        %1362 = vxpose.xlu0.b32.cont [12/16] 0.0, 128
        %1363 = vxpose.xlu0.b32.cont [13/16] 0.0, 128
        %1364 = vxpose.xlu0.b32.cont [14/16] 0.0, 128
        %1365 = vxpose.xlu0.b32.cont [15/16] 0.0, 128
        %1366 = vxpose.xlu0.b32.end [16/16] 0.0, 128
        %v1367 = vpop.trf.xlu0
        %v1368 = vpop.trf.xlu0
        %v1369 = vpop.trf.xlu0
        %v1370 = vpop.trf.xlu0
        %v1371 = vpop.trf.xlu0
        %v1372 = vpop.trf.xlu0
        %v1373 = vpop.trf.xlu0
        %v1374 = vpop.trf.xlu0
        %v1375 = vpop.trf.xlu0
        %v1376 = vpop.trf.xlu0
        %v1377 = vpop.trf.xlu0
        %v1378 = vpop.trf.xlu0
        %v1379 = vpop.trf.xlu0
        %v1380 = vpop.trf.xlu0
        %v1381 = vpop.trf.xlu0
        %v1382 = vpop.trf.xlu0
        %1383 = vxpose.xlu0.b32.start [1/16] %v1286, 128
        %1384 = vxpose.xlu0.b32.cont [2/16] %v1288, 128
        %1385 = vxpose.xlu0.b32.cont [3/16] %v1291, 128
        %1386 = vxpose.xlu0.b32.cont [4/16] %v1293, 128
        %1387 = vxpose.xlu0.b32.cont [5/16] 0.0, 128
        %1388 = vxpose.xlu0.b32.cont [6/16] 0.0, 128
        %1389 = vxpose.xlu0.b32.cont [7/16] 0.0, 128
        %1390 = vxpose.xlu0.b32.cont [8/16] 0.0, 128
        %1391 = vxpose.xlu0.b32.cont [9/16] 0.0, 128
        %1392 = vxpose.xlu0.b32.cont [10/16] 0.0, 128
        %1393 = vxpose.xlu0.b32.cont [11/16] 0.0, 128
        %1394 = vxpose.xlu0.b32.cont [12/16] 0.0, 128
        %1395 = vxpose.xlu0.b32.cont [13/16] 0.0, 128
        %1396 = vxpose.xlu0.b32.cont [14/16] 0.0, 128
        %1397 = vxpose.xlu0.b32.cont [15/16] 0.0, 128
        %1398 = vxpose.xlu0.b32.end [16/16] 0.0, 128
        %v1399 = vpop.trf.xlu0
        %v1400 = vpop.trf.xlu0
        %v1401 = vpop.trf.xlu0
        %v1402 = vpop.trf.xlu0
        %v1403 = vpop.trf.xlu0
        %v1404 = vpop.trf.xlu0
        %v1405 = vpop.trf.xlu0
        %v1406 = vpop.trf.xlu0
        %v1407 = vpop.trf.xlu0
        %v1408 = vpop.trf.xlu0
        %v1409 = vpop.trf.xlu0
        %v1410 = vpop.trf.xlu0
        %v1411 = vpop.trf.xlu0
        %v1412 = vpop.trf.xlu0
        %v1413 = vpop.trf.xlu0
        %v1414 = vpop.trf.xlu0
        %1415 = vxpose.xlu0.b32.start [1/16] %v1314, 128
        %1416 = vxpose.xlu0.b32.cont [2/16] %v1316, 128
        %1417 = vxpose.xlu0.b32.cont [3/16] %v1319, 128
        %1418 = vxpose.xlu0.b32.cont [4/16] %v1321, 128
        %1419 = vxpose.xlu0.b32.cont [5/16] 0.0, 128
        %1420 = vxpose.xlu0.b32.cont [6/16] 0.0, 128
        %1421 = vxpose.xlu0.b32.cont [7/16] 0.0, 128
        %1422 = vxpose.xlu0.b32.cont [8/16] 0.0, 128
        %1423 = vxpose.xlu0.b32.cont [9/16] 0.0, 128
        %1424 = vxpose.xlu0.b32.cont [10/16] 0.0, 128
        %1425 = vxpose.xlu0.b32.cont [11/16] 0.0, 128
        %1426 = vxpose.xlu0.b32.cont [12/16] 0.0, 128
        %1427 = vxpose.xlu0.b32.cont [13/16] 0.0, 128
        %1428 = vxpose.xlu0.b32.cont [14/16] 0.0, 128
        %1429 = vxpose.xlu0.b32.cont [15/16] 0.0, 128
        %1430 = vxpose.xlu0.b32.end [16/16] 0.0, 128
        %v1431 = vpop.trf.xlu0
        %v1432 = vpop.trf.xlu0
        %v1433 = vpop.trf.xlu0
        %v1434 = vpop.trf.xlu0
        %v1435 = vpop.trf.xlu0
        %v1436 = vpop.trf.xlu0
        %v1437 = vpop.trf.xlu0
        %v1438 = vpop.trf.xlu0
        %v1439 = vpop.trf.xlu0
        %v1440 = vpop.trf.xlu0
        %v1441 = vpop.trf.xlu0
        %v1442 = vpop.trf.xlu0
        %v1443 = vpop.trf.xlu0
        %v1444 = vpop.trf.xlu0
        %v1445 = vpop.trf.xlu0
        %v1446 = vpop.trf.xlu0
        %1447 = vxpose.xlu0.b32.start [1/16] %v1342, 128
        %1448 = vxpose.xlu0.b32.cont [2/16] %v1344, 128
        %1449 = vxpose.xlu0.b32.cont [3/16] %v1347, 128
        %1450 = vxpose.xlu0.b32.cont [4/16] %v1349, 128
        %1451 = vxpose.xlu0.b32.cont [5/16] 0.0, 128
        %1452 = vxpose.xlu0.b32.cont [6/16] 0.0, 128
        %1453 = vxpose.xlu0.b32.cont [7/16] 0.0, 128
        %1454 = vxpose.xlu0.b32.cont [8/16] 0.0, 128
        %1455 = vxpose.xlu0.b32.cont [9/16] 0.0, 128
        %1456 = vxpose.xlu0.b32.cont [10/16] 0.0, 128
        %1457 = vxpose.xlu0.b32.cont [11/16] 0.0, 128
        %1458 = vxpose.xlu0.b32.cont [12/16] 0.0, 128
        %1459 = vxpose.xlu0.b32.cont [13/16] 0.0, 128
        %1460 = vxpose.xlu0.b32.cont [14/16] 0.0, 128
        %1461 = vxpose.xlu0.b32.cont [15/16] 0.0, 128
        %1462 = vxpose.xlu0.b32.end [16/16] 0.0, 128
        %v1463 = vpop.trf.xlu0
        %v1464 = vpop.trf.xlu0
        %v1465 = vpop.trf.xlu0
        %v1466 = vpop.trf.xlu0
        %v1467 = vpop.trf.xlu0
        %v1468 = vpop.trf.xlu0
        %v1469 = vpop.trf.xlu0
        %v1470 = vpop.trf.xlu0
        %v1471 = vpop.trf.xlu0
        %v1472 = vpop.trf.xlu0
        %v1473 = vpop.trf.xlu0
        %v1474 = vpop.trf.xlu0
        %v1475 = vpop.trf.xlu0
        %v1476 = vpop.trf.xlu0
        %v1477 = vpop.trf.xlu0
        %v1478 = vpop.trf.xlu0
        %v1479 = vrot.slane %v1431, 4
        %vm1480 = vcmask 1047556
        %v1481 = vsel %vm1480, %v1479, %v1367
        %v1482 = vrot.slane %v1367, 4
        %v1483 = vsel %vm1480, %v1431, %v1482
        %v1485 = vunpack.c.l.s4 1983009808
        %v1486 = vunpack.c.0.s8 %v1485
        %v1487 = vperm.slane %v1481, %v1486
        %v1489 = vunpack.c.l.s4 1983009808
        %v1490 = vunpack.c.0.s8 %v1489
        %v1491 = vperm.slane %v1483, %v1490
        %v1492 = vrot.slane %v1463, 4
        %v1493 = vsel %vm1480, %v1492, %v1399
        %v1494 = vrot.slane %v1399, 4
        %v1495 = vsel %vm1480, %v1463, %v1494
        %v1497 = vunpack.c.l.s4 1983009808
        %v1498 = vunpack.c.0.s8 %v1497
        %v1499 = vperm.slane %v1493, %v1498
        %v1501 = vunpack.c.l.s4 1983009808
        %v1502 = vunpack.c.0.s8 %v1501
        %v1503 = vperm.slane %v1495, %v1502
        %v1504 = vrot.slane %v1499, 4
        %v1505 = vsel %vm1480, %v1504, %v1487
        %v1506 = vrot.slane %v1487, 4
        %v1507 = vsel %vm1480, %v1499, %v1506
        %v1509 = vunpack.c.l.s4 1934713408
        %v1510 = vunpack.c.0.s8 %v1509
        %v1511 = vperm.slane %v1505, %v1510
        %v1513 = vunpack.c.l.s4 1934713408
        %v1514 = vunpack.c.0.s8 %v1513
        %v1515 = vperm.slane %v1507, %v1514
        %v1516 = vrot.slane %v1503, 4
        %v1517 = vsel %vm1480, %v1516, %v1491
        %v1518 = vrot.slane %v1491, 4
        %v1519 = vsel %vm1480, %v1503, %v1518
        %v1521 = vunpack.c.l.s4 1934713408
        %v1522 = vunpack.c.0.s8 %v1521
        %v1523 = vperm.slane %v1517, %v1522
        %v1525 = vunpack.c.l.s4 1934713408
        %v1526 = vunpack.c.0.s8 %v1525
        %v1527 = vperm.slane %v1519, %v1526
        %v1528 = vrot.slane %v1511, 4
        %v1529 = vsel %vm1480, 0.0, %v1528
        %v1530 = vrot.slane %v1515, 4
        %v1531 = vsel %vm1480, 0.0, %v1530
        %v1532 = vrot.slane %v1523, 4
        %v1533 = vsel %vm1480, 0.0, %v1532
        %v1534 = vrot.slane %v1527, 4
        %v1535 = vsel %vm1480, 0.0, %v1534
        %v1536 = vsel %vm1480, %v1530, %v1511
        %v1538 = vunpack.c.l.s4 1983009808
        %v1539 = vunpack.c.0.s8 %v1538
        %v1540 = vperm.slane %v1536, %v1539
        %v1541 = vrot.slane %v1531, 4
        %v1542 = vsel %vm1480, %v1541, %v1529
        %v1544 = vunpack.c.l.s4 1983009808
        %v1545 = vunpack.c.0.s8 %v1544
        %v1546 = vperm.slane %v1542, %v1545
        %v1547 = vsel %vm1480, %v1534, %v1523
        %v1549 = vunpack.c.l.s4 1983009808
        %v1550 = vunpack.c.0.s8 %v1549
        %v1551 = vperm.slane %v1547, %v1550
        %v1552 = vrot.slane %v1535, 4
        %v1553 = vsel %vm1480, %v1552, %v1533
        %v1555 = vunpack.c.l.s4 1983009808
        %v1556 = vunpack.c.0.s8 %v1555
        %v1557 = vperm.slane %v1553, %v1556
        %v1558 = vrot.slane %v1546, 4
        %v1559 = vsel %vm1480, %v1558, %v1540
        %v1560 = vrot.slane %v1540, 4
        %v1561 = vsel %vm1480, %v1546, %v1560
        %v1563 = vunpack.c.l.s4 1934713408
        %v1564 = vunpack.c.0.s8 %v1563
        %v1565 = vperm.slane %v1559, %v1564
        %v1567 = vunpack.c.l.s4 1934713408
        %v1568 = vunpack.c.0.s8 %v1567
        %v1569 = vperm.slane %v1561, %v1568
        %v1570 = vrot.slane %v1557, 4
        %v1571 = vsel %vm1480, %v1570, %v1551
        %v1572 = vrot.slane %v1551, 4
        %v1573 = vsel %vm1480, %v1557, %v1572
        %v1575 = vunpack.c.l.s4 1934713408
        %v1576 = vunpack.c.0.s8 %v1575
        %v1577 = vperm.slane %v1571, %v1576
        %v1579 = vunpack.c.l.s4 1934713408
        %v1580 = vunpack.c.0.s8 %v1579
        %v1581 = vperm.slane %v1573, %v1580
        %v1582 = vrot.slane %v1577, 4
        %v1583 = vsel %vm1480, %v1582, %v1565
        %v1584 = vrot.slane %v1565, 4
        %v1585 = vsel %vm1480, %v1577, %v1584
        %v1586 = vrot.slane %v1581, 4
        %v1587 = vsel %vm1480, %v1586, %v1569
        %v1588 = vrot.slane %v1569, 4
        %v1589 = vsel %vm1480, %v1581, %v1588
        %1591 = vrot.lane.b32.xlu0 %v1585, 32
        %v1592 = vpop.permute.xlu0 %1591
        %1595 = vrot.lane.b32.xlu0 %v1587, 64
        %v1596 = vpop.permute.xlu0 %1595
        %1599 = vrot.lane.b32.xlu0 %v1589, 96
        %v1600 = vpop.permute.xlu0 %1599
        %v1602 = vsel %vm1050, %v1583, %v1592
        %vm1603 = vcmask 523264
        %v1604 = vsel %vm1603, %v1602, %v1596
        %vm1605 = vcmask 785408
        %v1606 = vsel %vm1605, %v1604, %v1600
        %v1607 = vpack.c.bf16 %v1606, %v1606
        %v1608 = vld [vmem:[#allocation16] sm:$0xf]
        %v1609 = vld [vmem:[#allocation16 + $0x4] sm:$0xf]
        %v1610 = vld [vmem:[#allocation16 + $0x8] sm:$0xf]
        %v1611 = vld [vmem:[#allocation16 + $0xc] sm:$0xf]
        %v1612 = vld [vmem:[#allocation16 + $0x10] sm:$0xf]
        %v1613 = vld [vmem:[#allocation16 + $0x14] sm:$0xf]
        %v1614 = vld [vmem:[#allocation16 + $0x18] sm:$0xf]
        %v1615 = vld [vmem:[#allocation16 + $0x1c] sm:$0xf]
        %v1616 = vld [vmem:[#allocation16 + $0x20] sm:$0xf]
        %v1617 = vld [vmem:[#allocation16 + $0x24] sm:$0xf]
        %v1618 = vld [vmem:[#allocation16 + $0x28] sm:$0xf]
        %v1619 = vld [vmem:[#allocation16 + $0x2c] sm:$0xf]
        %v1620 = vld [vmem:[#allocation16 + $0x30] sm:$0xf]
        %v1621 = vld [vmem:[#allocation16 + $0x34] sm:$0xf]
        %v1622 = vld [vmem:[#allocation16 + $0x38] sm:$0xf]
        %v1623 = vld [vmem:[#allocation16 + $0x3c] sm:$0xf]
        %v1624 = vld [vmem:[%s9] sm:$0x1]
        %v1626 = vperm.slane %v1624, 0
        %v1644 = vunpack.c.l.b16 %v1608
        %v1645 = vunpack.c.l.b16 %v1609
        %v1646 = vunpack.c.l.b16 %v1610
        %v1647 = vunpack.c.l.b16 %v1611
        %v1648 = vunpack.c.l.b16 %v1612
        %v1649 = vunpack.c.l.b16 %v1613
        %v1650 = vunpack.c.l.b16 %v1614
        %v1651 = vunpack.c.l.b16 %v1615
        %v1652 = vunpack.c.l.b16 %v1616
        %v1653 = vunpack.c.l.b16 %v1617
        %v1654 = vunpack.c.l.b16 %v1618
        %v1655 = vunpack.c.l.b16 %v1619
        %v1656 = vunpack.c.l.b16 %v1620
        %v1657 = vunpack.c.l.b16 %v1621
        %v1658 = vunpack.c.l.b16 %v1622
        %v1659 = vunpack.c.l.b16 %v1623
        %v1660 = vpack.c.b16 %v1645, %v1644
        %v1661 = vpack.c.b16 %v1647, %v1646
        %v1662 = vpack.c.b16 %v1649, %v1648
        %v1663 = vpack.c.b16 %v1651, %v1650
        %v1664 = vpack.c.b16 %v1653, %v1652
        %v1665 = vpack.c.b16 %v1655, %v1654
        %v1666 = vpack.c.b16 %v1657, %v1656
        %v1667 = vpack.c.b16 %v1659, %v1658
        %1676 = vmatpush.bf16.msra.mxu0 %v1667
        %1677 = vmatpush.bf16.msra.mxu0 %v1666
        %1678 = vmatpush.bf16.msra.mxu0 %v1665
        %1679 = vmatpush.bf16.msra.mxu0 %v1664
        %1680 = vmatpush.bf16.msra.mxu0 %v1663
        %1681 = vmatpush.bf16.msra.mxu0 %v1662
        %1682 = vmatpush.bf16.msra.mxu0 %v1661
        %1683 = vmatpush.bf16.msra.mxu0 %v1660
        %1684 = vmatmul.bf16.gmra.mxu0 %v1607
        %v1685 = vpop.f32.mrf.mxu0
        %v1686 = vadd.f32 %v1626, %v1685
        %v1687 = vpop.f32.mrf.mxu0
        %1688 = vdwg.mxu0
        %v1689 = vadd.f32 %v1686, %v837
        %v1690 = vld [vmem:[%s10] sm:$0x1]
        %v1691 = vld [vmem:[%s11] sm:$0x1]
        %1692 = vadd.xlane.f32.xlu0 %v1689
        %v1693 = vpop.xlane.xlu0 %1692
        %v1694 = vmul.f32 %v1693, %v846
        %v1695 = vsub.f32 %v1689, %v1694
        %v1696 = vmul.f32 %v1695, %v1695
        %1697 = vadd.xlane.f32.xlu0 %v1696
        %v1698 = vpop.xlane.xlu0 %1697
        %v1699 = vmul.f32 %v1698, %v846
        %v1700 = vadd.f32 %v1699, 1e-06
        %v1701 = vrsqrt.pop %v1700
        %v1702 = vmul.f32 %v1701, %v1700
        %v1703 = vmul.f32 %v1702, %v1701
        %v1704 = vmul.f32 0.5, %v1703
        %v1705 = vsub.f32 1.5, %v1704
        %v1706 = vmul.f32 %v1701, %v1705
        %vm1707 = vweird.f32 %v1700
        %vm1708 = vweird.f32 %v1701
        %vm1709 = vmor %vm1707, %vm1708
        %v1710 = vsel %vm1709, %v1701, %v1706
        %v1711 = vmul.f32 %v1695, %v1710
        %v1713 = vperm.slane %v1690, 0
        %v1715 = vmul.f32 %v1711, %v1713
        %v1717 = vperm.slane %v1691, 0
        %v1719 = vadd.f32 %v1715, %v1717
        %v1720 = vpack.c.bf16 %v1719, %v1719
        %v1721 = vld [vmem:[#allocation17] sm:$0xff]
        %v1722 = vld [vmem:[#allocation17 + $0x8] sm:$0xff]
        %v1723 = vld [vmem:[#allocation17 + $0x10] sm:$0xff]
        %v1724 = vld [vmem:[#allocation17 + $0x18] sm:$0xff]
        %v1725 = vld [vmem:[#allocation17 + $0x20] sm:$0xff]
        %v1726 = vld [vmem:[#allocation17 + $0x28] sm:$0xff]
        %v1727 = vld [vmem:[#allocation17 + $0x30] sm:$0xff]
        %v1728 = vld [vmem:[#allocation17 + $0x38] sm:$0xff]
        %v1729 = vld [vmem:[#allocation17 + $0x40] sm:$0xff]
        %v1730 = vld [vmem:[#allocation17 + $0x48] sm:$0xff]
        %v1731 = vld [vmem:[#allocation17 + $0x50] sm:$0xff]
        %v1732 = vld [vmem:[#allocation17 + $0x58] sm:$0xff]
        %v1733 = vld [vmem:[#allocation17 + $0x60] sm:$0xff]
        %v1734 = vld [vmem:[#allocation17 + $0x68] sm:$0xff]
        %v1735 = vld [vmem:[#allocation17 + $0x70] sm:$0xff]
        %v1736 = vld [vmem:[#allocation17 + $0x78] sm:$0xff]
        %v1737 = vld [vmem:[%s13] sm:$0x3]
        %v1739 = vperm.slane %v1737, 0
        %v1740 = vperm.slane %v1737, 1
        %v1759 = vunpack.c.l.b16 %v1721
        %v1760 = vunpack.c.h.b16 %v1721
        %v1761 = vunpack.c.l.b16 %v1722
        %v1762 = vunpack.c.h.b16 %v1722
        %v1763 = vunpack.c.l.b16 %v1723
        %v1764 = vunpack.c.h.b16 %v1723
        %v1765 = vunpack.c.l.b16 %v1724
        %v1766 = vunpack.c.h.b16 %v1724
        %v1767 = vunpack.c.l.b16 %v1725
        %v1768 = vunpack.c.h.b16 %v1725
        %v1769 = vunpack.c.l.b16 %v1726
        %v1770 = vunpack.c.h.b16 %v1726
        %v1771 = vunpack.c.l.b16 %v1727
        %v1772 = vunpack.c.h.b16 %v1727
        %v1773 = vunpack.c.l.b16 %v1728
        %v1774 = vunpack.c.h.b16 %v1728
        %v1775 = vunpack.c.l.b16 %v1729
        %v1776 = vunpack.c.h.b16 %v1729
        %v1777 = vunpack.c.l.b16 %v1730
        %v1778 = vunpack.c.h.b16 %v1730
        %v1779 = vunpack.c.l.b16 %v1731
        %v1780 = vunpack.c.h.b16 %v1731
        %v1781 = vunpack.c.l.b16 %v1732
        %v1782 = vunpack.c.h.b16 %v1732
        %v1783 = vunpack.c.l.b16 %v1733
        %v1784 = vunpack.c.h.b16 %v1733
        %v1785 = vunpack.c.l.b16 %v1734
        %v1786 = vunpack.c.h.b16 %v1734
        %v1787 = vunpack.c.l.b16 %v1735
        %v1788 = vunpack.c.h.b16 %v1735
        %v1789 = vunpack.c.l.b16 %v1736
        %v1790 = vunpack.c.h.b16 %v1736
        %v1791 = vpack.c.b16 %v1761, %v1759
        %v1792 = vpack.c.b16 %v1762, %v1760
        %v1793 = vpack.c.b16 %v1765, %v1763
        %v1794 = vpack.c.b16 %v1766, %v1764
        %v1795 = vpack.c.b16 %v1769, %v1767
        %v1796 = vpack.c.b16 %v1770, %v1768
        %v1797 = vpack.c.b16 %v1773, %v1771
        %v1798 = vpack.c.b16 %v1774, %v1772
        %v1799 = vpack.c.b16 %v1777, %v1775
        %v1800 = vpack.c.b16 %v1778, %v1776
        %v1801 = vpack.c.b16 %v1781, %v1779
        %v1802 = vpack.c.b16 %v1782, %v1780
        %v1803 = vpack.c.b16 %v1785, %v1783
        %v1804 = vpack.c.b16 %v1786, %v1784
        %v1805 = vpack.c.b16 %v1789, %v1787
        %v1806 = vpack.c.b16 %v1790, %v1788
        %1823 = vmatpush.bf16.msra.mxu0 %v1805
        %1824 = vmatpush.bf16.msra.mxu0 %v1803
        %1825 = vmatpush.bf16.msra.mxu0 %v1801
        %1826 = vmatpush.bf16.msra.mxu0 %v1799
        %1827 = vmatpush.bf16.msra.mxu0 %v1797
        %1828 = vmatpush.bf16.msra.mxu0 %v1795
        %1829 = vmatpush.bf16.msra.mxu0 %v1793
        %1830 = vmatpush.bf16.msra.mxu0 %v1791
        %1831 = vmatmul.bf16.gmra.mxu0 %v1720
        %v1832 = vpop.f32.mrf.mxu0
        %v1833 = vadd.f32 %v1739, %v1832
        %v1834 = vpop.f32.mrf.mxu0
        %1835 = vdwg.mxu0
        %1836 = vmatpush.bf16.msra.mxu0 %v1806
        %1837 = vmatpush.bf16.msra.mxu0 %v1804
        %1838 = vmatpush.bf16.msra.mxu0 %v1802
        %1839 = vmatpush.bf16.msra.mxu0 %v1800
        %1840 = vmatpush.bf16.msra.mxu0 %v1798
        %1841 = vmatpush.bf16.msra.mxu0 %v1796
        %1842 = vmatpush.bf16.msra.mxu0 %v1794
        %1843 = vmatpush.bf16.msra.mxu0 %v1792
        %1844 = vmatmul.bf16.gmra.mxu0 %v1720
        %v1845 = vpop.f32.mrf.mxu0
        %v1846 = vadd.f32 %v1740, %v1845
        %v1847 = vpop.f32.mrf.mxu0
        %1848 = vdwg.mxu0
        %v1849 = vmax.f32 %v1833, 0.0
        %v1850 = vmax.f32 %v1846, 0.0
        %v1851 = vpack.c.bf16 %v1849, %v1849
        %v1852 = vpack.c.bf16 %v1850, %v1850
        %v1853 = vld [vmem:[#allocation19] sm:$0xf]
        %v1854 = vld [vmem:[#allocation19 + $0x4] sm:$0xf]
        %v1855 = vld [vmem:[#allocation19 + $0x8] sm:$0xf]
        %v1856 = vld [vmem:[#allocation19 + $0xc] sm:$0xf]
        %v1857 = vld [vmem:[#allocation19 + $0x10] sm:$0xf]
        %v1858 = vld [vmem:[#allocation19 + $0x14] sm:$0xf]
        %v1859 = vld [vmem:[#allocation19 + $0x18] sm:$0xf]
        %v1860 = vld [vmem:[#allocation19 + $0x1c] sm:$0xf]
        %v1861 = vld [vmem:[#allocation19 + $0x20] sm:$0xf]
        %v1862 = vld [vmem:[#allocation19 + $0x24] sm:$0xf]
        %v1863 = vld [vmem:[#allocation19 + $0x28] sm:$0xf]
        %v1864 = vld [vmem:[#allocation19 + $0x2c] sm:$0xf]
        %v1865 = vld [vmem:[#allocation19 + $0x30] sm:$0xf]
        %v1866 = vld [vmem:[#allocation19 + $0x34] sm:$0xf]
        %v1867 = vld [vmem:[#allocation19 + $0x38] sm:$0xf]
        %v1868 = vld [vmem:[#allocation19 + $0x3c] sm:$0xf]
        %v1869 = vld [vmem:[#allocation19 + $0x40] sm:$0xf]
        %v1870 = vld [vmem:[#allocation19 + $0x44] sm:$0xf]
        %v1871 = vld [vmem:[#allocation19 + $0x48] sm:$0xf]
        %v1872 = vld [vmem:[#allocation19 + $0x4c] sm:$0xf]
        %v1873 = vld [vmem:[#allocation19 + $0x50] sm:$0xf]
        %v1874 = vld [vmem:[#allocation19 + $0x54] sm:$0xf]
        %v1875 = vld [vmem:[#allocation19 + $0x58] sm:$0xf]
        %v1876 = vld [vmem:[#allocation19 + $0x5c] sm:$0xf]
        %v1877 = vld [vmem:[#allocation19 + $0x60] sm:$0xf]
        %v1878 = vld [vmem:[#allocation19 + $0x64] sm:$0xf]
        %v1879 = vld [vmem:[#allocation19 + $0x68] sm:$0xf]
        %v1880 = vld [vmem:[#allocation19 + $0x6c] sm:$0xf]
        %v1881 = vld [vmem:[#allocation19 + $0x70] sm:$0xf]
        %v1882 = vld [vmem:[#allocation19 + $0x74] sm:$0xf]
        %v1883 = vld [vmem:[#allocation19 + $0x78] sm:$0xf]
        %v1884 = vld [vmem:[#allocation19 + $0x7c] sm:$0xf]
        %v1885 = vld [vmem:[%s15] sm:$0x1]
        %v1887 = vperm.slane %v1885, 0
        %v1921 = vunpack.c.l.b16 %v1853
        %v1922 = vunpack.c.l.b16 %v1854
        %v1923 = vunpack.c.l.b16 %v1855
        %v1924 = vunpack.c.l.b16 %v1856
        %v1925 = vunpack.c.l.b16 %v1857
        %v1926 = vunpack.c.l.b16 %v1858
        %v1927 = vunpack.c.l.b16 %v1859
        %v1928 = vunpack.c.l.b16 %v1860
        %v1929 = vunpack.c.l.b16 %v1861
        %v1930 = vunpack.c.l.b16 %v1862
        %v1931 = vunpack.c.l.b16 %v1863
        %v1932 = vunpack.c.l.b16 %v1864
        %v1933 = vunpack.c.l.b16 %v1865
        %v1934 = vunpack.c.l.b16 %v1866
        %v1935 = vunpack.c.l.b16 %v1867
        %v1936 = vunpack.c.l.b16 %v1868
        %v1937 = vunpack.c.l.b16 %v1869
        %v1938 = vunpack.c.l.b16 %v1870
        %v1939 = vunpack.c.l.b16 %v1871
        %v1940 = vunpack.c.l.b16 %v1872
        %v1941 = vunpack.c.l.b16 %v1873
        %v1942 = vunpack.c.l.b16 %v1874
        %v1943 = vunpack.c.l.b16 %v1875
        %v1944 = vunpack.c.l.b16 %v1876
        %v1945 = vunpack.c.l.b16 %v1877
        %v1946 = vunpack.c.l.b16 %v1878
        %v1947 = vunpack.c.l.b16 %v1879
        %v1948 = vunpack.c.l.b16 %v1880
        %v1949 = vunpack.c.l.b16 %v1881
        %v1950 = vunpack.c.l.b16 %v1882
        %v1951 = vunpack.c.l.b16 %v1883
        %v1952 = vunpack.c.l.b16 %v1884
        %v1953 = vpack.c.b16 %v1922, %v1921
        %v1954 = vpack.c.b16 %v1924, %v1923
        %v1955 = vpack.c.b16 %v1926, %v1925
        %v1956 = vpack.c.b16 %v1928, %v1927
        %v1957 = vpack.c.b16 %v1930, %v1929
        %v1958 = vpack.c.b16 %v1932, %v1931
        %v1959 = vpack.c.b16 %v1934, %v1933
        %v1960 = vpack.c.b16 %v1936, %v1935
        %v1961 = vpack.c.b16 %v1938, %v1937
        %v1962 = vpack.c.b16 %v1940, %v1939
        %v1963 = vpack.c.b16 %v1942, %v1941
        %v1964 = vpack.c.b16 %v1944, %v1943
        %v1965 = vpack.c.b16 %v1946, %v1945
        %v1966 = vpack.c.b16 %v1948, %v1947
        %v1967 = vpack.c.b16 %v1950, %v1949
        %v1968 = vpack.c.b16 %v1952, %v1951
        %1985 = vmatpush.bf16.msra.mxu0 %v1960
        %1986 = vmatpush.bf16.msra.mxu0 %v1959
        %1987 = vmatpush.bf16.msra.mxu0 %v1958
        %1988 = vmatpush.bf16.msra.mxu0 %v1957
        %1989 = vmatpush.bf16.msra.mxu0 %v1956
        %1990 = vmatpush.bf16.msra.mxu0 %v1955
        %1991 = vmatpush.bf16.msra.mxu0 %v1954
        %1992 = vmatpush.bf16.msra.mxu0 %v1953
        %1993 = vmatmul.bf16.gmra.mxu0 %v1851
        %v1994 = vpop.f32.mrf.mxu0
        %v1995 = vadd.f32 %v1887, %v1994
        %v1996 = vpop.f32.mrf.mxu0
        %1997 = vdwg.mxu0
        %1998 = vmatpush.bf16.msra.mxu0 %v1968
        %1999 = vmatpush.bf16.msra.mxu0 %v1967
        %2000 = vmatpush.bf16.msra.mxu0 %v1966
        %2001 = vmatpush.bf16.msra.mxu0 %v1965
        %2002 = vmatpush.bf16.msra.mxu0 %v1964
        %2003 = vmatpush.bf16.msra.mxu0 %v1963
        %2004 = vmatpush.bf16.msra.mxu0 %v1962
        %2005 = vmatpush.bf16.msra.mxu0 %v1961
        %2006 = vmatmul.bf16.gmra.mxu0 %v1852
        %v2007 = vpop.f32.mrf.mxu0
        %v2008 = vadd.f32 %v1995, %v2007
        %v2009 = vpop.f32.mrf.mxu0
        %2010 = vdwg.mxu0
        %v2011 = vadd.f32 %v2008, %v1689
        %2012 = vst [vmem:[%s660] sm:$0xff] %v2011
        %s2013 = sand.u32 %s387, 1
        %s2014 = scalar_lea.sflag [#allocation7], %s2013
        %s2015 = sand.u32 %s387, 1
        %s2016 = smul.addr %s2015, 8
        %s2017 = scalar_lea.vmem [#allocation20], %s2016
        // Predicated region
        $region121: #{tpu_custom_call.1} parent=79 // pred_check
          %p2018 = pneg %p397
        $region122: #{tpu_custom_call.1} parent=79 // pred_check_branch
          %2020 = sbr.rel (%p2018) target = $region124
        $region123: #{tpu_custom_call.1} parent=79 // pred_region
          %2022 = vsyncadd %s2014, 0
          %s2023 = sadd.s32 %s50, %s49
          %s2024 = smul.addr %s2023, 8
          %s2025 = scalar_lea.hbm %s16, %s2024
          %s2027 = sshll.u32 %s2017, 4
          %s2028 = int_to_ptr.vmem [resolvable:$true] %s2027
          %s2029 = sshll.u32 %s2025, 4
          %s2030 = int_to_ptr.hbm [resolvable:$true] %s2029
          %2032 = dma.vmem_to_hbm [thread:$0]  %s2028, 128, %s2030, %s2014
        $region124: #{tpu_custom_call.1} parent=79 // pred_fallthru
          _
      $region80: #{tpu_custom_call.1} parent=5 // pred_fallthru
        _
      %p2033 = scmp.le.s32.totalorder 2, %s40
      // Predicated region
      $region125: #{tpu_custom_call.1} parent=5 // pred_check
        %p2034 = pneg %p2033
      $region126: #{tpu_custom_call.1} parent=5 // pred_check_branch
        %2036 = sbr.rel (%p2034) target = $region128
      $region127: #{tpu_custom_call.1} parent=5 // pred_region
        %s2037 = ssub.s32 %s40, 2
        // Predicated region
        $region129: #{tpu_custom_call.1} parent=127 // pred_check
          %p2038 = pneg %p403
        $region130: #{tpu_custom_call.1} parent=127 // pred_check_branch
          %2040 = sbr.rel (%p2038) target = $region132
        $region131: #{tpu_custom_call.1} parent=127 // pred_region
          %s2041 = sand.u32 %s388, 1
          %s2042 = scalar_lea.sflag [#allocation7], %s2041
          %s2043 = sand.u32 %s388, 1
          %s2044 = smul.addr %s2043, 8
          %s2045 = scalar_lea.vmem [#allocation20], %s2044
          %2047 = dma.done %s2042, 128
        $region132: #{tpu_custom_call.1} parent=127 // pred_fallthru
          _
      $region128: #{tpu_custom_call.1} parent=5 // pred_fallthru
        _
    $region6: #{tpu_custom_call.1} parent=1 // loop_footer
      %s44 = sadd.s32 1, %s40
    $region7: #{tpu_custom_call.1} parent=1 // loop_footer_branch
      %39 = sbr.rel target = $region3
    $region8: #{tpu_custom_call.1} parent=1 // loop_exit
      _
    %2048 = vsyncpa [#allocation6], 1
    %s2049 = scalar_lea.sflag [#allocation6], 1
    %2050 = vsyncpa %s2049, 1
    %2051 = vsyncpa [#allocation9], 1
    %2052 = vsyncpa [#allocation12], 1
    %2053 = vsyncpa [#allocation15], 1
    %2054 = vsyncpa [#allocation18], 1
    %2055 = vsyncpa [#allocation7], 1
    %s2056 = scalar_lea.sflag [#allocation7], 1
    %2057 = vsyncpa %s2056, 1

</llo_original>
